<compile_context>
chip_gen: v6e
topology: v6e:2x2x1
jax: 0.10.0
libtpu: 0.0.40
codegen_flags: <defaults>
</compile_context>

<pallas_src>
import jax
import jax.numpy as jnp
from jax.experimental import pallas as pl
from jax.experimental.pallas import tpu as pltpu

CHUNK_R = 8           # sublane rows per inner chunk -> one (8,128) vreg / value
MAX_BLOCK_ROWS = 256  # rows per grid step (256*128 = 32768 boxes per step)
# quad ∩ quad has at most 8 vertices; matches the 8-iteration torch _calc_area.
MAXPTS = 8


def _det2(ax, ay, bx, by):
    # det of the 2x2 matrix with rows (ax,ay), (bx,by)
    return ax * by - ay * bx


def _scatter(ox, oy, pos, vx, vy, mask, nslots):
    """Write (vx,vy) at per-lane slot `pos` of polygon (ox,oy) where mask.

    The write mask is folded into the position once (MAXPTS is an unreachable
    sentinel slot), so each slot costs cmp + 2 vsel.  Only slots [0, nslots)
    are reachable at the call site, so the select chain is bounded by nslots."""
    nslots = min(nslots, MAXPTS)
    pos_eff = jnp.where(mask, pos, MAXPTS)      # MAXPTS == unreachable sentinel
    nx, ny = list(ox), list(oy)
    for k in range(nslots):
        sel = pos_eff == k
        nx[k] = jnp.where(sel, vx, ox[k])
        ny[k] = jnp.where(sel, vy, oy[k])
    return nx, ny


def _gather(sx, sy, idx, nslots):
    """Per-lane read of polygon vertex at slot `idx` (select-chain gather)."""
    nslots = min(nslots, MAXPTS)
    gx = jnp.zeros_like(sx[0])
    gy = jnp.zeros_like(sy[0])
    for k in range(nslots):
        sel = idx == k
        gx = jnp.where(sel, sx[k], gx)
        gy = jnp.where(sel, sy[k], gy)
    return gx, gy


def _iou_chunk(px, py, gx, gy):
    """IoU of one chunk. px/py/gx/gy: lists of 4 (CHUNK_R,128) f32 arrays."""
    zeros = jnp.zeros_like(px[0])

    # ---- _if_concave_quadrangle -> replace with bounding box --------------
    res = jnp.ones_like(px[0])
    for i in range(4):
        a, b = (i - 1) % 4, (i + 1) % 4
        res = res * _det2(px[a] - px[i], py[a] - py[i],
                          px[b] - px[i], py[b] - py[i])
    concave = res < 0.0
    box_l = jnp.minimum(jnp.minimum(px[0], px[1]), jnp.minimum(px[2], px[3]))
    box_r = jnp.maximum(jnp.maximum(px[0], px[1]), jnp.maximum(px[2], px[3]))
    box_t = jnp.minimum(jnp.minimum(py[0], py[1]), jnp.minimum(py[2], py[3]))
    box_b = jnp.maximum(jnp.maximum(py[0], py[1]), jnp.maximum(py[2], py[3]))
    bbx = [box_l, box_l, box_r, box_r]
    bby = [box_t, box_b, box_b, box_t]
    px = [jnp.where(concave, bbx[i], px[i]) for i in range(4)]
    py = [jnp.where(concave, bby[i], py[i]) for i in range(4)]

    # ---- _if_points_right_order + two conditional reorders ----------------
    def right_order(xs, ys):
        v1 = _det2(xs[0] - xs[1], ys[0] - ys[1], xs[3] - xs[1], ys[3] - ys[1])
        v2 = _det2(xs[3] - xs[1], ys[3] - ys[1], xs[2] - xs[1], ys[2] - ys[1])
        v3 = _det2(xs[1] - xs[2], ys[1] - ys[2], xs[0] - xs[2], ys[0] - ys[2])
        v4 = _det2(xs[0] - xs[2], ys[0] - ys[2], xs[3] - xs[2], ys[3] - ys[2])
        return (v1 * v2 > 0.0) & (v3 * v4 > 0.0)

    for perm in ([0, 1, 3, 2], [0, 2, 1, 3]):
        ok = right_order(px, py)
        px = [jnp.where(ok, px[i], px[perm[i]]) for i in range(4)]
        py = [jnp.where(ok, py[i], py[perm[i]]) for i in range(4)]

    # ---- _calc_area_fixnum on pboxes / gboxes; fold into one live vreg ----
    def fixnum_area(xs, ys):
        a = zeros
        for i in range(4):
            a = a + _det2(xs[i], ys[i], xs[i - 1], ys[i - 1])  # xs[-1]==xs[3]
        return a * 0.5

    # torch does NOT abs() the gt area here (faithful to the reference).
    denom_base = jnp.abs(fixnum_area(px, py)) + fixnum_area(gx, gy)

    # ---- _clip(gboxes, pboxes): Sutherland-Hodgman, vectorized over boxes --
    sx = gx + [zeros] * (MAXPTS - 4)
    sy = gy + [zeros] * (MAXPTS - 4)
    num = jnp.full_like(px[0], 4, dtype=jnp.int32)

    for ci in range(4):
        # clip-edge-invariant quantities (hoisted out of the j loop)
        cx1, cy1 = px[(ci - 1) % 4], py[(ci - 1) % 4]   # c_edge_start
        cx2, cy2 = px[ci], py[ci]                        # c_edge_end
        dcx = cx2 - cx1
        dcy = cy2 - cy1
        ex34 = -dcx                                      # x3 - x4
        ey34 = -dcy                                      # y3 - y4
        d34 = cx1 * cy2 - cy1 * cx2                      # x3*y4 - y3*x4

        ox = [zeros] * MAXPTS
        oy = [zeros] * MAXPTS
        onum = jnp.zeros_like(num)

        # subject polygon has at most 4+ci vertices at this stage (convex gt;
        # same assumption as the previous revision / torch fast path)
        nsub = 4 + ci
        c_prev = None
        for j in range(nsub):
            sex, sey = sx[j], sy[j]                      # s_edge_end
            if j == 0:
                if ci == 0:
                    ssx, ssy = sx[3], sy[3]              # num == 4 everywhere
                else:
                    ssx, ssy = _gather(sx, sy, num - 1, nsub)  # wrap-around
                c2 = dcx * (ssy - cy1) - dcy * (ssx - cx1) <= 0.0
            else:
                ssx, ssy = sx[j - 1], sy[j - 1]
                c2 = c_prev                              # carried from j-1

            # half-plane inside test (r <= 0, matching the torch reference)
            c1 = dcx * (sey - cy1) - dcy * (sex - cx1) <= 0.0
            c_prev = c1

            # single-reciprocal cross-product line intersection (ss->se, cs->ce)
            dsx12 = ssx - sex
            dsy12 = ssy - sey
            d12 = ssx * sey - ssy * sex
            den = dsx12 * ey34 - dsy12 * ex34
            rden = pl.reciprocal(den, approx=True)
            rden = rden * (2.0 - den * rden)             # one Newton refinement
            ix = (d12 * ex34 - dsx12 * d34) * rden
            iy = (d12 * ey34 - dsy12 * d34) * rden

            c_diff = c1 != c2                            # edge crosses clip line
            if ci == 0:
                w2 = c1                                  # num==4 > j always
                w_int = c_diff
            else:
                valid = num > j
                w2 = valid & c1                          # endpoint inside: add it
                w_int = valid & c_diff                   # intersection write
            w1 = w_int & c1                              # entering edge

            # invariant: onum <= 2*j before this iteration, so only slots
            # < 2*j+1 (resp. 2*j+2) are reachable by these two scatters.
            ox, oy = _scatter(ox, oy, onum, ix, iy, w_int, 2 * j + 1)
            pos2 = onum + w1.astype(jnp.int32)
            ox, oy = _scatter(ox, oy, pos2, sex, sey, w2, 2 * j + 2)
            onum = onum + w_int.astype(jnp.int32) + w2.astype(jnp.int32)

        sx, sy, num = ox, oy, onum

    # ---- _calc_area on clipped polygon (variable vertex count) ------------
    area_i = zeros
    for i in range(MAXPTS):
        m = num > i
        if i == 0:
            pxv, pyv = _gather(sx, sy, num - 1, MAXPTS)
        else:
            pxv, pyv = sx[i - 1], sy[i - 1]
        area_i = area_i + jnp.where(m, _det2(sx[i], sy[i], pxv, pyv), 0.0)
    area_i = jnp.abs(area_i * 0.5)

    return area_i / (denom_base - area_i + 1e-16)


def iou_kernel(pred_ref, gt_ref, out_ref):
    # pred_ref/gt_ref: (8, block_rows, 128); out_ref: (block_rows, 128).
    n_chunks = pred_ref.shape[1] // CHUNK_R

    @pl.loop(0, n_chunks)
    def _(c):
        r0 = pl.multiple_of(c * CHUNK_R, CHUNK_R)
        px = [pred_ref[2 * i, pl.ds(r0, CHUNK_R), :] for i in range(4)]
        py = [pred_ref[2 * i + 1, pl.ds(r0, CHUNK_R), :] for i in range(4)]
        gx = [gt_ref[2 * i, pl.ds(r0, CHUNK_R), :] for i in range(4)]
        gy = [gt_ref[2 * i + 1, pl.ds(r0, CHUNK_R), :] for i in range(4)]
        out_ref[pl.ds(r0, CHUNK_R), :] = _iou_chunk(px, py, gx, gy)


def _round_up(x, m):
    return -(-x // m) * m


def polygon_iou(pred_box, gt_box, reduction="none"):
    """Pallas implementation of IOULoss.get_IOU(pred, gt, train_mode=True).

    pred_box, gt_box: (N, 8) float arrays of quadrilateral corners
    (x1,y1,...,x4,y4). Returns (N,) IoU ('none'), or its sum/mean.
    """
    assert pred_box.shape == gt_box.shape and pred_box.shape[-1] == 8
    n = pred_box.shape[0]
    if n == 0:
        return jnp.zeros((0,), jnp.float32)

    rows = max(CHUNK_R, _round_up(pl.cdiv(n, 128), CHUNK_R))
    # Grid steps: enough to respect MAX_BLOCK_ROWS, and at least 2 whenever the
    # row count allows it so both v7x TensorCores get work on this
    # compute-bound kernel ("parallel" axis is megacore-sharded).
    n_steps = pl.cdiv(rows, MAX_BLOCK_ROWS)
    if rows >= 2 * CHUNK_R:
        n_steps = max(n_steps, 2)
    block_rows = _round_up(pl.cdiv(rows, n_steps), CHUNK_R)
    rows_pad = block_rows * pl.cdiv(rows, block_rows)
    n_pad = rows_pad * 128

    # (N,8) -> one (rows,128) plane per coordinate; allow_input_fusion lets
    # XLA fuse this pad+transpose into the pallas_call instead of an extra
    # materialized HBM pass.
    def to_planes(x):
        xp = jnp.zeros((n_pad, 8), jnp.float32).at[:n, :].set(
            x.astype(jnp.float32))
        return xp.T.reshape(8, rows_pad, 128)

    pred_t = to_planes(pred_box)
    gt_t = to_planes(gt_box)

    out = pl.pallas_call(
        iou_kernel,
        out_shape=jax.ShapeDtypeStruct((rows_pad, 128), jnp.float32),
        grid=(rows_pad // block_rows,),
        in_specs=[pl.BlockSpec((8, block_rows, 128), lambda i: (0, i, 0)),
                  pl.BlockSpec((8, block_rows, 128), lambda i: (0, i, 0))],
        out_specs=pl.BlockSpec((block_rows, 128), lambda i: (i, 0)),
        compiler_params=pltpu.CompilerParams(
            dimension_semantics=("parallel",),
            allow_input_fusion=[True, True]),
    )(pred_t, gt_t)

    iou = out.reshape(-1)[:n]
    if reduction == "mean":
        return iou.mean()
    if reduction == "sum":
        return iou.sum()
    return iou


class IOULoss:
    """Mirror of the torch module: forward() raises; get_IOU runs the kernel."""

    def __init__(self, reduction="none"):
        self.reduction = reduction

    def __call__(self, pred, target):
        # Faithful to the torch module's forward().
        raise Exception("IOU Loss can not be used!")

    @staticmethod
    def get_IOU(pred_box, gt_box, train_mode=True):
        # TODO(synk): eval-mode branch (train_mode=False zeroing) not ported;
        # only the train_mode=True path is implemented in the kernel.
        assert train_mode
        return polygon_iou(pred_box, gt_box, reduction="none")


if __name__ == "__main__":
    key = jax.random.PRNGKey(0)
    k1, k2, k3, k4 = jax.random.split(key, 4)
    N = 8
    # Ground-truth axis-aligned rectangles in the module's corner order
    # (l,t),(l,b),(r,b),(r,t); predictions are small perturbations of them.
    cx = jax.random.uniform(k1, (N,), minval=2.0, maxval=10.0)
    cy = jax.random.uniform(k2, (N,), minval=2.0, maxval=10.0)
    wh = jax.random.uniform(k3, (N, 2), minval=1.0, maxval=4.0)
    l, r = cx - wh[:, 0], cx + wh[:, 0]
    t, b = cy - wh[:, 1], cy + wh[:, 1]
    gt_box = jnp.stack([l, t, l, b, r, b, r, t], axis=-1)          # (N, 8)
    pred_box = gt_box + 0.1 * jax.random.normal(k4, (N, 8))        # (N, 8)

    iou = IOULoss.get_IOU(pred_box, gt_box, train_mode=True)
    iou = jax.block_until_ready(iou)

    assert iou.shape == (N,)
    assert bool(jnp.all(jnp.isfinite(iou)))
    assert bool(jnp.all(iou >= 0.0))
    print("KERNEL_OK")
</pallas_src>

<mosaic_0001>
module attributes {stable_mosaic.version = 11 : i64} {
  func.func @iou_kernel(%arg0: i32, %arg1: memref<8x8x128xf32, #tpu.memory_space<vmem>>, %arg2: memref<8x8x128xf32, #tpu.memory_space<vmem>>, %arg3: memref<8x128xf32, #tpu.memory_space<vmem>>) attributes {dimension_semantics = [#tpu.dimension_semantics<parallel>], iteration_bounds = array<i64: 1>, scalar_prefetch = 0 : i64, scratch_operands = 0 : i64, tpu.core_type = #tpu.core_type<tc>, window_params = [{transform_indices = @transform_0, window_bounds = array<i64: 8, 8, 128>}, {transform_indices = @transform_1, window_bounds = array<i64: 8, 8, 128>}, {transform_indices = @transform_2, window_bounds = array<i64: 8, 128>}]} {
    %c0_i32 = arith.constant 0 : i32
    %c1_i32 = arith.constant 1 : i32
    %0 = arith.muli %c0_i32, %c1_i32 : i32
    %c0_i32_0 = arith.constant 0 : i32
    %1 = arith.addi %c0_i32_0, %0 : i32
    %c8_i32 = arith.constant 8 : i32
    %2 = arith.muli %1, %c8_i32 : i32
    %3 = tpu.assume_multiple %2, 8 : i32
    %c0 = arith.constant 0 : index
    %4 = arith.index_cast %3 : i32 to index
    %c0_1 = arith.constant 0 : index
    %5 = vector.load %arg1[%c0, %4, %c0_1] : memref<8x8x128xf32, #tpu.memory_space<vmem>>, vector<1x8x128xf32>
    %6 = vector.shape_cast %5 : vector<1x8x128xf32> to vector<8x128xf32>
    %c2 = arith.constant 2 : index
    %7 = arith.index_cast %3 : i32 to index
    %c0_2 = arith.constant 0 : index
    %8 = vector.load %arg1[%c2, %7, %c0_2] : memref<8x8x128xf32, #tpu.memory_space<vmem>>, vector<1x8x128xf32>
    %9 = vector.shape_cast %8 : vector<1x8x128xf32> to vector<8x128xf32>
    %c4 = arith.constant 4 : index
    %10 = arith.index_cast %3 : i32 to index
    %c0_3 = arith.constant 0 : index
    %11 = vector.load %arg1[%c4, %10, %c0_3] : memref<8x8x128xf32, #tpu.memory_space<vmem>>, vector<1x8x128xf32>
    %12 = vector.shape_cast %11 : vector<1x8x128xf32> to vector<8x128xf32>
    %c6 = arith.constant 6 : index
    %13 = arith.index_cast %3 : i32 to index
    %c0_4 = arith.constant 0 : index
    %14 = vector.load %arg1[%c6, %13, %c0_4] : memref<8x8x128xf32, #tpu.memory_space<vmem>>, vector<1x8x128xf32>
    %15 = vector.shape_cast %14 : vector<1x8x128xf32> to vector<8x128xf32>
    %c1 = arith.constant 1 : index
    %16 = arith.index_cast %3 : i32 to index
    %c0_5 = arith.constant 0 : index
    %17 = vector.load %arg1[%c1, %16, %c0_5] : memref<8x8x128xf32, #tpu.memory_space<vmem>>, vector<1x8x128xf32>
    %18 = vector.shape_cast %17 : vector<1x8x128xf32> to vector<8x128xf32>
    %c3 = arith.constant 3 : index
    %19 = arith.index_cast %3 : i32 to index
    %c0_6 = arith.constant 0 : index
    %20 = vector.load %arg1[%c3, %19, %c0_6] : memref<8x8x128xf32, #tpu.memory_space<vmem>>, vector<1x8x128xf32>
    %21 = vector.shape_cast %20 : vector<1x8x128xf32> to vector<8x128xf32>
    %c5 = arith.constant 5 : index
    %22 = arith.index_cast %3 : i32 to index
    %c0_7 = arith.constant 0 : index
    %23 = vector.load %arg1[%c5, %22, %c0_7] : memref<8x8x128xf32, #tpu.memory_space<vmem>>, vector<1x8x128xf32>
    %24 = vector.shape_cast %23 : vector<1x8x128xf32> to vector<8x128xf32>
    %c7 = arith.constant 7 : index
    %25 = arith.index_cast %3 : i32 to index
    %c0_8 = arith.constant 0 : index
    %26 = vector.load %arg1[%c7, %25, %c0_8] : memref<8x8x128xf32, #tpu.memory_space<vmem>>, vector<1x8x128xf32>
    %27 = vector.shape_cast %26 : vector<1x8x128xf32> to vector<8x128xf32>
    %c0_9 = arith.constant 0 : index
    %28 = arith.index_cast %3 : i32 to index
    %c0_10 = arith.constant 0 : index
    %29 = vector.load %arg2[%c0_9, %28, %c0_10] : memref<8x8x128xf32, #tpu.memory_space<vmem>>, vector<1x8x128xf32>
    %30 = vector.shape_cast %29 : vector<1x8x128xf32> to vector<8x128xf32>
    %c2_11 = arith.constant 2 : index
    %31 = arith.index_cast %3 : i32 to index
    %c0_12 = arith.constant 0 : index
    %32 = vector.load %arg2[%c2_11, %31, %c0_12] : memref<8x8x128xf32, #tpu.memory_space<vmem>>, vector<1x8x128xf32>
    %33 = vector.shape_cast %32 : vector<1x8x128xf32> to vector<8x128xf32>
    %c4_13 = arith.constant 4 : index
    %34 = arith.index_cast %3 : i32 to index
    %c0_14 = arith.constant 0 : index
    %35 = vector.load %arg2[%c4_13, %34, %c0_14] : memref<8x8x128xf32, #tpu.memory_space<vmem>>, vector<1x8x128xf32>
    %36 = vector.shape_cast %35 : vector<1x8x128xf32> to vector<8x128xf32>
    %c6_15 = arith.constant 6 : index
    %37 = arith.index_cast %3 : i32 to index
    %c0_16 = arith.constant 0 : index
    %38 = vector.load %arg2[%c6_15, %37, %c0_16] : memref<8x8x128xf32, #tpu.memory_space<vmem>>, vector<1x8x128xf32>
    %39 = vector.shape_cast %38 : vector<1x8x128xf32> to vector<8x128xf32>
    %c1_17 = arith.constant 1 : index
    %40 = arith.index_cast %3 : i32 to index
    %c0_18 = arith.constant 0 : index
    %41 = vector.load %arg2[%c1_17, %40, %c0_18] : memref<8x8x128xf32, #tpu.memory_space<vmem>>, vector<1x8x128xf32>
    %42 = vector.shape_cast %41 : vector<1x8x128xf32> to vector<8x128xf32>
    %c3_19 = arith.constant 3 : index
    %43 = arith.index_cast %3 : i32 to index
    %c0_20 = arith.constant 0 : index
    %44 = vector.load %arg2[%c3_19, %43, %c0_20] : memref<8x8x128xf32, #tpu.memory_space<vmem>>, vector<1x8x128xf32>
    %45 = vector.shape_cast %44 : vector<1x8x128xf32> to vector<8x128xf32>
    %c5_21 = arith.constant 5 : index
    %46 = arith.index_cast %3 : i32 to index
    %c0_22 = arith.constant 0 : index
    %47 = vector.load %arg2[%c5_21, %46, %c0_22] : memref<8x8x128xf32, #tpu.memory_space<vmem>>, vector<1x8x128xf32>
    %48 = vector.shape_cast %47 : vector<1x8x128xf32> to vector<8x128xf32>
    %c7_23 = arith.constant 7 : index
    %49 = arith.index_cast %3 : i32 to index
    %c0_24 = arith.constant 0 : index
    %50 = vector.load %arg2[%c7_23, %49, %c0_24] : memref<8x8x128xf32, #tpu.memory_space<vmem>>, vector<1x8x128xf32>
    %51 = vector.shape_cast %50 : vector<1x8x128xf32> to vector<8x128xf32>
    %cst = arith.constant 0.000000e+00 : f32
    %52 = vector.broadcast %cst : f32 to vector<8x128xf32>
    %cst_25 = arith.constant 1.000000e+00 : f32
    %53 = vector.broadcast %cst_25 : f32 to vector<8x128xf32>
    %54 = arith.subf %15, %6 : vector<8x128xf32>
    %55 = arith.subf %27, %18 : vector<8x128xf32>
    %56 = arith.subf %9, %6 : vector<8x128xf32>
    %57 = arith.subf %21, %18 : vector<8x128xf32>
    %58 = arith.mulf %54, %57 : vector<8x128xf32>
    %59 = arith.mulf %55, %56 : vector<8x128xf32>
    %60 = arith.subf %58, %59 : vector<8x128xf32>
    %61 = arith.mulf %53, %60 : vector<8x128xf32>
    %62 = arith.subf %6, %9 : vector<8x128xf32>
    %63 = arith.subf %18, %21 : vector<8x128xf32>
    %64 = arith.subf %12, %9 : vector<8x128xf32>
    %65 = arith.subf %24, %21 : vector<8x128xf32>
    %66 = arith.mulf %62, %65 : vector<8x128xf32>
    %67 = arith.mulf %63, %64 : vector<8x128xf32>
    %68 = arith.subf %66, %67 : vector<8x128xf32>
    %69 = arith.mulf %61, %68 : vector<8x128xf32>
    %70 = arith.subf %9, %12 : vector<8x128xf32>
    %71 = arith.subf %21, %24 : vector<8x128xf32>
    %72 = arith.subf %15, %12 : vector<8x128xf32>
    %73 = arith.subf %27, %24 : vector<8x128xf32>
    %74 = arith.mulf %70, %73 : vector<8x128xf32>
    %75 = arith.mulf %71, %72 : vector<8x128xf32>
    %76 = arith.subf %74, %75 : vector<8x128xf32>
    %77 = arith.mulf %69, %76 : vector<8x128xf32>
    %78 = arith.subf %12, %15 : vector<8x128xf32>
    %79 = arith.subf %24, %27 : vector<8x128xf32>
    %80 = arith.subf %6, %15 : vector<8x128xf32>
    %81 = arith.subf %18, %27 : vector<8x128xf32>
    %82 = arith.mulf %78, %81 : vector<8x128xf32>
    %83 = arith.mulf %79, %80 : vector<8x128xf32>
    %84 = arith.subf %82, %83 : vector<8x128xf32>
    %85 = arith.mulf %77, %84 : vector<8x128xf32>
    %cst_26 = arith.constant 0.000000e+00 : f32
    %86 = vector.broadcast %cst_26 : f32 to vector<8x128xf32>
    %87 = arith.cmpf olt, %85, %86 : vector<8x128xf32>
    %88 = arith.minimumf %6, %9 : vector<8x128xf32>
    %89 = arith.minimumf %12, %15 : vector<8x128xf32>
    %90 = arith.minimumf %88, %89 : vector<8x128xf32>
    %91 = arith.maximumf %6, %9 : vector<8x128xf32>
    %92 = arith.maximumf %12, %15 : vector<8x128xf32>
    %93 = arith.maximumf %91, %92 : vector<8x128xf32>
    %94 = arith.minimumf %18, %21 : vector<8x128xf32>
    %95 = arith.minimumf %24, %27 : vector<8x128xf32>
    %96 = arith.minimumf %94, %95 : vector<8x128xf32>
    %97 = arith.maximumf %18, %21 : vector<8x128xf32>
    %98 = arith.maximumf %24, %27 : vector<8x128xf32>
    %99 = arith.maximumf %97, %98 : vector<8x128xf32>
    %100 = arith.select %87, %90, %6 : vector<8x128xi1>, vector<8x128xf32>
    %101 = arith.select %87, %90, %9 : vector<8x128xi1>, vector<8x128xf32>
    %102 = arith.select %87, %93, %12 : vector<8x128xi1>, vector<8x128xf32>
    %103 = arith.select %87, %93, %15 : vector<8x128xi1>, vector<8x128xf32>
    %104 = arith.select %87, %96, %18 : vector<8x128xi1>, vector<8x128xf32>
    %105 = arith.select %87, %99, %21 : vector<8x128xi1>, vector<8x128xf32>
    %106 = arith.select %87, %99, %24 : vector<8x128xi1>, vector<8x128xf32>
    %107 = arith.select %87, %96, %27 : vector<8x128xi1>, vector<8x128xf32>
    %108 = arith.subf %100, %101 : vector<8x128xf32>
    %109 = arith.subf %104, %105 : vector<8x128xf32>
    %110 = arith.subf %103, %101 : vector<8x128xf32>
    %111 = arith.subf %107, %105 : vector<8x128xf32>
    %112 = arith.mulf %108, %111 : vector<8x128xf32>
    %113 = arith.mulf %109, %110 : vector<8x128xf32>
    %114 = arith.subf %112, %113 : vector<8x128xf32>
    %115 = arith.subf %103, %101 : vector<8x128xf32>
    %116 = arith.subf %107, %105 : vector<8x128xf32>
    %117 = arith.subf %102, %101 : vector<8x128xf32>
    %118 = arith.subf %106, %105 : vector<8x128xf32>
    %119 = arith.mulf %115, %118 : vector<8x128xf32>
    %120 = arith.mulf %116, %117 : vector<8x128xf32>
    %121 = arith.subf %119, %120 : vector<8x128xf32>
    %122 = arith.subf %101, %102 : vector<8x128xf32>
    %123 = arith.subf %105, %106 : vector<8x128xf32>
    %124 = arith.subf %100, %102 : vector<8x128xf32>
    %125 = arith.subf %104, %106 : vector<8x128xf32>
    %126 = arith.mulf %122, %125 : vector<8x128xf32>
    %127 = arith.mulf %123, %124 : vector<8x128xf32>
    %128 = arith.subf %126, %127 : vector<8x128xf32>
    %129 = arith.subf %100, %102 : vector<8x128xf32>
    %130 = arith.subf %104, %106 : vector<8x128xf32>
    %131 = arith.subf %103, %102 : vector<8x128xf32>
    %132 = arith.subf %107, %106 : vector<8x128xf32>
    %133 = arith.mulf %129, %132 : vector<8x128xf32>
    %134 = arith.mulf %130, %131 : vector<8x128xf32>
    %135 = arith.subf %133, %134 : vector<8x128xf32>
    %136 = arith.mulf %114, %121 : vector<8x128xf32>
    %cst_27 = arith.constant 0.000000e+00 : f32
    %137 = vector.broadcast %cst_27 : f32 to vector<8x128xf32>
    %138 = arith.cmpf ogt, %136, %137 : vector<8x128xf32>
    %139 = arith.mulf %128, %135 : vector<8x128xf32>
    %cst_28 = arith.constant 0.000000e+00 : f32
    %140 = vector.broadcast %cst_28 : f32 to vector<8x128xf32>
    %141 = arith.cmpf ogt, %139, %140 : vector<8x128xf32>
    %142 = arith.andi %138, %141 : vector<8x128xi1>
    %143 = arith.select %142, %100, %100 : vector<8x128xi1>, vector<8x128xf32>
    %144 = arith.select %142, %101, %101 : vector<8x128xi1>, vector<8x128xf32>
    %145 = arith.select %142, %102, %103 : vector<8x128xi1>, vector<8x128xf32>
    %146 = arith.select %142, %103, %102 : vector<8x128xi1>, vector<8x128xf32>
    %147 = arith.select %142, %104, %104 : vector<8x128xi1>, vector<8x128xf32>
    %148 = arith.select %142, %105, %105 : vector<8x128xi1>, vector<8x128xf32>
    %149 = arith.select %142, %106, %107 : vector<8x128xi1>, vector<8x128xf32>
    %150 = arith.select %142, %107, %106 : vector<8x128xi1>, vector<8x128xf32>
    %151 = arith.subf %143, %144 : vector<8x128xf32>
    %152 = arith.subf %147, %148 : vector<8x128xf32>
    %153 = arith.subf %146, %144 : vector<8x128xf32>
    %154 = arith.subf %150, %148 : vector<8x128xf32>
    %155 = arith.mulf %151, %154 : vector<8x128xf32>
    %156 = arith.mulf %152, %153 : vector<8x128xf32>
    %157 = arith.subf %155, %156 : vector<8x128xf32>
    %158 = arith.subf %146, %144 : vector<8x128xf32>
    %159 = arith.subf %150, %148 : vector<8x128xf32>
    %160 = arith.subf %145, %144 : vector<8x128xf32>
    %161 = arith.subf %149, %148 : vector<8x128xf32>
    %162 = arith.mulf %158, %161 : vector<8x128xf32>
    %163 = arith.mulf %159, %160 : vector<8x128xf32>
    %164 = arith.subf %162, %163 : vector<8x128xf32>
    %165 = arith.subf %144, %145 : vector<8x128xf32>
    %166 = arith.subf %148, %149 : vector<8x128xf32>
    %167 = arith.subf %143, %145 : vector<8x128xf32>
    %168 = arith.subf %147, %149 : vector<8x128xf32>
    %169 = arith.mulf %165, %168 : vector<8x128xf32>
    %170 = arith.mulf %166, %167 : vector<8x128xf32>
    %171 = arith.subf %169, %170 : vector<8x128xf32>
    %172 = arith.subf %143, %145 : vector<8x128xf32>
    %173 = arith.subf %147, %149 : vector<8x128xf32>
    %174 = arith.subf %146, %145 : vector<8x128xf32>
    %175 = arith.subf %150, %149 : vector<8x128xf32>
    %176 = arith.mulf %172, %175 : vector<8x128xf32>
    %177 = arith.mulf %173, %174 : vector<8x128xf32>
    %178 = arith.subf %176, %177 : vector<8x128xf32>
    %179 = arith.mulf %157, %164 : vector<8x128xf32>
    %cst_29 = arith.constant 0.000000e+00 : f32
    %180 = vector.broadcast %cst_29 : f32 to vector<8x128xf32>
    %181 = arith.cmpf ogt, %179, %180 : vector<8x128xf32>
    %182 = arith.mulf %171, %178 : vector<8x128xf32>
    %cst_30 = arith.constant 0.000000e+00 : f32
    %183 = vector.broadcast %cst_30 : f32 to vector<8x128xf32>
    %184 = arith.cmpf ogt, %182, %183 : vector<8x128xf32>
    %185 = arith.andi %181, %184 : vector<8x128xi1>
    %186 = arith.select %185, %143, %143 : vector<8x128xi1>, vector<8x128xf32>
    %187 = arith.select %185, %144, %145 : vector<8x128xi1>, vector<8x128xf32>
    %188 = arith.select %185, %145, %144 : vector<8x128xi1>, vector<8x128xf32>
    %189 = arith.select %185, %146, %146 : vector<8x128xi1>, vector<8x128xf32>
    %190 = arith.select %185, %147, %147 : vector<8x128xi1>, vector<8x128xf32>
    %191 = arith.select %185, %148, %149 : vector<8x128xi1>, vector<8x128xf32>
    %192 = arith.select %185, %149, %148 : vector<8x128xi1>, vector<8x128xf32>
    %193 = arith.select %185, %150, %150 : vector<8x128xi1>, vector<8x128xf32>
    %194 = arith.mulf %186, %193 : vector<8x128xf32>
    %195 = arith.mulf %190, %189 : vector<8x128xf32>
    %196 = arith.subf %194, %195 : vector<8x128xf32>
    %197 = arith.addf %52, %196 : vector<8x128xf32>
    %198 = arith.mulf %187, %190 : vector<8x128xf32>
    %199 = arith.mulf %191, %186 : vector<8x128xf32>
    %200 = arith.subf %198, %199 : vector<8x128xf32>
    %201 = arith.addf %197, %200 : vector<8x128xf32>
    %202 = arith.mulf %188, %191 : vector<8x128xf32>
    %203 = arith.mulf %192, %187 : vector<8x128xf32>
    %204 = arith.subf %202, %203 : vector<8x128xf32>
    %205 = arith.addf %201, %204 : vector<8x128xf32>
    %206 = arith.mulf %189, %192 : vector<8x128xf32>
    %207 = arith.mulf %193, %188 : vector<8x128xf32>
    %208 = arith.subf %206, %207 : vector<8x128xf32>
    %209 = arith.addf %205, %208 : vector<8x128xf32>
    %cst_31 = arith.constant 5.000000e-01 : f32
    %210 = vector.broadcast %cst_31 : f32 to vector<8x128xf32>
    %211 = arith.mulf %209, %210 : vector<8x128xf32>
    %212 = math.absf %211 : vector<8x128xf32>
    %213 = arith.mulf %30, %51 : vector<8x128xf32>
    %214 = arith.mulf %42, %39 : vector<8x128xf32>
    %215 = arith.subf %213, %214 : vector<8x128xf32>
    %216 = arith.addf %52, %215 : vector<8x128xf32>
    %217 = arith.mulf %33, %42 : vector<8x128xf32>
    %218 = arith.mulf %45, %30 : vector<8x128xf32>
    %219 = arith.subf %217, %218 : vector<8x128xf32>
    %220 = arith.addf %216, %219 : vector<8x128xf32>
    %221 = arith.mulf %36, %45 : vector<8x128xf32>
    %222 = arith.mulf %48, %33 : vector<8x128xf32>
    %223 = arith.subf %221, %222 : vector<8x128xf32>
    %224 = arith.addf %220, %223 : vector<8x128xf32>
    %225 = arith.mulf %39, %48 : vector<8x128xf32>
    %226 = arith.mulf %51, %36 : vector<8x128xf32>
    %227 = arith.subf %225, %226 : vector<8x128xf32>
    %228 = arith.addf %224, %227 : vector<8x128xf32>
    %cst_32 = arith.constant 5.000000e-01 : f32
    %229 = vector.broadcast %cst_32 : f32 to vector<8x128xf32>
    %230 = arith.mulf %228, %229 : vector<8x128xf32>
    %231 = arith.addf %212, %230 : vector<8x128xf32>
    %232 = arith.subf %186, %189 : vector<8x128xf32>
    %233 = arith.subf %190, %193 : vector<8x128xf32>
    %cst_33 = arith.constant 0.000000e+00 : f32
    %234 = vector.broadcast %cst_33 : f32 to vector<8x128xf32>
    %235 = arith.subf %234, %232 : vector<8x128xf32>
    %cst_34 = arith.constant 0.000000e+00 : f32
    %236 = vector.broadcast %cst_34 : f32 to vector<8x128xf32>
    %237 = arith.subf %236, %233 : vector<8x128xf32>
    %238 = arith.mulf %189, %190 : vector<8x128xf32>
    %239 = arith.mulf %193, %186 : vector<8x128xf32>
    %240 = arith.subf %238, %239 : vector<8x128xf32>
    %c0_i32_35 = arith.constant 0 : i32
    %241 = vector.broadcast %c0_i32_35 : i32 to vector<8x128xi32>
    %242 = arith.subf %51, %193 : vector<8x128xf32>
    %243 = arith.mulf %232, %242 : vector<8x128xf32>
    %244 = arith.subf %39, %189 : vector<8x128xf32>
    %245 = arith.mulf %233, %244 : vector<8x128xf32>
    %246 = arith.subf %243, %245 : vector<8x128xf32>
    %cst_36 = arith.constant 0.000000e+00 : f32
    %247 = vector.broadcast %cst_36 : f32 to vector<8x128xf32>
    %248 = arith.cmpf ole, %246, %247 : vector<8x128xf32>
    %249 = arith.subf %42, %193 : vector<8x128xf32>
    %250 = arith.mulf %232, %249 : vector<8x128xf32>
    %251 = arith.subf %30, %189 : vector<8x128xf32>
    %252 = arith.mulf %233, %251 : vector<8x128xf32>
    %253 = arith.subf %250, %252 : vector<8x128xf32>
    %cst_37 = arith.constant 0.000000e+00 : f32
    %254 = vector.broadcast %cst_37 : f32 to vector<8x128xf32>
    %255 = arith.cmpf ole, %253, %254 : vector<8x128xf32>
    %256 = arith.subf %39, %30 : vector<8x128xf32>
    %257 = arith.subf %51, %42 : vector<8x128xf32>
    %258 = arith.mulf %39, %42 : vector<8x128xf32>
    %259 = arith.mulf %51, %30 : vector<8x128xf32>
    %260 = arith.subf %258, %259 : vector<8x128xf32>
    %261 = arith.mulf %256, %237 : vector<8x128xf32>
    %262 = arith.mulf %257, %235 : vector<8x128xf32>
    %263 = arith.subf %261, %262 : vector<8x128xf32>
    %264 = tpu.reciprocal %263 {approx = true} : vector<8x128xf32> -> vector<8x128xf32>
    %265 = arith.mulf %263, %264 : vector<8x128xf32>
    %cst_38 = arith.constant 2.000000e+00 : f32
    %266 = vector.broadcast %cst_38 : f32 to vector<8x128xf32>
    %267 = arith.subf %266, %265 : vector<8x128xf32>
    %268 = arith.mulf %264, %267 : vector<8x128xf32>
    %269 = arith.mulf %260, %235 : vector<8x128xf32>
    %270 = arith.mulf %256, %240 : vector<8x128xf32>
    %271 = arith.subf %269, %270 : vector<8x128xf32>
    %272 = arith.mulf %271, %268 : vector<8x128xf32>
    %273 = arith.mulf %260, %237 : vector<8x128xf32>
    %274 = arith.mulf %257, %240 : vector<8x128xf32>
    %275 = arith.subf %273, %274 : vector<8x128xf32>
    %276 = arith.mulf %275, %268 : vector<8x128xf32>
    %277 = arith.xori %255, %248 : vector<8x128xi1>
    %278 = arith.andi %277, %255 : vector<8x128xi1>
    %c8_i32_39 = arith.constant 8 : i32
    %279 = vector.broadcast %c8_i32_39 : i32 to vector<8x128xi32>
    %280 = arith.select %277, %241, %279 : vector<8x128xi1>, vector<8x128xi32>
    %c0_i32_40 = arith.constant 0 : i32
    %281 = vector.broadcast %c0_i32_40 : i32 to vector<8x128xi32>
    %282 = arith.cmpi eq, %280, %281 : vector<8x128xi32>
    %283 = arith.select %282, %272, %52 : vector<8x128xi1>, vector<8x128xf32>
    %284 = arith.select %282, %276, %52 : vector<8x128xi1>, vector<8x128xf32>
    %285 = arith.extui %278 : vector<8x128xi1> to vector<8x128xi32>
    %286 = arith.addi %241, %285 : vector<8x128xi32>
    %c8_i32_41 = arith.constant 8 : i32
    %287 = vector.broadcast %c8_i32_41 : i32 to vector<8x128xi32>
    %288 = arith.select %255, %286, %287 : vector<8x128xi1>, vector<8x128xi32>
    %c0_i32_42 = arith.constant 0 : i32
    %289 = vector.broadcast %c0_i32_42 : i32 to vector<8x128xi32>
    %290 = arith.cmpi eq, %288, %289 : vector<8x128xi32>
    %291 = arith.select %290, %30, %283 : vector<8x128xi1>, vector<8x128xf32>
    %292 = arith.select %290, %42, %284 : vector<8x128xi1>, vector<8x128xf32>
    %c1_i32_43 = arith.constant 1 : i32
    %293 = vector.broadcast %c1_i32_43 : i32 to vector<8x128xi32>
    %294 = arith.cmpi eq, %288, %293 : vector<8x128xi32>
    %295 = arith.select %294, %30, %52 : vector<8x128xi1>, vector<8x128xf32>
    %296 = arith.select %294, %42, %52 : vector<8x128xi1>, vector<8x128xf32>
    %297 = arith.extui %277 : vector<8x128xi1> to vector<8x128xi32>
    %298 = arith.addi %241, %297 : vector<8x128xi32>
    %299 = arith.extui %255 : vector<8x128xi1> to vector<8x128xi32>
    %300 = arith.addi %298, %299 : vector<8x128xi32>
    %301 = arith.subf %45, %193 : vector<8x128xf32>
    %302 = arith.mulf %232, %301 : vector<8x128xf32>
    %303 = arith.subf %33, %189 : vector<8x128xf32>
    %304 = arith.mulf %233, %303 : vector<8x128xf32>
    %305 = arith.subf %302, %304 : vector<8x128xf32>
    %cst_44 = arith.constant 0.000000e+00 : f32
    %306 = vector.broadcast %cst_44 : f32 to vector<8x128xf32>
    %307 = arith.cmpf ole, %305, %306 : vector<8x128xf32>
    %308 = arith.subf %30, %33 : vector<8x128xf32>
    %309 = arith.subf %42, %45 : vector<8x128xf32>
    %310 = arith.mulf %30, %45 : vector<8x128xf32>
    %311 = arith.mulf %42, %33 : vector<8x128xf32>
    %312 = arith.subf %310, %311 : vector<8x128xf32>
    %313 = arith.mulf %308, %237 : vector<8x128xf32>
    %314 = arith.mulf %309, %235 : vector<8x128xf32>
    %315 = arith.subf %313, %314 : vector<8x128xf32>
    %316 = tpu.reciprocal %315 {approx = true} : vector<8x128xf32> -> vector<8x128xf32>
    %317 = arith.mulf %315, %316 : vector<8x128xf32>
    %cst_45 = arith.constant 2.000000e+00 : f32
    %318 = vector.broadcast %cst_45 : f32 to vector<8x128xf32>
    %319 = arith.subf %318, %317 : vector<8x128xf32>
    %320 = arith.mulf %316, %319 : vector<8x128xf32>
    %321 = arith.mulf %312, %235 : vector<8x128xf32>
    %322 = arith.mulf %308, %240 : vector<8x128xf32>
    %323 = arith.subf %321, %322 : vector<8x128xf32>
    %324 = arith.mulf %323, %320 : vector<8x128xf32>
    %325 = arith.mulf %312, %237 : vector<8x128xf32>
    %326 = arith.mulf %309, %240 : vector<8x128xf32>
    %327 = arith.subf %325, %326 : vector<8x128xf32>
    %328 = arith.mulf %327, %320 : vector<8x128xf32>
    %329 = arith.xori %307, %255 : vector<8x128xi1>
    %330 = arith.andi %329, %307 : vector<8x128xi1>
    %c8_i32_46 = arith.constant 8 : i32
    %331 = vector.broadcast %c8_i32_46 : i32 to vector<8x128xi32>
    %332 = arith.select %329, %300, %331 : vector<8x128xi1>, vector<8x128xi32>
    %c0_i32_47 = arith.constant 0 : i32
    %333 = vector.broadcast %c0_i32_47 : i32 to vector<8x128xi32>
    %334 = arith.cmpi eq, %332, %333 : vector<8x128xi32>
    %335 = arith.select %334, %324, %291 : vector<8x128xi1>, vector<8x128xf32>
    %336 = arith.select %334, %328, %292 : vector<8x128xi1>, vector<8x128xf32>
    %c1_i32_48 = arith.constant 1 : i32
    %337 = vector.broadcast %c1_i32_48 : i32 to vector<8x128xi32>
    %338 = arith.cmpi eq, %332, %337 : vector<8x128xi32>
    %339 = arith.select %338, %324, %295 : vector<8x128xi1>, vector<8x128xf32>
    %340 = arith.select %338, %328, %296 : vector<8x128xi1>, vector<8x128xf32>
    %c2_i32 = arith.constant 2 : i32
    %341 = vector.broadcast %c2_i32 : i32 to vector<8x128xi32>
    %342 = arith.cmpi eq, %332, %341 : vector<8x128xi32>
    %343 = arith.select %342, %324, %52 : vector<8x128xi1>, vector<8x128xf32>
    %344 = arith.select %342, %328, %52 : vector<8x128xi1>, vector<8x128xf32>
    %345 = arith.extui %330 : vector<8x128xi1> to vector<8x128xi32>
    %346 = arith.addi %300, %345 : vector<8x128xi32>
    %c8_i32_49 = arith.constant 8 : i32
    %347 = vector.broadcast %c8_i32_49 : i32 to vector<8x128xi32>
    %348 = arith.select %307, %346, %347 : vector<8x128xi1>, vector<8x128xi32>
    %c0_i32_50 = arith.constant 0 : i32
    %349 = vector.broadcast %c0_i32_50 : i32 to vector<8x128xi32>
    %350 = arith.cmpi eq, %348, %349 : vector<8x128xi32>
    %351 = arith.select %350, %33, %335 : vector<8x128xi1>, vector<8x128xf32>
    %352 = arith.select %350, %45, %336 : vector<8x128xi1>, vector<8x128xf32>
    %c1_i32_51 = arith.constant 1 : i32
    %353 = vector.broadcast %c1_i32_51 : i32 to vector<8x128xi32>
    %354 = arith.cmpi eq, %348, %353 : vector<8x128xi32>
    %355 = arith.select %354, %33, %339 : vector<8x128xi1>, vector<8x128xf32>
    %356 = arith.select %354, %45, %340 : vector<8x128xi1>, vector<8x128xf32>
    %c2_i32_52 = arith.constant 2 : i32
    %357 = vector.broadcast %c2_i32_52 : i32 to vector<8x128xi32>
    %358 = arith.cmpi eq, %348, %357 : vector<8x128xi32>
    %359 = arith.select %358, %33, %343 : vector<8x128xi1>, vector<8x128xf32>
    %360 = arith.select %358, %45, %344 : vector<8x128xi1>, vector<8x128xf32>
    %c3_i32 = arith.constant 3 : i32
    %361 = vector.broadcast %c3_i32 : i32 to vector<8x128xi32>
    %362 = arith.cmpi eq, %348, %361 : vector<8x128xi32>
    %363 = arith.select %362, %33, %52 : vector<8x128xi1>, vector<8x128xf32>
    %364 = arith.select %362, %45, %52 : vector<8x128xi1>, vector<8x128xf32>
    %365 = arith.extui %329 : vector<8x128xi1> to vector<8x128xi32>
    %366 = arith.addi %300, %365 : vector<8x128xi32>
    %367 = arith.extui %307 : vector<8x128xi1> to vector<8x128xi32>
    %368 = arith.addi %366, %367 : vector<8x128xi32>
    %369 = arith.subf %48, %193 : vector<8x128xf32>
    %370 = arith.mulf %232, %369 : vector<8x128xf32>
    %371 = arith.subf %36, %189 : vector<8x128xf32>
    %372 = arith.mulf %233, %371 : vector<8x128xf32>
    %373 = arith.subf %370, %372 : vector<8x128xf32>
    %cst_53 = arith.constant 0.000000e+00 : f32
    %374 = vector.broadcast %cst_53 : f32 to vector<8x128xf32>
    %375 = arith.cmpf ole, %373, %374 : vector<8x128xf32>
    %376 = arith.subf %33, %36 : vector<8x128xf32>
    %377 = arith.subf %45, %48 : vector<8x128xf32>
    %378 = arith.mulf %33, %48 : vector<8x128xf32>
    %379 = arith.mulf %45, %36 : vector<8x128xf32>
    %380 = arith.subf %378, %379 : vector<8x128xf32>
    %381 = arith.mulf %376, %237 : vector<8x128xf32>
    %382 = arith.mulf %377, %235 : vector<8x128xf32>
    %383 = arith.subf %381, %382 : vector<8x128xf32>
    %384 = tpu.reciprocal %383 {approx = true} : vector<8x128xf32> -> vector<8x128xf32>
    %385 = arith.mulf %383, %384 : vector<8x128xf32>
    %cst_54 = arith.constant 2.000000e+00 : f32
    %386 = vector.broadcast %cst_54 : f32 to vector<8x128xf32>
    %387 = arith.subf %386, %385 : vector<8x128xf32>
    %388 = arith.mulf %384, %387 : vector<8x128xf32>
    %389 = arith.mulf %380, %235 : vector<8x128xf32>
    %390 = arith.mulf %376, %240 : vector<8x128xf32>
    %391 = arith.subf %389, %390 : vector<8x128xf32>
    %392 = arith.mulf %391, %388 : vector<8x128xf32>
    %393 = arith.mulf %380, %237 : vector<8x128xf32>
    %394 = arith.mulf %377, %240 : vector<8x128xf32>
    %395 = arith.subf %393, %394 : vector<8x128xf32>
    %396 = arith.mulf %395, %388 : vector<8x128xf32>
    %397 = arith.xori %375, %307 : vector<8x128xi1>
    %398 = arith.andi %397, %375 : vector<8x128xi1>
    %c8_i32_55 = arith.constant 8 : i32
    %399 = vector.broadcast %c8_i32_55 : i32 to vector<8x128xi32>
    %400 = arith.select %397, %368, %399 : vector<8x128xi1>, vector<8x128xi32>
    %c0_i32_56 = arith.constant 0 : i32
    %401 = vector.broadcast %c0_i32_56 : i32 to vector<8x128xi32>
    %402 = arith.cmpi eq, %400, %401 : vector<8x128xi32>
    %403 = arith.select %402, %392, %351 : vector<8x128xi1>, vector<8x128xf32>
    %404 = arith.select %402, %396, %352 : vector<8x128xi1>, vector<8x128xf32>
    %c1_i32_57 = arith.constant 1 : i32
    %405 = vector.broadcast %c1_i32_57 : i32 to vector<8x128xi32>
    %406 = arith.cmpi eq, %400, %405 : vector<8x128xi32>
    %407 = arith.select %406, %392, %355 : vector<8x128xi1>, vector<8x128xf32>
    %408 = arith.select %406, %396, %356 : vector<8x128xi1>, vector<8x128xf32>
    %c2_i32_58 = arith.constant 2 : i32
    %409 = vector.broadcast %c2_i32_58 : i32 to vector<8x128xi32>
    %410 = arith.cmpi eq, %400, %409 : vector<8x128xi32>
    %411 = arith.select %410, %392, %359 : vector<8x128xi1>, vector<8x128xf32>
    %412 = arith.select %410, %396, %360 : vector<8x128xi1>, vector<8x128xf32>
    %c3_i32_59 = arith.constant 3 : i32
    %413 = vector.broadcast %c3_i32_59 : i32 to vector<8x128xi32>
    %414 = arith.cmpi eq, %400, %413 : vector<8x128xi32>
    %415 = arith.select %414, %392, %363 : vector<8x128xi1>, vector<8x128xf32>
    %416 = arith.select %414, %396, %364 : vector<8x128xi1>, vector<8x128xf32>
    %c4_i32 = arith.constant 4 : i32
    %417 = vector.broadcast %c4_i32 : i32 to vector<8x128xi32>
    %418 = arith.cmpi eq, %400, %417 : vector<8x128xi32>
    %419 = arith.select %418, %392, %52 : vector<8x128xi1>, vector<8x128xf32>
    %420 = arith.select %418, %396, %52 : vector<8x128xi1>, vector<8x128xf32>
    %421 = arith.extui %398 : vector<8x128xi1> to vector<8x128xi32>
    %422 = arith.addi %368, %421 : vector<8x128xi32>
    %c8_i32_60 = arith.constant 8 : i32
    %423 = vector.broadcast %c8_i32_60 : i32 to vector<8x128xi32>
    %424 = arith.select %375, %422, %423 : vector<8x128xi1>, vector<8x128xi32>
    %c0_i32_61 = arith.constant 0 : i32
    %425 = vector.broadcast %c0_i32_61 : i32 to vector<8x128xi32>
    %426 = arith.cmpi eq, %424, %425 : vector<8x128xi32>
    %427 = arith.select %426, %36, %403 : vector<8x128xi1>, vector<8x128xf32>
    %428 = arith.select %426, %48, %404 : vector<8x128xi1>, vector<8x128xf32>
    %c1_i32_62 = arith.constant 1 : i32
    %429 = vector.broadcast %c1_i32_62 : i32 to vector<8x128xi32>
    %430 = arith.cmpi eq, %424, %429 : vector<8x128xi32>
    %431 = arith.select %430, %36, %407 : vector<8x128xi1>, vector<8x128xf32>
    %432 = arith.select %430, %48, %408 : vector<8x128xi1>, vector<8x128xf32>
    %c2_i32_63 = arith.constant 2 : i32
    %433 = vector.broadcast %c2_i32_63 : i32 to vector<8x128xi32>
    %434 = arith.cmpi eq, %424, %433 : vector<8x128xi32>
    %435 = arith.select %434, %36, %411 : vector<8x128xi1>, vector<8x128xf32>
    %436 = arith.select %434, %48, %412 : vector<8x128xi1>, vector<8x128xf32>
    %c3_i32_64 = arith.constant 3 : i32
    %437 = vector.broadcast %c3_i32_64 : i32 to vector<8x128xi32>
    %438 = arith.cmpi eq, %424, %437 : vector<8x128xi32>
    %439 = arith.select %438, %36, %415 : vector<8x128xi1>, vector<8x128xf32>
    %440 = arith.select %438, %48, %416 : vector<8x128xi1>, vector<8x128xf32>
    %c4_i32_65 = arith.constant 4 : i32
    %441 = vector.broadcast %c4_i32_65 : i32 to vector<8x128xi32>
    %442 = arith.cmpi eq, %424, %441 : vector<8x128xi32>
    %443 = arith.select %442, %36, %419 : vector<8x128xi1>, vector<8x128xf32>
    %444 = arith.select %442, %48, %420 : vector<8x128xi1>, vector<8x128xf32>
    %445 = arith.extui %397 : vector<8x128xi1> to vector<8x128xi32>
    %446 = arith.addi %368, %445 : vector<8x128xi32>
    %447 = arith.extui %375 : vector<8x128xi1> to vector<8x128xi32>
    %448 = arith.addi %446, %447 : vector<8x128xi32>
    %449 = arith.subf %51, %193 : vector<8x128xf32>
    %450 = arith.mulf %232, %449 : vector<8x128xf32>
    %451 = arith.subf %39, %189 : vector<8x128xf32>
    %452 = arith.mulf %233, %451 : vector<8x128xf32>
    %453 = arith.subf %450, %452 : vector<8x128xf32>
    %cst_66 = arith.constant 0.000000e+00 : f32
    %454 = vector.broadcast %cst_66 : f32 to vector<8x128xf32>
    %455 = arith.cmpf ole, %453, %454 : vector<8x128xf32>
    %456 = arith.subf %36, %39 : vector<8x128xf32>
    %457 = arith.subf %48, %51 : vector<8x128xf32>
    %458 = arith.mulf %36, %51 : vector<8x128xf32>
    %459 = arith.mulf %48, %39 : vector<8x128xf32>
    %460 = arith.subf %458, %459 : vector<8x128xf32>
    %461 = arith.mulf %456, %237 : vector<8x128xf32>
    %462 = arith.mulf %457, %235 : vector<8x128xf32>
    %463 = arith.subf %461, %462 : vector<8x128xf32>
    %464 = tpu.reciprocal %463 {approx = true} : vector<8x128xf32> -> vector<8x128xf32>
    %465 = arith.mulf %463, %464 : vector<8x128xf32>
    %cst_67 = arith.constant 2.000000e+00 : f32
    %466 = vector.broadcast %cst_67 : f32 to vector<8x128xf32>
    %467 = arith.subf %466, %465 : vector<8x128xf32>
    %468 = arith.mulf %464, %467 : vector<8x128xf32>
    %469 = arith.mulf %460, %235 : vector<8x128xf32>
    %470 = arith.mulf %456, %240 : vector<8x128xf32>
    %471 = arith.subf %469, %470 : vector<8x128xf32>
    %472 = arith.mulf %471, %468 : vector<8x128xf32>
    %473 = arith.mulf %460, %237 : vector<8x128xf32>
    %474 = arith.mulf %457, %240 : vector<8x128xf32>
    %475 = arith.subf %473, %474 : vector<8x128xf32>
    %476 = arith.mulf %475, %468 : vector<8x128xf32>
    %477 = arith.xori %455, %375 : vector<8x128xi1>
    %478 = arith.andi %477, %455 : vector<8x128xi1>
    %c8_i32_68 = arith.constant 8 : i32
    %479 = vector.broadcast %c8_i32_68 : i32 to vector<8x128xi32>
    %480 = arith.select %477, %448, %479 : vector<8x128xi1>, vector<8x128xi32>
    %c0_i32_69 = arith.constant 0 : i32
    %481 = vector.broadcast %c0_i32_69 : i32 to vector<8x128xi32>
    %482 = arith.cmpi eq, %480, %481 : vector<8x128xi32>
    %483 = arith.select %482, %472, %427 : vector<8x128xi1>, vector<8x128xf32>
    %484 = arith.select %482, %476, %428 : vector<8x128xi1>, vector<8x128xf32>
    %c1_i32_70 = arith.constant 1 : i32
    %485 = vector.broadcast %c1_i32_70 : i32 to vector<8x128xi32>
    %486 = arith.cmpi eq, %480, %485 : vector<8x128xi32>
    %487 = arith.select %486, %472, %431 : vector<8x128xi1>, vector<8x128xf32>
    %488 = arith.select %486, %476, %432 : vector<8x128xi1>, vector<8x128xf32>
    %c2_i32_71 = arith.constant 2 : i32
    %489 = vector.broadcast %c2_i32_71 : i32 to vector<8x128xi32>
    %490 = arith.cmpi eq, %480, %489 : vector<8x128xi32>
    %491 = arith.select %490, %472, %435 : vector<8x128xi1>, vector<8x128xf32>
    %492 = arith.select %490, %476, %436 : vector<8x128xi1>, vector<8x128xf32>
    %c3_i32_72 = arith.constant 3 : i32
    %493 = vector.broadcast %c3_i32_72 : i32 to vector<8x128xi32>
    %494 = arith.cmpi eq, %480, %493 : vector<8x128xi32>
    %495 = arith.select %494, %472, %439 : vector<8x128xi1>, vector<8x128xf32>
    %496 = arith.select %494, %476, %440 : vector<8x128xi1>, vector<8x128xf32>
    %c4_i32_73 = arith.constant 4 : i32
    %497 = vector.broadcast %c4_i32_73 : i32 to vector<8x128xi32>
    %498 = arith.cmpi eq, %480, %497 : vector<8x128xi32>
    %499 = arith.select %498, %472, %443 : vector<8x128xi1>, vector<8x128xf32>
    %500 = arith.select %498, %476, %444 : vector<8x128xi1>, vector<8x128xf32>
    %501 = arith.extui %478 : vector<8x128xi1> to vector<8x128xi32>
    %502 = arith.addi %448, %501 : vector<8x128xi32>
    %c8_i32_74 = arith.constant 8 : i32
    %503 = vector.broadcast %c8_i32_74 : i32 to vector<8x128xi32>
    %504 = arith.select %455, %502, %503 : vector<8x128xi1>, vector<8x128xi32>
    %c0_i32_75 = arith.constant 0 : i32
    %505 = vector.broadcast %c0_i32_75 : i32 to vector<8x128xi32>
    %506 = arith.cmpi eq, %504, %505 : vector<8x128xi32>
    %507 = arith.select %506, %39, %483 : vector<8x128xi1>, vector<8x128xf32>
    %508 = arith.select %506, %51, %484 : vector<8x128xi1>, vector<8x128xf32>
    %c1_i32_76 = arith.constant 1 : i32
    %509 = vector.broadcast %c1_i32_76 : i32 to vector<8x128xi32>
    %510 = arith.cmpi eq, %504, %509 : vector<8x128xi32>
    %511 = arith.select %510, %39, %487 : vector<8x128xi1>, vector<8x128xf32>
    %512 = arith.select %510, %51, %488 : vector<8x128xi1>, vector<8x128xf32>
    %c2_i32_77 = arith.constant 2 : i32
    %513 = vector.broadcast %c2_i32_77 : i32 to vector<8x128xi32>
    %514 = arith.cmpi eq, %504, %513 : vector<8x128xi32>
    %515 = arith.select %514, %39, %491 : vector<8x128xi1>, vector<8x128xf32>
    %516 = arith.select %514, %51, %492 : vector<8x128xi1>, vector<8x128xf32>
    %c3_i32_78 = arith.constant 3 : i32
    %517 = vector.broadcast %c3_i32_78 : i32 to vector<8x128xi32>
    %518 = arith.cmpi eq, %504, %517 : vector<8x128xi32>
    %519 = arith.select %518, %39, %495 : vector<8x128xi1>, vector<8x128xf32>
    %520 = arith.select %518, %51, %496 : vector<8x128xi1>, vector<8x128xf32>
    %c4_i32_79 = arith.constant 4 : i32
    %521 = vector.broadcast %c4_i32_79 : i32 to vector<8x128xi32>
    %522 = arith.cmpi eq, %504, %521 : vector<8x128xi32>
    %523 = arith.select %522, %39, %499 : vector<8x128xi1>, vector<8x128xf32>
    %524 = arith.select %522, %51, %500 : vector<8x128xi1>, vector<8x128xf32>
    %525 = arith.extui %477 : vector<8x128xi1> to vector<8x128xi32>
    %526 = arith.addi %448, %525 : vector<8x128xi32>
    %527 = arith.extui %455 : vector<8x128xi1> to vector<8x128xi32>
    %528 = arith.addi %526, %527 : vector<8x128xi32>
    %529 = arith.subf %187, %186 : vector<8x128xf32>
    %530 = arith.subf %191, %190 : vector<8x128xf32>
    %cst_80 = arith.constant 0.000000e+00 : f32
    %531 = vector.broadcast %cst_80 : f32 to vector<8x128xf32>
    %532 = arith.subf %531, %529 : vector<8x128xf32>
    %cst_81 = arith.constant 0.000000e+00 : f32
    %533 = vector.broadcast %cst_81 : f32 to vector<8x128xf32>
    %534 = arith.subf %533, %530 : vector<8x128xf32>
    %535 = arith.mulf %186, %191 : vector<8x128xf32>
    %536 = arith.mulf %190, %187 : vector<8x128xf32>
    %537 = arith.subf %535, %536 : vector<8x128xf32>
    %c0_i32_82 = arith.constant 0 : i32
    %538 = vector.broadcast %c0_i32_82 : i32 to vector<8x128xi32>
    %c1_i32_83 = arith.constant 1 : i32
    %539 = vector.broadcast %c1_i32_83 : i32 to vector<8x128xi32>
    %540 = arith.subi %528, %539 : vector<8x128xi32>
    %cst_84 = arith.constant 0.000000e+00 : f32
    %541 = vector.broadcast %cst_84 : f32 to vector<8x128xf32>
    %cst_85 = arith.constant 0.000000e+00 : f32
    %542 = vector.broadcast %cst_85 : f32 to vector<8x128xf32>
    %c0_i32_86 = arith.constant 0 : i32
    %543 = vector.broadcast %c0_i32_86 : i32 to vector<8x128xi32>
    %544 = arith.cmpi eq, %540, %543 : vector<8x128xi32>
    %545 = arith.select %544, %507, %541 : vector<8x128xi1>, vector<8x128xf32>
    %546 = arith.select %544, %508, %542 : vector<8x128xi1>, vector<8x128xf32>
    %c1_i32_87 = arith.constant 1 : i32
    %547 = vector.broadcast %c1_i32_87 : i32 to vector<8x128xi32>
    %548 = arith.cmpi eq, %540, %547 : vector<8x128xi32>
    %549 = arith.select %548, %511, %545 : vector<8x128xi1>, vector<8x128xf32>
    %550 = arith.select %548, %512, %546 : vector<8x128xi1>, vector<8x128xf32>
    %c2_i32_88 = arith.constant 2 : i32
    %551 = vector.broadcast %c2_i32_88 : i32 to vector<8x128xi32>
    %552 = arith.cmpi eq, %540, %551 : vector<8x128xi32>
    %553 = arith.select %552, %515, %549 : vector<8x128xi1>, vector<8x128xf32>
    %554 = arith.select %552, %516, %550 : vector<8x128xi1>, vector<8x128xf32>
    %c3_i32_89 = arith.constant 3 : i32
    %555 = vector.broadcast %c3_i32_89 : i32 to vector<8x128xi32>
    %556 = arith.cmpi eq, %540, %555 : vector<8x128xi32>
    %557 = arith.select %556, %519, %553 : vector<8x128xi1>, vector<8x128xf32>
    %558 = arith.select %556, %520, %554 : vector<8x128xi1>, vector<8x128xf32>
    %c4_i32_90 = arith.constant 4 : i32
    %559 = vector.broadcast %c4_i32_90 : i32 to vector<8x128xi32>
    %560 = arith.cmpi eq, %540, %559 : vector<8x128xi32>
    %561 = arith.select %560, %523, %557 : vector<8x128xi1>, vector<8x128xf32>
    %562 = arith.select %560, %524, %558 : vector<8x128xi1>, vector<8x128xf32>
    %563 = arith.subf %562, %190 : vector<8x128xf32>
    %564 = arith.mulf %529, %563 : vector<8x128xf32>
    %565 = arith.subf %561, %186 : vector<8x128xf32>
    %566 = arith.mulf %530, %565 : vector<8x128xf32>
    %567 = arith.subf %564, %566 : vector<8x128xf32>
    %cst_91 = arith.constant 0.000000e+00 : f32
    %568 = vector.broadcast %cst_91 : f32 to vector<8x128xf32>
    %569 = arith.cmpf ole, %567, %568 : vector<8x128xf32>
    %570 = arith.subf %508, %190 : vector<8x128xf32>
    %571 = arith.mulf %529, %570 : vector<8x128xf32>
    %572 = arith.subf %507, %186 : vector<8x128xf32>
    %573 = arith.mulf %530, %572 : vector<8x128xf32>
    %574 = arith.subf %571, %573 : vector<8x128xf32>
    %cst_92 = arith.constant 0.000000e+00 : f32
    %575 = vector.broadcast %cst_92 : f32 to vector<8x128xf32>
    %576 = arith.cmpf ole, %574, %575 : vector<8x128xf32>
    %577 = arith.subf %561, %507 : vector<8x128xf32>
    %578 = arith.subf %562, %508 : vector<8x128xf32>
    %579 = arith.mulf %561, %508 : vector<8x128xf32>
    %580 = arith.mulf %562, %507 : vector<8x128xf32>
    %581 = arith.subf %579, %580 : vector<8x128xf32>
    %582 = arith.mulf %577, %534 : vector<8x128xf32>
    %583 = arith.mulf %578, %532 : vector<8x128xf32>
    %584 = arith.subf %582, %583 : vector<8x128xf32>
    %585 = tpu.reciprocal %584 {approx = true} : vector<8x128xf32> -> vector<8x128xf32>
    %586 = arith.mulf %584, %585 : vector<8x128xf32>
    %cst_93 = arith.constant 2.000000e+00 : f32
    %587 = vector.broadcast %cst_93 : f32 to vector<8x128xf32>
    %588 = arith.subf %587, %586 : vector<8x128xf32>
    %589 = arith.mulf %585, %588 : vector<8x128xf32>
    %590 = arith.mulf %581, %532 : vector<8x128xf32>
    %591 = arith.mulf %577, %537 : vector<8x128xf32>
    %592 = arith.subf %590, %591 : vector<8x128xf32>
    %593 = arith.mulf %592, %589 : vector<8x128xf32>
    %594 = arith.mulf %581, %534 : vector<8x128xf32>
    %595 = arith.mulf %578, %537 : vector<8x128xf32>
    %596 = arith.subf %594, %595 : vector<8x128xf32>
    %597 = arith.mulf %596, %589 : vector<8x128xf32>
    %598 = arith.xori %576, %569 : vector<8x128xi1>
    %c0_i32_94 = arith.constant 0 : i32
    %599 = vector.broadcast %c0_i32_94 : i32 to vector<8x128xi32>
    %600 = arith.cmpi sgt, %528, %599 : vector<8x128xi32>
    %601 = arith.andi %600, %576 : vector<8x128xi1>
    %602 = arith.andi %600, %598 : vector<8x128xi1>
    %603 = arith.andi %602, %576 : vector<8x128xi1>
    %c8_i32_95 = arith.constant 8 : i32
    %604 = vector.broadcast %c8_i32_95 : i32 to vector<8x128xi32>
    %605 = arith.select %602, %538, %604 : vector<8x128xi1>, vector<8x128xi32>
    %c0_i32_96 = arith.constant 0 : i32
    %606 = vector.broadcast %c0_i32_96 : i32 to vector<8x128xi32>
    %607 = arith.cmpi eq, %605, %606 : vector<8x128xi32>
    %608 = arith.select %607, %593, %52 : vector<8x128xi1>, vector<8x128xf32>
    %609 = arith.select %607, %597, %52 : vector<8x128xi1>, vector<8x128xf32>
    %610 = arith.extui %603 : vector<8x128xi1> to vector<8x128xi32>
    %611 = arith.addi %538, %610 : vector<8x128xi32>
    %c8_i32_97 = arith.constant 8 : i32
    %612 = vector.broadcast %c8_i32_97 : i32 to vector<8x128xi32>
    %613 = arith.select %601, %611, %612 : vector<8x128xi1>, vector<8x128xi32>
    %c0_i32_98 = arith.constant 0 : i32
    %614 = vector.broadcast %c0_i32_98 : i32 to vector<8x128xi32>
    %615 = arith.cmpi eq, %613, %614 : vector<8x128xi32>
    %616 = arith.select %615, %507, %608 : vector<8x128xi1>, vector<8x128xf32>
    %617 = arith.select %615, %508, %609 : vector<8x128xi1>, vector<8x128xf32>
    %c1_i32_99 = arith.constant 1 : i32
    %618 = vector.broadcast %c1_i32_99 : i32 to vector<8x128xi32>
    %619 = arith.cmpi eq, %613, %618 : vector<8x128xi32>
    %620 = arith.select %619, %507, %52 : vector<8x128xi1>, vector<8x128xf32>
    %621 = arith.select %619, %508, %52 : vector<8x128xi1>, vector<8x128xf32>
    %622 = arith.extui %602 : vector<8x128xi1> to vector<8x128xi32>
    %623 = arith.addi %538, %622 : vector<8x128xi32>
    %624 = arith.extui %601 : vector<8x128xi1> to vector<8x128xi32>
    %625 = arith.addi %623, %624 : vector<8x128xi32>
    %626 = arith.subf %512, %190 : vector<8x128xf32>
    %627 = arith.mulf %529, %626 : vector<8x128xf32>
    %628 = arith.subf %511, %186 : vector<8x128xf32>
    %629 = arith.mulf %530, %628 : vector<8x128xf32>
    %630 = arith.subf %627, %629 : vector<8x128xf32>
    %cst_100 = arith.constant 0.000000e+00 : f32
    %631 = vector.broadcast %cst_100 : f32 to vector<8x128xf32>
    %632 = arith.cmpf ole, %630, %631 : vector<8x128xf32>
    %633 = arith.subf %507, %511 : vector<8x128xf32>
    %634 = arith.subf %508, %512 : vector<8x128xf32>
    %635 = arith.mulf %507, %512 : vector<8x128xf32>
    %636 = arith.mulf %508, %511 : vector<8x128xf32>
    %637 = arith.subf %635, %636 : vector<8x128xf32>
    %638 = arith.mulf %633, %534 : vector<8x128xf32>
    %639 = arith.mulf %634, %532 : vector<8x128xf32>
    %640 = arith.subf %638, %639 : vector<8x128xf32>
    %641 = tpu.reciprocal %640 {approx = true} : vector<8x128xf32> -> vector<8x128xf32>
    %642 = arith.mulf %640, %641 : vector<8x128xf32>
    %cst_101 = arith.constant 2.000000e+00 : f32
    %643 = vector.broadcast %cst_101 : f32 to vector<8x128xf32>
    %644 = arith.subf %643, %642 : vector<8x128xf32>
    %645 = arith.mulf %641, %644 : vector<8x128xf32>
    %646 = arith.mulf %637, %532 : vector<8x128xf32>
    %647 = arith.mulf %633, %537 : vector<8x128xf32>
    %648 = arith.subf %646, %647 : vector<8x128xf32>
    %649 = arith.mulf %648, %645 : vector<8x128xf32>
    %650 = arith.mulf %637, %534 : vector<8x128xf32>
    %651 = arith.mulf %634, %537 : vector<8x128xf32>
    %652 = arith.subf %650, %651 : vector<8x128xf32>
    %653 = arith.mulf %652, %645 : vector<8x128xf32>
    %654 = arith.xori %632, %576 : vector<8x128xi1>
    %c1_i32_102 = arith.constant 1 : i32
    %655 = vector.broadcast %c1_i32_102 : i32 to vector<8x128xi32>
    %656 = arith.cmpi sgt, %528, %655 : vector<8x128xi32>
    %657 = arith.andi %656, %632 : vector<8x128xi1>
    %658 = arith.andi %656, %654 : vector<8x128xi1>
    %659 = arith.andi %658, %632 : vector<8x128xi1>
    %c8_i32_103 = arith.constant 8 : i32
    %660 = vector.broadcast %c8_i32_103 : i32 to vector<8x128xi32>
    %661 = arith.select %658, %625, %660 : vector<8x128xi1>, vector<8x128xi32>
    %c0_i32_104 = arith.constant 0 : i32
    %662 = vector.broadcast %c0_i32_104 : i32 to vector<8x128xi32>
    %663 = arith.cmpi eq, %661, %662 : vector<8x128xi32>
    %664 = arith.select %663, %649, %616 : vector<8x128xi1>, vector<8x128xf32>
    %665 = arith.select %663, %653, %617 : vector<8x128xi1>, vector<8x128xf32>
    %c1_i32_105 = arith.constant 1 : i32
    %666 = vector.broadcast %c1_i32_105 : i32 to vector<8x128xi32>
    %667 = arith.cmpi eq, %661, %666 : vector<8x128xi32>
    %668 = arith.select %667, %649, %620 : vector<8x128xi1>, vector<8x128xf32>
    %669 = arith.select %667, %653, %621 : vector<8x128xi1>, vector<8x128xf32>
    %c2_i32_106 = arith.constant 2 : i32
    %670 = vector.broadcast %c2_i32_106 : i32 to vector<8x128xi32>
    %671 = arith.cmpi eq, %661, %670 : vector<8x128xi32>
    %672 = arith.select %671, %649, %52 : vector<8x128xi1>, vector<8x128xf32>
    %673 = arith.select %671, %653, %52 : vector<8x128xi1>, vector<8x128xf32>
    %674 = arith.extui %659 : vector<8x128xi1> to vector<8x128xi32>
    %675 = arith.addi %625, %674 : vector<8x128xi32>
    %c8_i32_107 = arith.constant 8 : i32
    %676 = vector.broadcast %c8_i32_107 : i32 to vector<8x128xi32>
    %677 = arith.select %657, %675, %676 : vector<8x128xi1>, vector<8x128xi32>
    %c0_i32_108 = arith.constant 0 : i32
    %678 = vector.broadcast %c0_i32_108 : i32 to vector<8x128xi32>
    %679 = arith.cmpi eq, %677, %678 : vector<8x128xi32>
    %680 = arith.select %679, %511, %664 : vector<8x128xi1>, vector<8x128xf32>
    %681 = arith.select %679, %512, %665 : vector<8x128xi1>, vector<8x128xf32>
    %c1_i32_109 = arith.constant 1 : i32
    %682 = vector.broadcast %c1_i32_109 : i32 to vector<8x128xi32>
    %683 = arith.cmpi eq, %677, %682 : vector<8x128xi32>
    %684 = arith.select %683, %511, %668 : vector<8x128xi1>, vector<8x128xf32>
    %685 = arith.select %683, %512, %669 : vector<8x128xi1>, vector<8x128xf32>
    %c2_i32_110 = arith.constant 2 : i32
    %686 = vector.broadcast %c2_i32_110 : i32 to vector<8x128xi32>
    %687 = arith.cmpi eq, %677, %686 : vector<8x128xi32>
    %688 = arith.select %687, %511, %672 : vector<8x128xi1>, vector<8x128xf32>
    %689 = arith.select %687, %512, %673 : vector<8x128xi1>, vector<8x128xf32>
    %c3_i32_111 = arith.constant 3 : i32
    %690 = vector.broadcast %c3_i32_111 : i32 to vector<8x128xi32>
    %691 = arith.cmpi eq, %677, %690 : vector<8x128xi32>
    %692 = arith.select %691, %511, %52 : vector<8x128xi1>, vector<8x128xf32>
    %693 = arith.select %691, %512, %52 : vector<8x128xi1>, vector<8x128xf32>
    %694 = arith.extui %658 : vector<8x128xi1> to vector<8x128xi32>
    %695 = arith.addi %625, %694 : vector<8x128xi32>
    %696 = arith.extui %657 : vector<8x128xi1> to vector<8x128xi32>
    %697 = arith.addi %695, %696 : vector<8x128xi32>
    %698 = arith.subf %516, %190 : vector<8x128xf32>
    %699 = arith.mulf %529, %698 : vector<8x128xf32>
    %700 = arith.subf %515, %186 : vector<8x128xf32>
    %701 = arith.mulf %530, %700 : vector<8x128xf32>
    %702 = arith.subf %699, %701 : vector<8x128xf32>
    %cst_112 = arith.constant 0.000000e+00 : f32
    %703 = vector.broadcast %cst_112 : f32 to vector<8x128xf32>
    %704 = arith.cmpf ole, %702, %703 : vector<8x128xf32>
    %705 = arith.subf %511, %515 : vector<8x128xf32>
    %706 = arith.subf %512, %516 : vector<8x128xf32>
    %707 = arith.mulf %511, %516 : vector<8x128xf32>
    %708 = arith.mulf %512, %515 : vector<8x128xf32>
    %709 = arith.subf %707, %708 : vector<8x128xf32>
    %710 = arith.mulf %705, %534 : vector<8x128xf32>
    %711 = arith.mulf %706, %532 : vector<8x128xf32>
    %712 = arith.subf %710, %711 : vector<8x128xf32>
    %713 = tpu.reciprocal %712 {approx = true} : vector<8x128xf32> -> vector<8x128xf32>
    %714 = arith.mulf %712, %713 : vector<8x128xf32>
    %cst_113 = arith.constant 2.000000e+00 : f32
    %715 = vector.broadcast %cst_113 : f32 to vector<8x128xf32>
    %716 = arith.subf %715, %714 : vector<8x128xf32>
    %717 = arith.mulf %713, %716 : vector<8x128xf32>
    %718 = arith.mulf %709, %532 : vector<8x128xf32>
    %719 = arith.mulf %705, %537 : vector<8x128xf32>
    %720 = arith.subf %718, %719 : vector<8x128xf32>
    %721 = arith.mulf %720, %717 : vector<8x128xf32>
    %722 = arith.mulf %709, %534 : vector<8x128xf32>
    %723 = arith.mulf %706, %537 : vector<8x128xf32>
    %724 = arith.subf %722, %723 : vector<8x128xf32>
    %725 = arith.mulf %724, %717 : vector<8x128xf32>
    %726 = arith.xori %704, %632 : vector<8x128xi1>
    %c2_i32_114 = arith.constant 2 : i32
    %727 = vector.broadcast %c2_i32_114 : i32 to vector<8x128xi32>
    %728 = arith.cmpi sgt, %528, %727 : vector<8x128xi32>
    %729 = arith.andi %728, %704 : vector<8x128xi1>
    %730 = arith.andi %728, %726 : vector<8x128xi1>
    %731 = arith.andi %730, %704 : vector<8x128xi1>
    %c8_i32_115 = arith.constant 8 : i32
    %732 = vector.broadcast %c8_i32_115 : i32 to vector<8x128xi32>
    %733 = arith.select %730, %697, %732 : vector<8x128xi1>, vector<8x128xi32>
    %c0_i32_116 = arith.constant 0 : i32
    %734 = vector.broadcast %c0_i32_116 : i32 to vector<8x128xi32>
    %735 = arith.cmpi eq, %733, %734 : vector<8x128xi32>
    %736 = arith.select %735, %721, %680 : vector<8x128xi1>, vector<8x128xf32>
    %737 = arith.select %735, %725, %681 : vector<8x128xi1>, vector<8x128xf32>
    %c1_i32_117 = arith.constant 1 : i32
    %738 = vector.broadcast %c1_i32_117 : i32 to vector<8x128xi32>
    %739 = arith.cmpi eq, %733, %738 : vector<8x128xi32>
    %740 = arith.select %739, %721, %684 : vector<8x128xi1>, vector<8x128xf32>
    %741 = arith.select %739, %725, %685 : vector<8x128xi1>, vector<8x128xf32>
    %c2_i32_118 = arith.constant 2 : i32
    %742 = vector.broadcast %c2_i32_118 : i32 to vector<8x128xi32>
    %743 = arith.cmpi eq, %733, %742 : vector<8x128xi32>
    %744 = arith.select %743, %721, %688 : vector<8x128xi1>, vector<8x128xf32>
    %745 = arith.select %743, %725, %689 : vector<8x128xi1>, vector<8x128xf32>
    %c3_i32_119 = arith.constant 3 : i32
    %746 = vector.broadcast %c3_i32_119 : i32 to vector<8x128xi32>
    %747 = arith.cmpi eq, %733, %746 : vector<8x128xi32>
    %748 = arith.select %747, %721, %692 : vector<8x128xi1>, vector<8x128xf32>
    %749 = arith.select %747, %725, %693 : vector<8x128xi1>, vector<8x128xf32>
    %c4_i32_120 = arith.constant 4 : i32
    %750 = vector.broadcast %c4_i32_120 : i32 to vector<8x128xi32>
    %751 = arith.cmpi eq, %733, %750 : vector<8x128xi32>
    %752 = arith.select %751, %721, %52 : vector<8x128xi1>, vector<8x128xf32>
    %753 = arith.select %751, %725, %52 : vector<8x128xi1>, vector<8x128xf32>
    %754 = arith.extui %731 : vector<8x128xi1> to vector<8x128xi32>
    %755 = arith.addi %697, %754 : vector<8x128xi32>
    %c8_i32_121 = arith.constant 8 : i32
    %756 = vector.broadcast %c8_i32_121 : i32 to vector<8x128xi32>
    %757 = arith.select %729, %755, %756 : vector<8x128xi1>, vector<8x128xi32>
    %c0_i32_122 = arith.constant 0 : i32
    %758 = vector.broadcast %c0_i32_122 : i32 to vector<8x128xi32>
    %759 = arith.cmpi eq, %757, %758 : vector<8x128xi32>
    %760 = arith.select %759, %515, %736 : vector<8x128xi1>, vector<8x128xf32>
    %761 = arith.select %759, %516, %737 : vector<8x128xi1>, vector<8x128xf32>
    %c1_i32_123 = arith.constant 1 : i32
    %762 = vector.broadcast %c1_i32_123 : i32 to vector<8x128xi32>
    %763 = arith.cmpi eq, %757, %762 : vector<8x128xi32>
    %764 = arith.select %763, %515, %740 : vector<8x128xi1>, vector<8x128xf32>
    %765 = arith.select %763, %516, %741 : vector<8x128xi1>, vector<8x128xf32>
    %c2_i32_124 = arith.constant 2 : i32
    %766 = vector.broadcast %c2_i32_124 : i32 to vector<8x128xi32>
    %767 = arith.cmpi eq, %757, %766 : vector<8x128xi32>
    %768 = arith.select %767, %515, %744 : vector<8x128xi1>, vector<8x128xf32>
    %769 = arith.select %767, %516, %745 : vector<8x128xi1>, vector<8x128xf32>
    %c3_i32_125 = arith.constant 3 : i32
    %770 = vector.broadcast %c3_i32_125 : i32 to vector<8x128xi32>
    %771 = arith.cmpi eq, %757, %770 : vector<8x128xi32>
    %772 = arith.select %771, %515, %748 : vector<8x128xi1>, vector<8x128xf32>
    %773 = arith.select %771, %516, %749 : vector<8x128xi1>, vector<8x128xf32>
    %c4_i32_126 = arith.constant 4 : i32
    %774 = vector.broadcast %c4_i32_126 : i32 to vector<8x128xi32>
    %775 = arith.cmpi eq, %757, %774 : vector<8x128xi32>
    %776 = arith.select %775, %515, %752 : vector<8x128xi1>, vector<8x128xf32>
    %777 = arith.select %775, %516, %753 : vector<8x128xi1>, vector<8x128xf32>
    %c5_i32 = arith.constant 5 : i32
    %778 = vector.broadcast %c5_i32 : i32 to vector<8x128xi32>
    %779 = arith.cmpi eq, %757, %778 : vector<8x128xi32>
    %780 = arith.select %779, %515, %52 : vector<8x128xi1>, vector<8x128xf32>
    %781 = arith.select %779, %516, %52 : vector<8x128xi1>, vector<8x128xf32>
    %782 = arith.extui %730 : vector<8x128xi1> to vector<8x128xi32>
    %783 = arith.addi %697, %782 : vector<8x128xi32>
    %784 = arith.extui %729 : vector<8x128xi1> to vector<8x128xi32>
    %785 = arith.addi %783, %784 : vector<8x128xi32>
    %786 = arith.subf %520, %190 : vector<8x128xf32>
    %787 = arith.mulf %529, %786 : vector<8x128xf32>
    %788 = arith.subf %519, %186 : vector<8x128xf32>
    %789 = arith.mulf %530, %788 : vector<8x128xf32>
    %790 = arith.subf %787, %789 : vector<8x128xf32>
    %cst_127 = arith.constant 0.000000e+00 : f32
    %791 = vector.broadcast %cst_127 : f32 to vector<8x128xf32>
    %792 = arith.cmpf ole, %790, %791 : vector<8x128xf32>
    %793 = arith.subf %515, %519 : vector<8x128xf32>
    %794 = arith.subf %516, %520 : vector<8x128xf32>
    %795 = arith.mulf %515, %520 : vector<8x128xf32>
    %796 = arith.mulf %516, %519 : vector<8x128xf32>
    %797 = arith.subf %795, %796 : vector<8x128xf32>
    %798 = arith.mulf %793, %534 : vector<8x128xf32>
    %799 = arith.mulf %794, %532 : vector<8x128xf32>
    %800 = arith.subf %798, %799 : vector<8x128xf32>
    %801 = tpu.reciprocal %800 {approx = true} : vector<8x128xf32> -> vector<8x128xf32>
    %802 = arith.mulf %800, %801 : vector<8x128xf32>
    %cst_128 = arith.constant 2.000000e+00 : f32
    %803 = vector.broadcast %cst_128 : f32 to vector<8x128xf32>
    %804 = arith.subf %803, %802 : vector<8x128xf32>
    %805 = arith.mulf %801, %804 : vector<8x128xf32>
    %806 = arith.mulf %797, %532 : vector<8x128xf32>
    %807 = arith.mulf %793, %537 : vector<8x128xf32>
    %808 = arith.subf %806, %807 : vector<8x128xf32>
    %809 = arith.mulf %808, %805 : vector<8x128xf32>
    %810 = arith.mulf %797, %534 : vector<8x128xf32>
    %811 = arith.mulf %794, %537 : vector<8x128xf32>
    %812 = arith.subf %810, %811 : vector<8x128xf32>
    %813 = arith.mulf %812, %805 : vector<8x128xf32>
    %814 = arith.xori %792, %704 : vector<8x128xi1>
    %c3_i32_129 = arith.constant 3 : i32
    %815 = vector.broadcast %c3_i32_129 : i32 to vector<8x128xi32>
    %816 = arith.cmpi sgt, %528, %815 : vector<8x128xi32>
    %817 = arith.andi %816, %792 : vector<8x128xi1>
    %818 = arith.andi %816, %814 : vector<8x128xi1>
    %819 = arith.andi %818, %792 : vector<8x128xi1>
    %c8_i32_130 = arith.constant 8 : i32
    %820 = vector.broadcast %c8_i32_130 : i32 to vector<8x128xi32>
    %821 = arith.select %818, %785, %820 : vector<8x128xi1>, vector<8x128xi32>
    %c0_i32_131 = arith.constant 0 : i32
    %822 = vector.broadcast %c0_i32_131 : i32 to vector<8x128xi32>
    %823 = arith.cmpi eq, %821, %822 : vector<8x128xi32>
    %824 = arith.select %823, %809, %760 : vector<8x128xi1>, vector<8x128xf32>
    %825 = arith.select %823, %813, %761 : vector<8x128xi1>, vector<8x128xf32>
    %c1_i32_132 = arith.constant 1 : i32
    %826 = vector.broadcast %c1_i32_132 : i32 to vector<8x128xi32>
    %827 = arith.cmpi eq, %821, %826 : vector<8x128xi32>
    %828 = arith.select %827, %809, %764 : vector<8x128xi1>, vector<8x128xf32>
    %829 = arith.select %827, %813, %765 : vector<8x128xi1>, vector<8x128xf32>
    %c2_i32_133 = arith.constant 2 : i32
    %830 = vector.broadcast %c2_i32_133 : i32 to vector<8x128xi32>
    %831 = arith.cmpi eq, %821, %830 : vector<8x128xi32>
    %832 = arith.select %831, %809, %768 : vector<8x128xi1>, vector<8x128xf32>
    %833 = arith.select %831, %813, %769 : vector<8x128xi1>, vector<8x128xf32>
    %c3_i32_134 = arith.constant 3 : i32
    %834 = vector.broadcast %c3_i32_134 : i32 to vector<8x128xi32>
    %835 = arith.cmpi eq, %821, %834 : vector<8x128xi32>
    %836 = arith.select %835, %809, %772 : vector<8x128xi1>, vector<8x128xf32>
    %837 = arith.select %835, %813, %773 : vector<8x128xi1>, vector<8x128xf32>
    %c4_i32_135 = arith.constant 4 : i32
    %838 = vector.broadcast %c4_i32_135 : i32 to vector<8x128xi32>
    %839 = arith.cmpi eq, %821, %838 : vector<8x128xi32>
    %840 = arith.select %839, %809, %776 : vector<8x128xi1>, vector<8x128xf32>
    %841 = arith.select %839, %813, %777 : vector<8x128xi1>, vector<8x128xf32>
    %c5_i32_136 = arith.constant 5 : i32
    %842 = vector.broadcast %c5_i32_136 : i32 to vector<8x128xi32>
    %843 = arith.cmpi eq, %821, %842 : vector<8x128xi32>
    %844 = arith.select %843, %809, %780 : vector<8x128xi1>, vector<8x128xf32>
    %845 = arith.select %843, %813, %781 : vector<8x128xi1>, vector<8x128xf32>
    %846 = arith.extui %819 : vector<8x128xi1> to vector<8x128xi32>
    %847 = arith.addi %785, %846 : vector<8x128xi32>
    %c8_i32_137 = arith.constant 8 : i32
    %848 = vector.broadcast %c8_i32_137 : i32 to vector<8x128xi32>
    %849 = arith.select %817, %847, %848 : vector<8x128xi1>, vector<8x128xi32>
    %c0_i32_138 = arith.constant 0 : i32
    %850 = vector.broadcast %c0_i32_138 : i32 to vector<8x128xi32>
    %851 = arith.cmpi eq, %849, %850 : vector<8x128xi32>
    %852 = arith.select %851, %519, %824 : vector<8x128xi1>, vector<8x128xf32>
    %853 = arith.select %851, %520, %825 : vector<8x128xi1>, vector<8x128xf32>
    %c1_i32_139 = arith.constant 1 : i32
    %854 = vector.broadcast %c1_i32_139 : i32 to vector<8x128xi32>
    %855 = arith.cmpi eq, %849, %854 : vector<8x128xi32>
    %856 = arith.select %855, %519, %828 : vector<8x128xi1>, vector<8x128xf32>
    %857 = arith.select %855, %520, %829 : vector<8x128xi1>, vector<8x128xf32>
    %c2_i32_140 = arith.constant 2 : i32
    %858 = vector.broadcast %c2_i32_140 : i32 to vector<8x128xi32>
    %859 = arith.cmpi eq, %849, %858 : vector<8x128xi32>
    %860 = arith.select %859, %519, %832 : vector<8x128xi1>, vector<8x128xf32>
    %861 = arith.select %859, %520, %833 : vector<8x128xi1>, vector<8x128xf32>
    %c3_i32_141 = arith.constant 3 : i32
    %862 = vector.broadcast %c3_i32_141 : i32 to vector<8x128xi32>
    %863 = arith.cmpi eq, %849, %862 : vector<8x128xi32>
    %864 = arith.select %863, %519, %836 : vector<8x128xi1>, vector<8x128xf32>
    %865 = arith.select %863, %520, %837 : vector<8x128xi1>, vector<8x128xf32>
    %c4_i32_142 = arith.constant 4 : i32
    %866 = vector.broadcast %c4_i32_142 : i32 to vector<8x128xi32>
    %867 = arith.cmpi eq, %849, %866 : vector<8x128xi32>
    %868 = arith.select %867, %519, %840 : vector<8x128xi1>, vector<8x128xf32>
    %869 = arith.select %867, %520, %841 : vector<8x128xi1>, vector<8x128xf32>
    %c5_i32_143 = arith.constant 5 : i32
    %870 = vector.broadcast %c5_i32_143 : i32 to vector<8x128xi32>
    %871 = arith.cmpi eq, %849, %870 : vector<8x128xi32>
    %872 = arith.select %871, %519, %844 : vector<8x128xi1>, vector<8x128xf32>
    %873 = arith.select %871, %520, %845 : vector<8x128xi1>, vector<8x128xf32>
    %874 = arith.extui %818 : vector<8x128xi1> to vector<8x128xi32>
    %875 = arith.addi %785, %874 : vector<8x128xi32>
    %876 = arith.extui %817 : vector<8x128xi1> to vector<8x128xi32>
    %877 = arith.addi %875, %876 : vector<8x128xi32>
    %878 = arith.subf %524, %190 : vector<8x128xf32>
    %879 = arith.mulf %529, %878 : vector<8x128xf32>
    %880 = arith.subf %523, %186 : vector<8x128xf32>
    %881 = arith.mulf %530, %880 : vector<8x128xf32>
    %882 = arith.subf %879, %881 : vector<8x128xf32>
    %cst_144 = arith.constant 0.000000e+00 : f32
    %883 = vector.broadcast %cst_144 : f32 to vector<8x128xf32>
    %884 = arith.cmpf ole, %882, %883 : vector<8x128xf32>
    %885 = arith.subf %519, %523 : vector<8x128xf32>
    %886 = arith.subf %520, %524 : vector<8x128xf32>
    %887 = arith.mulf %519, %524 : vector<8x128xf32>
    %888 = arith.mulf %520, %523 : vector<8x128xf32>
    %889 = arith.subf %887, %888 : vector<8x128xf32>
    %890 = arith.mulf %885, %534 : vector<8x128xf32>
    %891 = arith.mulf %886, %532 : vector<8x128xf32>
    %892 = arith.subf %890, %891 : vector<8x128xf32>
    %893 = tpu.reciprocal %892 {approx = true} : vector<8x128xf32> -> vector<8x128xf32>
    %894 = arith.mulf %892, %893 : vector<8x128xf32>
    %cst_145 = arith.constant 2.000000e+00 : f32
    %895 = vector.broadcast %cst_145 : f32 to vector<8x128xf32>
    %896 = arith.subf %895, %894 : vector<8x128xf32>
    %897 = arith.mulf %893, %896 : vector<8x128xf32>
    %898 = arith.mulf %889, %532 : vector<8x128xf32>
    %899 = arith.mulf %885, %537 : vector<8x128xf32>
    %900 = arith.subf %898, %899 : vector<8x128xf32>
    %901 = arith.mulf %900, %897 : vector<8x128xf32>
    %902 = arith.mulf %889, %534 : vector<8x128xf32>
    %903 = arith.mulf %886, %537 : vector<8x128xf32>
    %904 = arith.subf %902, %903 : vector<8x128xf32>
    %905 = arith.mulf %904, %897 : vector<8x128xf32>
    %906 = arith.xori %884, %792 : vector<8x128xi1>
    %c4_i32_146 = arith.constant 4 : i32
    %907 = vector.broadcast %c4_i32_146 : i32 to vector<8x128xi32>
    %908 = arith.cmpi sgt, %528, %907 : vector<8x128xi32>
    %909 = arith.andi %908, %884 : vector<8x128xi1>
    %910 = arith.andi %908, %906 : vector<8x128xi1>
    %911 = arith.andi %910, %884 : vector<8x128xi1>
    %c8_i32_147 = arith.constant 8 : i32
    %912 = vector.broadcast %c8_i32_147 : i32 to vector<8x128xi32>
    %913 = arith.select %910, %877, %912 : vector<8x128xi1>, vector<8x128xi32>
    %c0_i32_148 = arith.constant 0 : i32
    %914 = vector.broadcast %c0_i32_148 : i32 to vector<8x128xi32>
    %915 = arith.cmpi eq, %913, %914 : vector<8x128xi32>
    %916 = arith.select %915, %901, %852 : vector<8x128xi1>, vector<8x128xf32>
    %917 = arith.select %915, %905, %853 : vector<8x128xi1>, vector<8x128xf32>
    %c1_i32_149 = arith.constant 1 : i32
    %918 = vector.broadcast %c1_i32_149 : i32 to vector<8x128xi32>
    %919 = arith.cmpi eq, %913, %918 : vector<8x128xi32>
    %920 = arith.select %919, %901, %856 : vector<8x128xi1>, vector<8x128xf32>
    %921 = arith.select %919, %905, %857 : vector<8x128xi1>, vector<8x128xf32>
    %c2_i32_150 = arith.constant 2 : i32
    %922 = vector.broadcast %c2_i32_150 : i32 to vector<8x128xi32>
    %923 = arith.cmpi eq, %913, %922 : vector<8x128xi32>
    %924 = arith.select %923, %901, %860 : vector<8x128xi1>, vector<8x128xf32>
    %925 = arith.select %923, %905, %861 : vector<8x128xi1>, vector<8x128xf32>
    %c3_i32_151 = arith.constant 3 : i32
    %926 = vector.broadcast %c3_i32_151 : i32 to vector<8x128xi32>
    %927 = arith.cmpi eq, %913, %926 : vector<8x128xi32>
    %928 = arith.select %927, %901, %864 : vector<8x128xi1>, vector<8x128xf32>
    %929 = arith.select %927, %905, %865 : vector<8x128xi1>, vector<8x128xf32>
    %c4_i32_152 = arith.constant 4 : i32
    %930 = vector.broadcast %c4_i32_152 : i32 to vector<8x128xi32>
    %931 = arith.cmpi eq, %913, %930 : vector<8x128xi32>
    %932 = arith.select %931, %901, %868 : vector<8x128xi1>, vector<8x128xf32>
    %933 = arith.select %931, %905, %869 : vector<8x128xi1>, vector<8x128xf32>
    %c5_i32_153 = arith.constant 5 : i32
    %934 = vector.broadcast %c5_i32_153 : i32 to vector<8x128xi32>
    %935 = arith.cmpi eq, %913, %934 : vector<8x128xi32>
    %936 = arith.select %935, %901, %872 : vector<8x128xi1>, vector<8x128xf32>
    %937 = arith.select %935, %905, %873 : vector<8x128xi1>, vector<8x128xf32>
    %938 = arith.extui %911 : vector<8x128xi1> to vector<8x128xi32>
    %939 = arith.addi %877, %938 : vector<8x128xi32>
    %c8_i32_154 = arith.constant 8 : i32
    %940 = vector.broadcast %c8_i32_154 : i32 to vector<8x128xi32>
    %941 = arith.select %909, %939, %940 : vector<8x128xi1>, vector<8x128xi32>
    %c0_i32_155 = arith.constant 0 : i32
    %942 = vector.broadcast %c0_i32_155 : i32 to vector<8x128xi32>
    %943 = arith.cmpi eq, %941, %942 : vector<8x128xi32>
    %944 = arith.select %943, %523, %916 : vector<8x128xi1>, vector<8x128xf32>
    %945 = arith.select %943, %524, %917 : vector<8x128xi1>, vector<8x128xf32>
    %c1_i32_156 = arith.constant 1 : i32
    %946 = vector.broadcast %c1_i32_156 : i32 to vector<8x128xi32>
    %947 = arith.cmpi eq, %941, %946 : vector<8x128xi32>
    %948 = arith.select %947, %523, %920 : vector<8x128xi1>, vector<8x128xf32>
    %949 = arith.select %947, %524, %921 : vector<8x128xi1>, vector<8x128xf32>
    %c2_i32_157 = arith.constant 2 : i32
    %950 = vector.broadcast %c2_i32_157 : i32 to vector<8x128xi32>
    %951 = arith.cmpi eq, %941, %950 : vector<8x128xi32>
    %952 = arith.select %951, %523, %924 : vector<8x128xi1>, vector<8x128xf32>
    %953 = arith.select %951, %524, %925 : vector<8x128xi1>, vector<8x128xf32>
    %c3_i32_158 = arith.constant 3 : i32
    %954 = vector.broadcast %c3_i32_158 : i32 to vector<8x128xi32>
    %955 = arith.cmpi eq, %941, %954 : vector<8x128xi32>
    %956 = arith.select %955, %523, %928 : vector<8x128xi1>, vector<8x128xf32>
    %957 = arith.select %955, %524, %929 : vector<8x128xi1>, vector<8x128xf32>
    %c4_i32_159 = arith.constant 4 : i32
    %958 = vector.broadcast %c4_i32_159 : i32 to vector<8x128xi32>
    %959 = arith.cmpi eq, %941, %958 : vector<8x128xi32>
    %960 = arith.select %959, %523, %932 : vector<8x128xi1>, vector<8x128xf32>
    %961 = arith.select %959, %524, %933 : vector<8x128xi1>, vector<8x128xf32>
    %c5_i32_160 = arith.constant 5 : i32
    %962 = vector.broadcast %c5_i32_160 : i32 to vector<8x128xi32>
    %963 = arith.cmpi eq, %941, %962 : vector<8x128xi32>
    %964 = arith.select %963, %523, %936 : vector<8x128xi1>, vector<8x128xf32>
    %965 = arith.select %963, %524, %937 : vector<8x128xi1>, vector<8x128xf32>
    %966 = arith.extui %910 : vector<8x128xi1> to vector<8x128xi32>
    %967 = arith.addi %877, %966 : vector<8x128xi32>
    %968 = arith.extui %909 : vector<8x128xi1> to vector<8x128xi32>
    %969 = arith.addi %967, %968 : vector<8x128xi32>
    %970 = arith.subf %188, %187 : vector<8x128xf32>
    %971 = arith.subf %192, %191 : vector<8x128xf32>
    %cst_161 = arith.constant 0.000000e+00 : f32
    %972 = vector.broadcast %cst_161 : f32 to vector<8x128xf32>
    %973 = arith.subf %972, %970 : vector<8x128xf32>
    %cst_162 = arith.constant 0.000000e+00 : f32
    %974 = vector.broadcast %cst_162 : f32 to vector<8x128xf32>
    %975 = arith.subf %974, %971 : vector<8x128xf32>
    %976 = arith.mulf %187, %192 : vector<8x128xf32>
    %977 = arith.mulf %191, %188 : vector<8x128xf32>
    %978 = arith.subf %976, %977 : vector<8x128xf32>
    %c0_i32_163 = arith.constant 0 : i32
    %979 = vector.broadcast %c0_i32_163 : i32 to vector<8x128xi32>
    %c1_i32_164 = arith.constant 1 : i32
    %980 = vector.broadcast %c1_i32_164 : i32 to vector<8x128xi32>
    %981 = arith.subi %969, %980 : vector<8x128xi32>
    %cst_165 = arith.constant 0.000000e+00 : f32
    %982 = vector.broadcast %cst_165 : f32 to vector<8x128xf32>
    %cst_166 = arith.constant 0.000000e+00 : f32
    %983 = vector.broadcast %cst_166 : f32 to vector<8x128xf32>
    %c0_i32_167 = arith.constant 0 : i32
    %984 = vector.broadcast %c0_i32_167 : i32 to vector<8x128xi32>
    %985 = arith.cmpi eq, %981, %984 : vector<8x128xi32>
    %986 = arith.select %985, %944, %982 : vector<8x128xi1>, vector<8x128xf32>
    %987 = arith.select %985, %945, %983 : vector<8x128xi1>, vector<8x128xf32>
    %c1_i32_168 = arith.constant 1 : i32
    %988 = vector.broadcast %c1_i32_168 : i32 to vector<8x128xi32>
    %989 = arith.cmpi eq, %981, %988 : vector<8x128xi32>
    %990 = arith.select %989, %948, %986 : vector<8x128xi1>, vector<8x128xf32>
    %991 = arith.select %989, %949, %987 : vector<8x128xi1>, vector<8x128xf32>
    %c2_i32_169 = arith.constant 2 : i32
    %992 = vector.broadcast %c2_i32_169 : i32 to vector<8x128xi32>
    %993 = arith.cmpi eq, %981, %992 : vector<8x128xi32>
    %994 = arith.select %993, %952, %990 : vector<8x128xi1>, vector<8x128xf32>
    %995 = arith.select %993, %953, %991 : vector<8x128xi1>, vector<8x128xf32>
    %c3_i32_170 = arith.constant 3 : i32
    %996 = vector.broadcast %c3_i32_170 : i32 to vector<8x128xi32>
    %997 = arith.cmpi eq, %981, %996 : vector<8x128xi32>
    %998 = arith.select %997, %956, %994 : vector<8x128xi1>, vector<8x128xf32>
    %999 = arith.select %997, %957, %995 : vector<8x128xi1>, vector<8x128xf32>
    %c4_i32_171 = arith.constant 4 : i32
    %1000 = vector.broadcast %c4_i32_171 : i32 to vector<8x128xi32>
    %1001 = arith.cmpi eq, %981, %1000 : vector<8x128xi32>
    %1002 = arith.select %1001, %960, %998 : vector<8x128xi1>, vector<8x128xf32>
    %1003 = arith.select %1001, %961, %999 : vector<8x128xi1>, vector<8x128xf32>
    %c5_i32_172 = arith.constant 5 : i32
    %1004 = vector.broadcast %c5_i32_172 : i32 to vector<8x128xi32>
    %1005 = arith.cmpi eq, %981, %1004 : vector<8x128xi32>
    %1006 = arith.select %1005, %964, %1002 : vector<8x128xi1>, vector<8x128xf32>
    %1007 = arith.select %1005, %965, %1003 : vector<8x128xi1>, vector<8x128xf32>
    %1008 = arith.subf %1007, %191 : vector<8x128xf32>
    %1009 = arith.mulf %970, %1008 : vector<8x128xf32>
    %1010 = arith.subf %1006, %187 : vector<8x128xf32>
    %1011 = arith.mulf %971, %1010 : vector<8x128xf32>
    %1012 = arith.subf %1009, %1011 : vector<8x128xf32>
    %cst_173 = arith.constant 0.000000e+00 : f32
    %1013 = vector.broadcast %cst_173 : f32 to vector<8x128xf32>
    %1014 = arith.cmpf ole, %1012, %1013 : vector<8x128xf32>
    %1015 = arith.subf %945, %191 : vector<8x128xf32>
    %1016 = arith.mulf %970, %1015 : vector<8x128xf32>
    %1017 = arith.subf %944, %187 : vector<8x128xf32>
    %1018 = arith.mulf %971, %1017 : vector<8x128xf32>
    %1019 = arith.subf %1016, %1018 : vector<8x128xf32>
    %cst_174 = arith.constant 0.000000e+00 : f32
    %1020 = vector.broadcast %cst_174 : f32 to vector<8x128xf32>
    %1021 = arith.cmpf ole, %1019, %1020 : vector<8x128xf32>
    %1022 = arith.subf %1006, %944 : vector<8x128xf32>
    %1023 = arith.subf %1007, %945 : vector<8x128xf32>
    %1024 = arith.mulf %1006, %945 : vector<8x128xf32>
    %1025 = arith.mulf %1007, %944 : vector<8x128xf32>
    %1026 = arith.subf %1024, %1025 : vector<8x128xf32>
    %1027 = arith.mulf %1022, %975 : vector<8x128xf32>
    %1028 = arith.mulf %1023, %973 : vector<8x128xf32>
    %1029 = arith.subf %1027, %1028 : vector<8x128xf32>
    %1030 = tpu.reciprocal %1029 {approx = true} : vector<8x128xf32> -> vector<8x128xf32>
    %1031 = arith.mulf %1029, %1030 : vector<8x128xf32>
    %cst_175 = arith.constant 2.000000e+00 : f32
    %1032 = vector.broadcast %cst_175 : f32 to vector<8x128xf32>
    %1033 = arith.subf %1032, %1031 : vector<8x128xf32>
    %1034 = arith.mulf %1030, %1033 : vector<8x128xf32>
    %1035 = arith.mulf %1026, %973 : vector<8x128xf32>
    %1036 = arith.mulf %1022, %978 : vector<8x128xf32>
    %1037 = arith.subf %1035, %1036 : vector<8x128xf32>
    %1038 = arith.mulf %1037, %1034 : vector<8x128xf32>
    %1039 = arith.mulf %1026, %975 : vector<8x128xf32>
    %1040 = arith.mulf %1023, %978 : vector<8x128xf32>
    %1041 = arith.subf %1039, %1040 : vector<8x128xf32>
    %1042 = arith.mulf %1041, %1034 : vector<8x128xf32>
    %1043 = arith.xori %1021, %1014 : vector<8x128xi1>
    %c0_i32_176 = arith.constant 0 : i32
    %1044 = vector.broadcast %c0_i32_176 : i32 to vector<8x128xi32>
    %1045 = arith.cmpi sgt, %969, %1044 : vector<8x128xi32>
    %1046 = arith.andi %1045, %1021 : vector<8x128xi1>
    %1047 = arith.andi %1045, %1043 : vector<8x128xi1>
    %1048 = arith.andi %1047, %1021 : vector<8x128xi1>
    %c8_i32_177 = arith.constant 8 : i32
    %1049 = vector.broadcast %c8_i32_177 : i32 to vector<8x128xi32>
    %1050 = arith.select %1047, %979, %1049 : vector<8x128xi1>, vector<8x128xi32>
    %c0_i32_178 = arith.constant 0 : i32
    %1051 = vector.broadcast %c0_i32_178 : i32 to vector<8x128xi32>
    %1052 = arith.cmpi eq, %1050, %1051 : vector<8x128xi32>
    %1053 = arith.select %1052, %1038, %52 : vector<8x128xi1>, vector<8x128xf32>
    %1054 = arith.select %1052, %1042, %52 : vector<8x128xi1>, vector<8x128xf32>
    %1055 = arith.extui %1048 : vector<8x128xi1> to vector<8x128xi32>
    %1056 = arith.addi %979, %1055 : vector<8x128xi32>
    %c8_i32_179 = arith.constant 8 : i32
    %1057 = vector.broadcast %c8_i32_179 : i32 to vector<8x128xi32>
    %1058 = arith.select %1046, %1056, %1057 : vector<8x128xi1>, vector<8x128xi32>
    %c0_i32_180 = arith.constant 0 : i32
    %1059 = vector.broadcast %c0_i32_180 : i32 to vector<8x128xi32>
    %1060 = arith.cmpi eq, %1058, %1059 : vector<8x128xi32>
    %1061 = arith.select %1060, %944, %1053 : vector<8x128xi1>, vector<8x128xf32>
    %1062 = arith.select %1060, %945, %1054 : vector<8x128xi1>, vector<8x128xf32>
    %c1_i32_181 = arith.constant 1 : i32
    %1063 = vector.broadcast %c1_i32_181 : i32 to vector<8x128xi32>
    %1064 = arith.cmpi eq, %1058, %1063 : vector<8x128xi32>
    %1065 = arith.select %1064, %944, %52 : vector<8x128xi1>, vector<8x128xf32>
    %1066 = arith.select %1064, %945, %52 : vector<8x128xi1>, vector<8x128xf32>
    %1067 = arith.extui %1047 : vector<8x128xi1> to vector<8x128xi32>
    %1068 = arith.addi %979, %1067 : vector<8x128xi32>
    %1069 = arith.extui %1046 : vector<8x128xi1> to vector<8x128xi32>
    %1070 = arith.addi %1068, %1069 : vector<8x128xi32>
    %1071 = arith.subf %949, %191 : vector<8x128xf32>
    %1072 = arith.mulf %970, %1071 : vector<8x128xf32>
    %1073 = arith.subf %948, %187 : vector<8x128xf32>
    %1074 = arith.mulf %971, %1073 : vector<8x128xf32>
    %1075 = arith.subf %1072, %1074 : vector<8x128xf32>
    %cst_182 = arith.constant 0.000000e+00 : f32
    %1076 = vector.broadcast %cst_182 : f32 to vector<8x128xf32>
    %1077 = arith.cmpf ole, %1075, %1076 : vector<8x128xf32>
    %1078 = arith.subf %944, %948 : vector<8x128xf32>
    %1079 = arith.subf %945, %949 : vector<8x128xf32>
    %1080 = arith.mulf %944, %949 : vector<8x128xf32>
    %1081 = arith.mulf %945, %948 : vector<8x128xf32>
    %1082 = arith.subf %1080, %1081 : vector<8x128xf32>
    %1083 = arith.mulf %1078, %975 : vector<8x128xf32>
    %1084 = arith.mulf %1079, %973 : vector<8x128xf32>
    %1085 = arith.subf %1083, %1084 : vector<8x128xf32>
    %1086 = tpu.reciprocal %1085 {approx = true} : vector<8x128xf32> -> vector<8x128xf32>
    %1087 = arith.mulf %1085, %1086 : vector<8x128xf32>
    %cst_183 = arith.constant 2.000000e+00 : f32
    %1088 = vector.broadcast %cst_183 : f32 to vector<8x128xf32>
    %1089 = arith.subf %1088, %1087 : vector<8x128xf32>
    %1090 = arith.mulf %1086, %1089 : vector<8x128xf32>
    %1091 = arith.mulf %1082, %973 : vector<8x128xf32>
    %1092 = arith.mulf %1078, %978 : vector<8x128xf32>
    %1093 = arith.subf %1091, %1092 : vector<8x128xf32>
    %1094 = arith.mulf %1093, %1090 : vector<8x128xf32>
    %1095 = arith.mulf %1082, %975 : vector<8x128xf32>
    %1096 = arith.mulf %1079, %978 : vector<8x128xf32>
    %1097 = arith.subf %1095, %1096 : vector<8x128xf32>
    %1098 = arith.mulf %1097, %1090 : vector<8x128xf32>
    %1099 = arith.xori %1077, %1021 : vector<8x128xi1>
    %c1_i32_184 = arith.constant 1 : i32
    %1100 = vector.broadcast %c1_i32_184 : i32 to vector<8x128xi32>
    %1101 = arith.cmpi sgt, %969, %1100 : vector<8x128xi32>
    %1102 = arith.andi %1101, %1077 : vector<8x128xi1>
    %1103 = arith.andi %1101, %1099 : vector<8x128xi1>
    %1104 = arith.andi %1103, %1077 : vector<8x128xi1>
    %c8_i32_185 = arith.constant 8 : i32
    %1105 = vector.broadcast %c8_i32_185 : i32 to vector<8x128xi32>
    %1106 = arith.select %1103, %1070, %1105 : vector<8x128xi1>, vector<8x128xi32>
    %c0_i32_186 = arith.constant 0 : i32
    %1107 = vector.broadcast %c0_i32_186 : i32 to vector<8x128xi32>
    %1108 = arith.cmpi eq, %1106, %1107 : vector<8x128xi32>
    %1109 = arith.select %1108, %1094, %1061 : vector<8x128xi1>, vector<8x128xf32>
    %1110 = arith.select %1108, %1098, %1062 : vector<8x128xi1>, vector<8x128xf32>
    %c1_i32_187 = arith.constant 1 : i32
    %1111 = vector.broadcast %c1_i32_187 : i32 to vector<8x128xi32>
    %1112 = arith.cmpi eq, %1106, %1111 : vector<8x128xi32>
    %1113 = arith.select %1112, %1094, %1065 : vector<8x128xi1>, vector<8x128xf32>
    %1114 = arith.select %1112, %1098, %1066 : vector<8x128xi1>, vector<8x128xf32>
    %c2_i32_188 = arith.constant 2 : i32
    %1115 = vector.broadcast %c2_i32_188 : i32 to vector<8x128xi32>
    %1116 = arith.cmpi eq, %1106, %1115 : vector<8x128xi32>
    %1117 = arith.select %1116, %1094, %52 : vector<8x128xi1>, vector<8x128xf32>
    %1118 = arith.select %1116, %1098, %52 : vector<8x128xi1>, vector<8x128xf32>
    %1119 = arith.extui %1104 : vector<8x128xi1> to vector<8x128xi32>
    %1120 = arith.addi %1070, %1119 : vector<8x128xi32>
    %c8_i32_189 = arith.constant 8 : i32
    %1121 = vector.broadcast %c8_i32_189 : i32 to vector<8x128xi32>
    %1122 = arith.select %1102, %1120, %1121 : vector<8x128xi1>, vector<8x128xi32>
    %c0_i32_190 = arith.constant 0 : i32
    %1123 = vector.broadcast %c0_i32_190 : i32 to vector<8x128xi32>
    %1124 = arith.cmpi eq, %1122, %1123 : vector<8x128xi32>
    %1125 = arith.select %1124, %948, %1109 : vector<8x128xi1>, vector<8x128xf32>
    %1126 = arith.select %1124, %949, %1110 : vector<8x128xi1>, vector<8x128xf32>
    %c1_i32_191 = arith.constant 1 : i32
    %1127 = vector.broadcast %c1_i32_191 : i32 to vector<8x128xi32>
    %1128 = arith.cmpi eq, %1122, %1127 : vector<8x128xi32>
    %1129 = arith.select %1128, %948, %1113 : vector<8x128xi1>, vector<8x128xf32>
    %1130 = arith.select %1128, %949, %1114 : vector<8x128xi1>, vector<8x128xf32>
    %c2_i32_192 = arith.constant 2 : i32
    %1131 = vector.broadcast %c2_i32_192 : i32 to vector<8x128xi32>
    %1132 = arith.cmpi eq, %1122, %1131 : vector<8x128xi32>
    %1133 = arith.select %1132, %948, %1117 : vector<8x128xi1>, vector<8x128xf32>
    %1134 = arith.select %1132, %949, %1118 : vector<8x128xi1>, vector<8x128xf32>
    %c3_i32_193 = arith.constant 3 : i32
    %1135 = vector.broadcast %c3_i32_193 : i32 to vector<8x128xi32>
    %1136 = arith.cmpi eq, %1122, %1135 : vector<8x128xi32>
    %1137 = arith.select %1136, %948, %52 : vector<8x128xi1>, vector<8x128xf32>
    %1138 = arith.select %1136, %949, %52 : vector<8x128xi1>, vector<8x128xf32>
    %1139 = arith.extui %1103 : vector<8x128xi1> to vector<8x128xi32>
    %1140 = arith.addi %1070, %1139 : vector<8x128xi32>
    %1141 = arith.extui %1102 : vector<8x128xi1> to vector<8x128xi32>
    %1142 = arith.addi %1140, %1141 : vector<8x128xi32>
    %1143 = arith.subf %953, %191 : vector<8x128xf32>
    %1144 = arith.mulf %970, %1143 : vector<8x128xf32>
    %1145 = arith.subf %952, %187 : vector<8x128xf32>
    %1146 = arith.mulf %971, %1145 : vector<8x128xf32>
    %1147 = arith.subf %1144, %1146 : vector<8x128xf32>
    %cst_194 = arith.constant 0.000000e+00 : f32
    %1148 = vector.broadcast %cst_194 : f32 to vector<8x128xf32>
    %1149 = arith.cmpf ole, %1147, %1148 : vector<8x128xf32>
    %1150 = arith.subf %948, %952 : vector<8x128xf32>
    %1151 = arith.subf %949, %953 : vector<8x128xf32>
    %1152 = arith.mulf %948, %953 : vector<8x128xf32>
    %1153 = arith.mulf %949, %952 : vector<8x128xf32>
    %1154 = arith.subf %1152, %1153 : vector<8x128xf32>
    %1155 = arith.mulf %1150, %975 : vector<8x128xf32>
    %1156 = arith.mulf %1151, %973 : vector<8x128xf32>
    %1157 = arith.subf %1155, %1156 : vector<8x128xf32>
    %1158 = tpu.reciprocal %1157 {approx = true} : vector<8x128xf32> -> vector<8x128xf32>
    %1159 = arith.mulf %1157, %1158 : vector<8x128xf32>
    %cst_195 = arith.constant 2.000000e+00 : f32
    %1160 = vector.broadcast %cst_195 : f32 to vector<8x128xf32>
    %1161 = arith.subf %1160, %1159 : vector<8x128xf32>
    %1162 = arith.mulf %1158, %1161 : vector<8x128xf32>
    %1163 = arith.mulf %1154, %973 : vector<8x128xf32>
    %1164 = arith.mulf %1150, %978 : vector<8x128xf32>
    %1165 = arith.subf %1163, %1164 : vector<8x128xf32>
    %1166 = arith.mulf %1165, %1162 : vector<8x128xf32>
    %1167 = arith.mulf %1154, %975 : vector<8x128xf32>
    %1168 = arith.mulf %1151, %978 : vector<8x128xf32>
    %1169 = arith.subf %1167, %1168 : vector<8x128xf32>
    %1170 = arith.mulf %1169, %1162 : vector<8x128xf32>
    %1171 = arith.xori %1149, %1077 : vector<8x128xi1>
    %c2_i32_196 = arith.constant 2 : i32
    %1172 = vector.broadcast %c2_i32_196 : i32 to vector<8x128xi32>
    %1173 = arith.cmpi sgt, %969, %1172 : vector<8x128xi32>
    %1174 = arith.andi %1173, %1149 : vector<8x128xi1>
    %1175 = arith.andi %1173, %1171 : vector<8x128xi1>
    %1176 = arith.andi %1175, %1149 : vector<8x128xi1>
    %c8_i32_197 = arith.constant 8 : i32
    %1177 = vector.broadcast %c8_i32_197 : i32 to vector<8x128xi32>
    %1178 = arith.select %1175, %1142, %1177 : vector<8x128xi1>, vector<8x128xi32>
    %c0_i32_198 = arith.constant 0 : i32
    %1179 = vector.broadcast %c0_i32_198 : i32 to vector<8x128xi32>
    %1180 = arith.cmpi eq, %1178, %1179 : vector<8x128xi32>
    %1181 = arith.select %1180, %1166, %1125 : vector<8x128xi1>, vector<8x128xf32>
    %1182 = arith.select %1180, %1170, %1126 : vector<8x128xi1>, vector<8x128xf32>
    %c1_i32_199 = arith.constant 1 : i32
    %1183 = vector.broadcast %c1_i32_199 : i32 to vector<8x128xi32>
    %1184 = arith.cmpi eq, %1178, %1183 : vector<8x128xi32>
    %1185 = arith.select %1184, %1166, %1129 : vector<8x128xi1>, vector<8x128xf32>
    %1186 = arith.select %1184, %1170, %1130 : vector<8x128xi1>, vector<8x128xf32>
    %c2_i32_200 = arith.constant 2 : i32
    %1187 = vector.broadcast %c2_i32_200 : i32 to vector<8x128xi32>
    %1188 = arith.cmpi eq, %1178, %1187 : vector<8x128xi32>
    %1189 = arith.select %1188, %1166, %1133 : vector<8x128xi1>, vector<8x128xf32>
    %1190 = arith.select %1188, %1170, %1134 : vector<8x128xi1>, vector<8x128xf32>
    %c3_i32_201 = arith.constant 3 : i32
    %1191 = vector.broadcast %c3_i32_201 : i32 to vector<8x128xi32>
    %1192 = arith.cmpi eq, %1178, %1191 : vector<8x128xi32>
    %1193 = arith.select %1192, %1166, %1137 : vector<8x128xi1>, vector<8x128xf32>
    %1194 = arith.select %1192, %1170, %1138 : vector<8x128xi1>, vector<8x128xf32>
    %c4_i32_202 = arith.constant 4 : i32
    %1195 = vector.broadcast %c4_i32_202 : i32 to vector<8x128xi32>
    %1196 = arith.cmpi eq, %1178, %1195 : vector<8x128xi32>
    %1197 = arith.select %1196, %1166, %52 : vector<8x128xi1>, vector<8x128xf32>
    %1198 = arith.select %1196, %1170, %52 : vector<8x128xi1>, vector<8x128xf32>
    %1199 = arith.extui %1176 : vector<8x128xi1> to vector<8x128xi32>
    %1200 = arith.addi %1142, %1199 : vector<8x128xi32>
    %c8_i32_203 = arith.constant 8 : i32
    %1201 = vector.broadcast %c8_i32_203 : i32 to vector<8x128xi32>
    %1202 = arith.select %1174, %1200, %1201 : vector<8x128xi1>, vector<8x128xi32>
    %c0_i32_204 = arith.constant 0 : i32
    %1203 = vector.broadcast %c0_i32_204 : i32 to vector<8x128xi32>
    %1204 = arith.cmpi eq, %1202, %1203 : vector<8x128xi32>
    %1205 = arith.select %1204, %952, %1181 : vector<8x128xi1>, vector<8x128xf32>
    %1206 = arith.select %1204, %953, %1182 : vector<8x128xi1>, vector<8x128xf32>
    %c1_i32_205 = arith.constant 1 : i32
    %1207 = vector.broadcast %c1_i32_205 : i32 to vector<8x128xi32>
    %1208 = arith.cmpi eq, %1202, %1207 : vector<8x128xi32>
    %1209 = arith.select %1208, %952, %1185 : vector<8x128xi1>, vector<8x128xf32>
    %1210 = arith.select %1208, %953, %1186 : vector<8x128xi1>, vector<8x128xf32>
    %c2_i32_206 = arith.constant 2 : i32
    %1211 = vector.broadcast %c2_i32_206 : i32 to vector<8x128xi32>
    %1212 = arith.cmpi eq, %1202, %1211 : vector<8x128xi32>
    %1213 = arith.select %1212, %952, %1189 : vector<8x128xi1>, vector<8x128xf32>
    %1214 = arith.select %1212, %953, %1190 : vector<8x128xi1>, vector<8x128xf32>
    %c3_i32_207 = arith.constant 3 : i32
    %1215 = vector.broadcast %c3_i32_207 : i32 to vector<8x128xi32>
    %1216 = arith.cmpi eq, %1202, %1215 : vector<8x128xi32>
    %1217 = arith.select %1216, %952, %1193 : vector<8x128xi1>, vector<8x128xf32>
    %1218 = arith.select %1216, %953, %1194 : vector<8x128xi1>, vector<8x128xf32>
    %c4_i32_208 = arith.constant 4 : i32
    %1219 = vector.broadcast %c4_i32_208 : i32 to vector<8x128xi32>
    %1220 = arith.cmpi eq, %1202, %1219 : vector<8x128xi32>
    %1221 = arith.select %1220, %952, %1197 : vector<8x128xi1>, vector<8x128xf32>
    %1222 = arith.select %1220, %953, %1198 : vector<8x128xi1>, vector<8x128xf32>
    %c5_i32_209 = arith.constant 5 : i32
    %1223 = vector.broadcast %c5_i32_209 : i32 to vector<8x128xi32>
    %1224 = arith.cmpi eq, %1202, %1223 : vector<8x128xi32>
    %1225 = arith.select %1224, %952, %52 : vector<8x128xi1>, vector<8x128xf32>
    %1226 = arith.select %1224, %953, %52 : vector<8x128xi1>, vector<8x128xf32>
    %1227 = arith.extui %1175 : vector<8x128xi1> to vector<8x128xi32>
    %1228 = arith.addi %1142, %1227 : vector<8x128xi32>
    %1229 = arith.extui %1174 : vector<8x128xi1> to vector<8x128xi32>
    %1230 = arith.addi %1228, %1229 : vector<8x128xi32>
    %1231 = arith.subf %957, %191 : vector<8x128xf32>
    %1232 = arith.mulf %970, %1231 : vector<8x128xf32>
    %1233 = arith.subf %956, %187 : vector<8x128xf32>
    %1234 = arith.mulf %971, %1233 : vector<8x128xf32>
    %1235 = arith.subf %1232, %1234 : vector<8x128xf32>
    %cst_210 = arith.constant 0.000000e+00 : f32
    %1236 = vector.broadcast %cst_210 : f32 to vector<8x128xf32>
    %1237 = arith.cmpf ole, %1235, %1236 : vector<8x128xf32>
    %1238 = arith.subf %952, %956 : vector<8x128xf32>
    %1239 = arith.subf %953, %957 : vector<8x128xf32>
    %1240 = arith.mulf %952, %957 : vector<8x128xf32>
    %1241 = arith.mulf %953, %956 : vector<8x128xf32>
    %1242 = arith.subf %1240, %1241 : vector<8x128xf32>
    %1243 = arith.mulf %1238, %975 : vector<8x128xf32>
    %1244 = arith.mulf %1239, %973 : vector<8x128xf32>
    %1245 = arith.subf %1243, %1244 : vector<8x128xf32>
    %1246 = tpu.reciprocal %1245 {approx = true} : vector<8x128xf32> -> vector<8x128xf32>
    %1247 = arith.mulf %1245, %1246 : vector<8x128xf32>
    %cst_211 = arith.constant 2.000000e+00 : f32
    %1248 = vector.broadcast %cst_211 : f32 to vector<8x128xf32>
    %1249 = arith.subf %1248, %1247 : vector<8x128xf32>
    %1250 = arith.mulf %1246, %1249 : vector<8x128xf32>
    %1251 = arith.mulf %1242, %973 : vector<8x128xf32>
    %1252 = arith.mulf %1238, %978 : vector<8x128xf32>
    %1253 = arith.subf %1251, %1252 : vector<8x128xf32>
    %1254 = arith.mulf %1253, %1250 : vector<8x128xf32>
    %1255 = arith.mulf %1242, %975 : vector<8x128xf32>
    %1256 = arith.mulf %1239, %978 : vector<8x128xf32>
    %1257 = arith.subf %1255, %1256 : vector<8x128xf32>
    %1258 = arith.mulf %1257, %1250 : vector<8x128xf32>
    %1259 = arith.xori %1237, %1149 : vector<8x128xi1>
    %c3_i32_212 = arith.constant 3 : i32
    %1260 = vector.broadcast %c3_i32_212 : i32 to vector<8x128xi32>
    %1261 = arith.cmpi sgt, %969, %1260 : vector<8x128xi32>
    %1262 = arith.andi %1261, %1237 : vector<8x128xi1>
    %1263 = arith.andi %1261, %1259 : vector<8x128xi1>
    %1264 = arith.andi %1263, %1237 : vector<8x128xi1>
    %c8_i32_213 = arith.constant 8 : i32
    %1265 = vector.broadcast %c8_i32_213 : i32 to vector<8x128xi32>
    %1266 = arith.select %1263, %1230, %1265 : vector<8x128xi1>, vector<8x128xi32>
    %c0_i32_214 = arith.constant 0 : i32
    %1267 = vector.broadcast %c0_i32_214 : i32 to vector<8x128xi32>
    %1268 = arith.cmpi eq, %1266, %1267 : vector<8x128xi32>
    %1269 = arith.select %1268, %1254, %1205 : vector<8x128xi1>, vector<8x128xf32>
    %1270 = arith.select %1268, %1258, %1206 : vector<8x128xi1>, vector<8x128xf32>
    %c1_i32_215 = arith.constant 1 : i32
    %1271 = vector.broadcast %c1_i32_215 : i32 to vector<8x128xi32>
    %1272 = arith.cmpi eq, %1266, %1271 : vector<8x128xi32>
    %1273 = arith.select %1272, %1254, %1209 : vector<8x128xi1>, vector<8x128xf32>
    %1274 = arith.select %1272, %1258, %1210 : vector<8x128xi1>, vector<8x128xf32>
    %c2_i32_216 = arith.constant 2 : i32
    %1275 = vector.broadcast %c2_i32_216 : i32 to vector<8x128xi32>
    %1276 = arith.cmpi eq, %1266, %1275 : vector<8x128xi32>
    %1277 = arith.select %1276, %1254, %1213 : vector<8x128xi1>, vector<8x128xf32>
    %1278 = arith.select %1276, %1258, %1214 : vector<8x128xi1>, vector<8x128xf32>
    %c3_i32_217 = arith.constant 3 : i32
    %1279 = vector.broadcast %c3_i32_217 : i32 to vector<8x128xi32>
    %1280 = arith.cmpi eq, %1266, %1279 : vector<8x128xi32>
    %1281 = arith.select %1280, %1254, %1217 : vector<8x128xi1>, vector<8x128xf32>
    %1282 = arith.select %1280, %1258, %1218 : vector<8x128xi1>, vector<8x128xf32>
    %c4_i32_218 = arith.constant 4 : i32
    %1283 = vector.broadcast %c4_i32_218 : i32 to vector<8x128xi32>
    %1284 = arith.cmpi eq, %1266, %1283 : vector<8x128xi32>
    %1285 = arith.select %1284, %1254, %1221 : vector<8x128xi1>, vector<8x128xf32>
    %1286 = arith.select %1284, %1258, %1222 : vector<8x128xi1>, vector<8x128xf32>
    %c5_i32_219 = arith.constant 5 : i32
    %1287 = vector.broadcast %c5_i32_219 : i32 to vector<8x128xi32>
    %1288 = arith.cmpi eq, %1266, %1287 : vector<8x128xi32>
    %1289 = arith.select %1288, %1254, %1225 : vector<8x128xi1>, vector<8x128xf32>
    %1290 = arith.select %1288, %1258, %1226 : vector<8x128xi1>, vector<8x128xf32>
    %c6_i32 = arith.constant 6 : i32
    %1291 = vector.broadcast %c6_i32 : i32 to vector<8x128xi32>
    %1292 = arith.cmpi eq, %1266, %1291 : vector<8x128xi32>
    %1293 = arith.select %1292, %1254, %52 : vector<8x128xi1>, vector<8x128xf32>
    %1294 = arith.select %1292, %1258, %52 : vector<8x128xi1>, vector<8x128xf32>
    %1295 = arith.extui %1264 : vector<8x128xi1> to vector<8x128xi32>
    %1296 = arith.addi %1230, %1295 : vector<8x128xi32>
    %c8_i32_220 = arith.constant 8 : i32
    %1297 = vector.broadcast %c8_i32_220 : i32 to vector<8x128xi32>
    %1298 = arith.select %1262, %1296, %1297 : vector<8x128xi1>, vector<8x128xi32>
    %c0_i32_221 = arith.constant 0 : i32
    %1299 = vector.broadcast %c0_i32_221 : i32 to vector<8x128xi32>
    %1300 = arith.cmpi eq, %1298, %1299 : vector<8x128xi32>
    %1301 = arith.select %1300, %956, %1269 : vector<8x128xi1>, vector<8x128xf32>
    %1302 = arith.select %1300, %957, %1270 : vector<8x128xi1>, vector<8x128xf32>
    %c1_i32_222 = arith.constant 1 : i32
    %1303 = vector.broadcast %c1_i32_222 : i32 to vector<8x128xi32>
    %1304 = arith.cmpi eq, %1298, %1303 : vector<8x128xi32>
    %1305 = arith.select %1304, %956, %1273 : vector<8x128xi1>, vector<8x128xf32>
    %1306 = arith.select %1304, %957, %1274 : vector<8x128xi1>, vector<8x128xf32>
    %c2_i32_223 = arith.constant 2 : i32
    %1307 = vector.broadcast %c2_i32_223 : i32 to vector<8x128xi32>
    %1308 = arith.cmpi eq, %1298, %1307 : vector<8x128xi32>
    %1309 = arith.select %1308, %956, %1277 : vector<8x128xi1>, vector<8x128xf32>
    %1310 = arith.select %1308, %957, %1278 : vector<8x128xi1>, vector<8x128xf32>
    %c3_i32_224 = arith.constant 3 : i32
    %1311 = vector.broadcast %c3_i32_224 : i32 to vector<8x128xi32>
    %1312 = arith.cmpi eq, %1298, %1311 : vector<8x128xi32>
    %1313 = arith.select %1312, %956, %1281 : vector<8x128xi1>, vector<8x128xf32>
    %1314 = arith.select %1312, %957, %1282 : vector<8x128xi1>, vector<8x128xf32>
    %c4_i32_225 = arith.constant 4 : i32
    %1315 = vector.broadcast %c4_i32_225 : i32 to vector<8x128xi32>
    %1316 = arith.cmpi eq, %1298, %1315 : vector<8x128xi32>
    %1317 = arith.select %1316, %956, %1285 : vector<8x128xi1>, vector<8x128xf32>
    %1318 = arith.select %1316, %957, %1286 : vector<8x128xi1>, vector<8x128xf32>
    %c5_i32_226 = arith.constant 5 : i32
    %1319 = vector.broadcast %c5_i32_226 : i32 to vector<8x128xi32>
    %1320 = arith.cmpi eq, %1298, %1319 : vector<8x128xi32>
    %1321 = arith.select %1320, %956, %1289 : vector<8x128xi1>, vector<8x128xf32>
    %1322 = arith.select %1320, %957, %1290 : vector<8x128xi1>, vector<8x128xf32>
    %c6_i32_227 = arith.constant 6 : i32
    %1323 = vector.broadcast %c6_i32_227 : i32 to vector<8x128xi32>
    %1324 = arith.cmpi eq, %1298, %1323 : vector<8x128xi32>
    %1325 = arith.select %1324, %956, %1293 : vector<8x128xi1>, vector<8x128xf32>
    %1326 = arith.select %1324, %957, %1294 : vector<8x128xi1>, vector<8x128xf32>
    %1327 = arith.extui %1263 : vector<8x128xi1> to vector<8x128xi32>
    %1328 = arith.addi %1230, %1327 : vector<8x128xi32>
    %1329 = arith.extui %1262 : vector<8x128xi1> to vector<8x128xi32>
    %1330 = arith.addi %1328, %1329 : vector<8x128xi32>
    %1331 = arith.subf %961, %191 : vector<8x128xf32>
    %1332 = arith.mulf %970, %1331 : vector<8x128xf32>
    %1333 = arith.subf %960, %187 : vector<8x128xf32>
    %1334 = arith.mulf %971, %1333 : vector<8x128xf32>
    %1335 = arith.subf %1332, %1334 : vector<8x128xf32>
    %cst_228 = arith.constant 0.000000e+00 : f32
    %1336 = vector.broadcast %cst_228 : f32 to vector<8x128xf32>
    %1337 = arith.cmpf ole, %1335, %1336 : vector<8x128xf32>
    %1338 = arith.subf %956, %960 : vector<8x128xf32>
    %1339 = arith.subf %957, %961 : vector<8x128xf32>
    %1340 = arith.mulf %956, %961 : vector<8x128xf32>
    %1341 = arith.mulf %957, %960 : vector<8x128xf32>
    %1342 = arith.subf %1340, %1341 : vector<8x128xf32>
    %1343 = arith.mulf %1338, %975 : vector<8x128xf32>
    %1344 = arith.mulf %1339, %973 : vector<8x128xf32>
    %1345 = arith.subf %1343, %1344 : vector<8x128xf32>
    %1346 = tpu.reciprocal %1345 {approx = true} : vector<8x128xf32> -> vector<8x128xf32>
    %1347 = arith.mulf %1345, %1346 : vector<8x128xf32>
    %cst_229 = arith.constant 2.000000e+00 : f32
    %1348 = vector.broadcast %cst_229 : f32 to vector<8x128xf32>
    %1349 = arith.subf %1348, %1347 : vector<8x128xf32>
    %1350 = arith.mulf %1346, %1349 : vector<8x128xf32>
    %1351 = arith.mulf %1342, %973 : vector<8x128xf32>
    %1352 = arith.mulf %1338, %978 : vector<8x128xf32>
    %1353 = arith.subf %1351, %1352 : vector<8x128xf32>
    %1354 = arith.mulf %1353, %1350 : vector<8x128xf32>
    %1355 = arith.mulf %1342, %975 : vector<8x128xf32>
    %1356 = arith.mulf %1339, %978 : vector<8x128xf32>
    %1357 = arith.subf %1355, %1356 : vector<8x128xf32>
    %1358 = arith.mulf %1357, %1350 : vector<8x128xf32>
    %1359 = arith.xori %1337, %1237 : vector<8x128xi1>
    %c4_i32_230 = arith.constant 4 : i32
    %1360 = vector.broadcast %c4_i32_230 : i32 to vector<8x128xi32>
    %1361 = arith.cmpi sgt, %969, %1360 : vector<8x128xi32>
    %1362 = arith.andi %1361, %1337 : vector<8x128xi1>
    %1363 = arith.andi %1361, %1359 : vector<8x128xi1>
    %1364 = arith.andi %1363, %1337 : vector<8x128xi1>
    %c8_i32_231 = arith.constant 8 : i32
    %1365 = vector.broadcast %c8_i32_231 : i32 to vector<8x128xi32>
    %1366 = arith.select %1363, %1330, %1365 : vector<8x128xi1>, vector<8x128xi32>
    %c0_i32_232 = arith.constant 0 : i32
    %1367 = vector.broadcast %c0_i32_232 : i32 to vector<8x128xi32>
    %1368 = arith.cmpi eq, %1366, %1367 : vector<8x128xi32>
    %1369 = arith.select %1368, %1354, %1301 : vector<8x128xi1>, vector<8x128xf32>
    %1370 = arith.select %1368, %1358, %1302 : vector<8x128xi1>, vector<8x128xf32>
    %c1_i32_233 = arith.constant 1 : i32
    %1371 = vector.broadcast %c1_i32_233 : i32 to vector<8x128xi32>
    %1372 = arith.cmpi eq, %1366, %1371 : vector<8x128xi32>
    %1373 = arith.select %1372, %1354, %1305 : vector<8x128xi1>, vector<8x128xf32>
    %1374 = arith.select %1372, %1358, %1306 : vector<8x128xi1>, vector<8x128xf32>
    %c2_i32_234 = arith.constant 2 : i32
    %1375 = vector.broadcast %c2_i32_234 : i32 to vector<8x128xi32>
    %1376 = arith.cmpi eq, %1366, %1375 : vector<8x128xi32>
    %1377 = arith.select %1376, %1354, %1309 : vector<8x128xi1>, vector<8x128xf32>
    %1378 = arith.select %1376, %1358, %1310 : vector<8x128xi1>, vector<8x128xf32>
    %c3_i32_235 = arith.constant 3 : i32
    %1379 = vector.broadcast %c3_i32_235 : i32 to vector<8x128xi32>
    %1380 = arith.cmpi eq, %1366, %1379 : vector<8x128xi32>
    %1381 = arith.select %1380, %1354, %1313 : vector<8x128xi1>, vector<8x128xf32>
    %1382 = arith.select %1380, %1358, %1314 : vector<8x128xi1>, vector<8x128xf32>
    %c4_i32_236 = arith.constant 4 : i32
    %1383 = vector.broadcast %c4_i32_236 : i32 to vector<8x128xi32>
    %1384 = arith.cmpi eq, %1366, %1383 : vector<8x128xi32>
    %1385 = arith.select %1384, %1354, %1317 : vector<8x128xi1>, vector<8x128xf32>
    %1386 = arith.select %1384, %1358, %1318 : vector<8x128xi1>, vector<8x128xf32>
    %c5_i32_237 = arith.constant 5 : i32
    %1387 = vector.broadcast %c5_i32_237 : i32 to vector<8x128xi32>
    %1388 = arith.cmpi eq, %1366, %1387 : vector<8x128xi32>
    %1389 = arith.select %1388, %1354, %1321 : vector<8x128xi1>, vector<8x128xf32>
    %1390 = arith.select %1388, %1358, %1322 : vector<8x128xi1>, vector<8x128xf32>
    %c6_i32_238 = arith.constant 6 : i32
    %1391 = vector.broadcast %c6_i32_238 : i32 to vector<8x128xi32>
    %1392 = arith.cmpi eq, %1366, %1391 : vector<8x128xi32>
    %1393 = arith.select %1392, %1354, %1325 : vector<8x128xi1>, vector<8x128xf32>
    %1394 = arith.select %1392, %1358, %1326 : vector<8x128xi1>, vector<8x128xf32>
    %1395 = arith.extui %1364 : vector<8x128xi1> to vector<8x128xi32>
    %1396 = arith.addi %1330, %1395 : vector<8x128xi32>
    %c8_i32_239 = arith.constant 8 : i32
    %1397 = vector.broadcast %c8_i32_239 : i32 to vector<8x128xi32>
    %1398 = arith.select %1362, %1396, %1397 : vector<8x128xi1>, vector<8x128xi32>
    %c0_i32_240 = arith.constant 0 : i32
    %1399 = vector.broadcast %c0_i32_240 : i32 to vector<8x128xi32>
    %1400 = arith.cmpi eq, %1398, %1399 : vector<8x128xi32>
    %1401 = arith.select %1400, %960, %1369 : vector<8x128xi1>, vector<8x128xf32>
    %1402 = arith.select %1400, %961, %1370 : vector<8x128xi1>, vector<8x128xf32>
    %c1_i32_241 = arith.constant 1 : i32
    %1403 = vector.broadcast %c1_i32_241 : i32 to vector<8x128xi32>
    %1404 = arith.cmpi eq, %1398, %1403 : vector<8x128xi32>
    %1405 = arith.select %1404, %960, %1373 : vector<8x128xi1>, vector<8x128xf32>
    %1406 = arith.select %1404, %961, %1374 : vector<8x128xi1>, vector<8x128xf32>
    %c2_i32_242 = arith.constant 2 : i32
    %1407 = vector.broadcast %c2_i32_242 : i32 to vector<8x128xi32>
    %1408 = arith.cmpi eq, %1398, %1407 : vector<8x128xi32>
    %1409 = arith.select %1408, %960, %1377 : vector<8x128xi1>, vector<8x128xf32>
    %1410 = arith.select %1408, %961, %1378 : vector<8x128xi1>, vector<8x128xf32>
    %c3_i32_243 = arith.constant 3 : i32
    %1411 = vector.broadcast %c3_i32_243 : i32 to vector<8x128xi32>
    %1412 = arith.cmpi eq, %1398, %1411 : vector<8x128xi32>
    %1413 = arith.select %1412, %960, %1381 : vector<8x128xi1>, vector<8x128xf32>
    %1414 = arith.select %1412, %961, %1382 : vector<8x128xi1>, vector<8x128xf32>
    %c4_i32_244 = arith.constant 4 : i32
    %1415 = vector.broadcast %c4_i32_244 : i32 to vector<8x128xi32>
    %1416 = arith.cmpi eq, %1398, %1415 : vector<8x128xi32>
    %1417 = arith.select %1416, %960, %1385 : vector<8x128xi1>, vector<8x128xf32>
    %1418 = arith.select %1416, %961, %1386 : vector<8x128xi1>, vector<8x128xf32>
    %c5_i32_245 = arith.constant 5 : i32
    %1419 = vector.broadcast %c5_i32_245 : i32 to vector<8x128xi32>
    %1420 = arith.cmpi eq, %1398, %1419 : vector<8x128xi32>
    %1421 = arith.select %1420, %960, %1389 : vector<8x128xi1>, vector<8x128xf32>
    %1422 = arith.select %1420, %961, %1390 : vector<8x128xi1>, vector<8x128xf32>
    %c6_i32_246 = arith.constant 6 : i32
    %1423 = vector.broadcast %c6_i32_246 : i32 to vector<8x128xi32>
    %1424 = arith.cmpi eq, %1398, %1423 : vector<8x128xi32>
    %1425 = arith.select %1424, %960, %1393 : vector<8x128xi1>, vector<8x128xf32>
    %1426 = arith.select %1424, %961, %1394 : vector<8x128xi1>, vector<8x128xf32>
    %1427 = arith.extui %1363 : vector<8x128xi1> to vector<8x128xi32>
    %1428 = arith.addi %1330, %1427 : vector<8x128xi32>
    %1429 = arith.extui %1362 : vector<8x128xi1> to vector<8x128xi32>
    %1430 = arith.addi %1428, %1429 : vector<8x128xi32>
    %1431 = arith.subf %965, %191 : vector<8x128xf32>
    %1432 = arith.mulf %970, %1431 : vector<8x128xf32>
    %1433 = arith.subf %964, %187 : vector<8x128xf32>
    %1434 = arith.mulf %971, %1433 : vector<8x128xf32>
    %1435 = arith.subf %1432, %1434 : vector<8x128xf32>
    %cst_247 = arith.constant 0.000000e+00 : f32
    %1436 = vector.broadcast %cst_247 : f32 to vector<8x128xf32>
    %1437 = arith.cmpf ole, %1435, %1436 : vector<8x128xf32>
    %1438 = arith.subf %960, %964 : vector<8x128xf32>
    %1439 = arith.subf %961, %965 : vector<8x128xf32>
    %1440 = arith.mulf %960, %965 : vector<8x128xf32>
    %1441 = arith.mulf %961, %964 : vector<8x128xf32>
    %1442 = arith.subf %1440, %1441 : vector<8x128xf32>
    %1443 = arith.mulf %1438, %975 : vector<8x128xf32>
    %1444 = arith.mulf %1439, %973 : vector<8x128xf32>
    %1445 = arith.subf %1443, %1444 : vector<8x128xf32>
    %1446 = tpu.reciprocal %1445 {approx = true} : vector<8x128xf32> -> vector<8x128xf32>
    %1447 = arith.mulf %1445, %1446 : vector<8x128xf32>
    %cst_248 = arith.constant 2.000000e+00 : f32
    %1448 = vector.broadcast %cst_248 : f32 to vector<8x128xf32>
    %1449 = arith.subf %1448, %1447 : vector<8x128xf32>
    %1450 = arith.mulf %1446, %1449 : vector<8x128xf32>
    %1451 = arith.mulf %1442, %973 : vector<8x128xf32>
    %1452 = arith.mulf %1438, %978 : vector<8x128xf32>
    %1453 = arith.subf %1451, %1452 : vector<8x128xf32>
    %1454 = arith.mulf %1453, %1450 : vector<8x128xf32>
    %1455 = arith.mulf %1442, %975 : vector<8x128xf32>
    %1456 = arith.mulf %1439, %978 : vector<8x128xf32>
    %1457 = arith.subf %1455, %1456 : vector<8x128xf32>
    %1458 = arith.mulf %1457, %1450 : vector<8x128xf32>
    %1459 = arith.xori %1437, %1337 : vector<8x128xi1>
    %c5_i32_249 = arith.constant 5 : i32
    %1460 = vector.broadcast %c5_i32_249 : i32 to vector<8x128xi32>
    %1461 = arith.cmpi sgt, %969, %1460 : vector<8x128xi32>
    %1462 = arith.andi %1461, %1437 : vector<8x128xi1>
    %1463 = arith.andi %1461, %1459 : vector<8x128xi1>
    %1464 = arith.andi %1463, %1437 : vector<8x128xi1>
    %c8_i32_250 = arith.constant 8 : i32
    %1465 = vector.broadcast %c8_i32_250 : i32 to vector<8x128xi32>
    %1466 = arith.select %1463, %1430, %1465 : vector<8x128xi1>, vector<8x128xi32>
    %c0_i32_251 = arith.constant 0 : i32
    %1467 = vector.broadcast %c0_i32_251 : i32 to vector<8x128xi32>
    %1468 = arith.cmpi eq, %1466, %1467 : vector<8x128xi32>
    %1469 = arith.select %1468, %1454, %1401 : vector<8x128xi1>, vector<8x128xf32>
    %1470 = arith.select %1468, %1458, %1402 : vector<8x128xi1>, vector<8x128xf32>
    %c1_i32_252 = arith.constant 1 : i32
    %1471 = vector.broadcast %c1_i32_252 : i32 to vector<8x128xi32>
    %1472 = arith.cmpi eq, %1466, %1471 : vector<8x128xi32>
    %1473 = arith.select %1472, %1454, %1405 : vector<8x128xi1>, vector<8x128xf32>
    %1474 = arith.select %1472, %1458, %1406 : vector<8x128xi1>, vector<8x128xf32>
    %c2_i32_253 = arith.constant 2 : i32
    %1475 = vector.broadcast %c2_i32_253 : i32 to vector<8x128xi32>
    %1476 = arith.cmpi eq, %1466, %1475 : vector<8x128xi32>
    %1477 = arith.select %1476, %1454, %1409 : vector<8x128xi1>, vector<8x128xf32>
    %1478 = arith.select %1476, %1458, %1410 : vector<8x128xi1>, vector<8x128xf32>
    %c3_i32_254 = arith.constant 3 : i32
    %1479 = vector.broadcast %c3_i32_254 : i32 to vector<8x128xi32>
    %1480 = arith.cmpi eq, %1466, %1479 : vector<8x128xi32>
    %1481 = arith.select %1480, %1454, %1413 : vector<8x128xi1>, vector<8x128xf32>
    %1482 = arith.select %1480, %1458, %1414 : vector<8x128xi1>, vector<8x128xf32>
    %c4_i32_255 = arith.constant 4 : i32
    %1483 = vector.broadcast %c4_i32_255 : i32 to vector<8x128xi32>
    %1484 = arith.cmpi eq, %1466, %1483 : vector<8x128xi32>
    %1485 = arith.select %1484, %1454, %1417 : vector<8x128xi1>, vector<8x128xf32>
    %1486 = arith.select %1484, %1458, %1418 : vector<8x128xi1>, vector<8x128xf32>
    %c5_i32_256 = arith.constant 5 : i32
    %1487 = vector.broadcast %c5_i32_256 : i32 to vector<8x128xi32>
    %1488 = arith.cmpi eq, %1466, %1487 : vector<8x128xi32>
    %1489 = arith.select %1488, %1454, %1421 : vector<8x128xi1>, vector<8x128xf32>
    %1490 = arith.select %1488, %1458, %1422 : vector<8x128xi1>, vector<8x128xf32>
    %c6_i32_257 = arith.constant 6 : i32
    %1491 = vector.broadcast %c6_i32_257 : i32 to vector<8x128xi32>
    %1492 = arith.cmpi eq, %1466, %1491 : vector<8x128xi32>
    %1493 = arith.select %1492, %1454, %1425 : vector<8x128xi1>, vector<8x128xf32>
    %1494 = arith.select %1492, %1458, %1426 : vector<8x128xi1>, vector<8x128xf32>
    %1495 = arith.extui %1464 : vector<8x128xi1> to vector<8x128xi32>
    %1496 = arith.addi %1430, %1495 : vector<8x128xi32>
    %c8_i32_258 = arith.constant 8 : i32
    %1497 = vector.broadcast %c8_i32_258 : i32 to vector<8x128xi32>
    %1498 = arith.select %1462, %1496, %1497 : vector<8x128xi1>, vector<8x128xi32>
    %c0_i32_259 = arith.constant 0 : i32
    %1499 = vector.broadcast %c0_i32_259 : i32 to vector<8x128xi32>
    %1500 = arith.cmpi eq, %1498, %1499 : vector<8x128xi32>
    %1501 = arith.select %1500, %964, %1469 : vector<8x128xi1>, vector<8x128xf32>
    %1502 = arith.select %1500, %965, %1470 : vector<8x128xi1>, vector<8x128xf32>
    %c1_i32_260 = arith.constant 1 : i32
    %1503 = vector.broadcast %c1_i32_260 : i32 to vector<8x128xi32>
    %1504 = arith.cmpi eq, %1498, %1503 : vector<8x128xi32>
    %1505 = arith.select %1504, %964, %1473 : vector<8x128xi1>, vector<8x128xf32>
    %1506 = arith.select %1504, %965, %1474 : vector<8x128xi1>, vector<8x128xf32>
    %c2_i32_261 = arith.constant 2 : i32
    %1507 = vector.broadcast %c2_i32_261 : i32 to vector<8x128xi32>
    %1508 = arith.cmpi eq, %1498, %1507 : vector<8x128xi32>
    %1509 = arith.select %1508, %964, %1477 : vector<8x128xi1>, vector<8x128xf32>
    %1510 = arith.select %1508, %965, %1478 : vector<8x128xi1>, vector<8x128xf32>
    %c3_i32_262 = arith.constant 3 : i32
    %1511 = vector.broadcast %c3_i32_262 : i32 to vector<8x128xi32>
    %1512 = arith.cmpi eq, %1498, %1511 : vector<8x128xi32>
    %1513 = arith.select %1512, %964, %1481 : vector<8x128xi1>, vector<8x128xf32>
    %1514 = arith.select %1512, %965, %1482 : vector<8x128xi1>, vector<8x128xf32>
    %c4_i32_263 = arith.constant 4 : i32
    %1515 = vector.broadcast %c4_i32_263 : i32 to vector<8x128xi32>
    %1516 = arith.cmpi eq, %1498, %1515 : vector<8x128xi32>
    %1517 = arith.select %1516, %964, %1485 : vector<8x128xi1>, vector<8x128xf32>
    %1518 = arith.select %1516, %965, %1486 : vector<8x128xi1>, vector<8x128xf32>
    %c5_i32_264 = arith.constant 5 : i32
    %1519 = vector.broadcast %c5_i32_264 : i32 to vector<8x128xi32>
    %1520 = arith.cmpi eq, %1498, %1519 : vector<8x128xi32>
    %1521 = arith.select %1520, %964, %1489 : vector<8x128xi1>, vector<8x128xf32>
    %1522 = arith.select %1520, %965, %1490 : vector<8x128xi1>, vector<8x128xf32>
    %c6_i32_265 = arith.constant 6 : i32
    %1523 = vector.broadcast %c6_i32_265 : i32 to vector<8x128xi32>
    %1524 = arith.cmpi eq, %1498, %1523 : vector<8x128xi32>
    %1525 = arith.select %1524, %964, %1493 : vector<8x128xi1>, vector<8x128xf32>
    %1526 = arith.select %1524, %965, %1494 : vector<8x128xi1>, vector<8x128xf32>
    %1527 = arith.extui %1463 : vector<8x128xi1> to vector<8x128xi32>
    %1528 = arith.addi %1430, %1527 : vector<8x128xi32>
    %1529 = arith.extui %1462 : vector<8x128xi1> to vector<8x128xi32>
    %1530 = arith.addi %1528, %1529 : vector<8x128xi32>
    %1531 = arith.subf %189, %188 : vector<8x128xf32>
    %1532 = arith.subf %193, %192 : vector<8x128xf32>
    %cst_266 = arith.constant 0.000000e+00 : f32
    %1533 = vector.broadcast %cst_266 : f32 to vector<8x128xf32>
    %1534 = arith.subf %1533, %1531 : vector<8x128xf32>
    %cst_267 = arith.constant 0.000000e+00 : f32
    %1535 = vector.broadcast %cst_267 : f32 to vector<8x128xf32>
    %1536 = arith.subf %1535, %1532 : vector<8x128xf32>
    %1537 = arith.mulf %188, %193 : vector<8x128xf32>
    %1538 = arith.mulf %192, %189 : vector<8x128xf32>
    %1539 = arith.subf %1537, %1538 : vector<8x128xf32>
    %c0_i32_268 = arith.constant 0 : i32
    %1540 = vector.broadcast %c0_i32_268 : i32 to vector<8x128xi32>
    %c1_i32_269 = arith.constant 1 : i32
    %1541 = vector.broadcast %c1_i32_269 : i32 to vector<8x128xi32>
    %1542 = arith.subi %1530, %1541 : vector<8x128xi32>
    %cst_270 = arith.constant 0.000000e+00 : f32
    %1543 = vector.broadcast %cst_270 : f32 to vector<8x128xf32>
    %cst_271 = arith.constant 0.000000e+00 : f32
    %1544 = vector.broadcast %cst_271 : f32 to vector<8x128xf32>
    %c0_i32_272 = arith.constant 0 : i32
    %1545 = vector.broadcast %c0_i32_272 : i32 to vector<8x128xi32>
    %1546 = arith.cmpi eq, %1542, %1545 : vector<8x128xi32>
    %1547 = arith.select %1546, %1501, %1543 : vector<8x128xi1>, vector<8x128xf32>
    %1548 = arith.select %1546, %1502, %1544 : vector<8x128xi1>, vector<8x128xf32>
    %c1_i32_273 = arith.constant 1 : i32
    %1549 = vector.broadcast %c1_i32_273 : i32 to vector<8x128xi32>
    %1550 = arith.cmpi eq, %1542, %1549 : vector<8x128xi32>
    %1551 = arith.select %1550, %1505, %1547 : vector<8x128xi1>, vector<8x128xf32>
    %1552 = arith.select %1550, %1506, %1548 : vector<8x128xi1>, vector<8x128xf32>
    %c2_i32_274 = arith.constant 2 : i32
    %1553 = vector.broadcast %c2_i32_274 : i32 to vector<8x128xi32>
    %1554 = arith.cmpi eq, %1542, %1553 : vector<8x128xi32>
    %1555 = arith.select %1554, %1509, %1551 : vector<8x128xi1>, vector<8x128xf32>
    %1556 = arith.select %1554, %1510, %1552 : vector<8x128xi1>, vector<8x128xf32>
    %c3_i32_275 = arith.constant 3 : i32
    %1557 = vector.broadcast %c3_i32_275 : i32 to vector<8x128xi32>
    %1558 = arith.cmpi eq, %1542, %1557 : vector<8x128xi32>
    %1559 = arith.select %1558, %1513, %1555 : vector<8x128xi1>, vector<8x128xf32>
    %1560 = arith.select %1558, %1514, %1556 : vector<8x128xi1>, vector<8x128xf32>
    %c4_i32_276 = arith.constant 4 : i32
    %1561 = vector.broadcast %c4_i32_276 : i32 to vector<8x128xi32>
    %1562 = arith.cmpi eq, %1542, %1561 : vector<8x128xi32>
    %1563 = arith.select %1562, %1517, %1559 : vector<8x128xi1>, vector<8x128xf32>
    %1564 = arith.select %1562, %1518, %1560 : vector<8x128xi1>, vector<8x128xf32>
    %c5_i32_277 = arith.constant 5 : i32
    %1565 = vector.broadcast %c5_i32_277 : i32 to vector<8x128xi32>
    %1566 = arith.cmpi eq, %1542, %1565 : vector<8x128xi32>
    %1567 = arith.select %1566, %1521, %1563 : vector<8x128xi1>, vector<8x128xf32>
    %1568 = arith.select %1566, %1522, %1564 : vector<8x128xi1>, vector<8x128xf32>
    %c6_i32_278 = arith.constant 6 : i32
    %1569 = vector.broadcast %c6_i32_278 : i32 to vector<8x128xi32>
    %1570 = arith.cmpi eq, %1542, %1569 : vector<8x128xi32>
    %1571 = arith.select %1570, %1525, %1567 : vector<8x128xi1>, vector<8x128xf32>
    %1572 = arith.select %1570, %1526, %1568 : vector<8x128xi1>, vector<8x128xf32>
    %1573 = arith.subf %1572, %192 : vector<8x128xf32>
    %1574 = arith.mulf %1531, %1573 : vector<8x128xf32>
    %1575 = arith.subf %1571, %188 : vector<8x128xf32>
    %1576 = arith.mulf %1532, %1575 : vector<8x128xf32>
    %1577 = arith.subf %1574, %1576 : vector<8x128xf32>
    %cst_279 = arith.constant 0.000000e+00 : f32
    %1578 = vector.broadcast %cst_279 : f32 to vector<8x128xf32>
    %1579 = arith.cmpf ole, %1577, %1578 : vector<8x128xf32>
    %1580 = arith.subf %1502, %192 : vector<8x128xf32>
    %1581 = arith.mulf %1531, %1580 : vector<8x128xf32>
    %1582 = arith.subf %1501, %188 : vector<8x128xf32>
    %1583 = arith.mulf %1532, %1582 : vector<8x128xf32>
    %1584 = arith.subf %1581, %1583 : vector<8x128xf32>
    %cst_280 = arith.constant 0.000000e+00 : f32
    %1585 = vector.broadcast %cst_280 : f32 to vector<8x128xf32>
    %1586 = arith.cmpf ole, %1584, %1585 : vector<8x128xf32>
    %1587 = arith.subf %1571, %1501 : vector<8x128xf32>
    %1588 = arith.subf %1572, %1502 : vector<8x128xf32>
    %1589 = arith.mulf %1571, %1502 : vector<8x128xf32>
    %1590 = arith.mulf %1572, %1501 : vector<8x128xf32>
    %1591 = arith.subf %1589, %1590 : vector<8x128xf32>
    %1592 = arith.mulf %1587, %1536 : vector<8x128xf32>
    %1593 = arith.mulf %1588, %1534 : vector<8x128xf32>
    %1594 = arith.subf %1592, %1593 : vector<8x128xf32>
    %1595 = tpu.reciprocal %1594 {approx = true} : vector<8x128xf32> -> vector<8x128xf32>
    %1596 = arith.mulf %1594, %1595 : vector<8x128xf32>
    %cst_281 = arith.constant 2.000000e+00 : f32
    %1597 = vector.broadcast %cst_281 : f32 to vector<8x128xf32>
    %1598 = arith.subf %1597, %1596 : vector<8x128xf32>
    %1599 = arith.mulf %1595, %1598 : vector<8x128xf32>
    %1600 = arith.mulf %1591, %1534 : vector<8x128xf32>
    %1601 = arith.mulf %1587, %1539 : vector<8x128xf32>
    %1602 = arith.subf %1600, %1601 : vector<8x128xf32>
    %1603 = arith.mulf %1602, %1599 : vector<8x128xf32>
    %1604 = arith.mulf %1591, %1536 : vector<8x128xf32>
    %1605 = arith.mulf %1588, %1539 : vector<8x128xf32>
    %1606 = arith.subf %1604, %1605 : vector<8x128xf32>
    %1607 = arith.mulf %1606, %1599 : vector<8x128xf32>
    %1608 = arith.xori %1586, %1579 : vector<8x128xi1>
    %c0_i32_282 = arith.constant 0 : i32
    %1609 = vector.broadcast %c0_i32_282 : i32 to vector<8x128xi32>
    %1610 = arith.cmpi sgt, %1530, %1609 : vector<8x128xi32>
    %1611 = arith.andi %1610, %1586 : vector<8x128xi1>
    %1612 = arith.andi %1610, %1608 : vector<8x128xi1>
    %1613 = arith.andi %1612, %1586 : vector<8x128xi1>
    %c8_i32_283 = arith.constant 8 : i32
    %1614 = vector.broadcast %c8_i32_283 : i32 to vector<8x128xi32>
    %1615 = arith.select %1612, %1540, %1614 : vector<8x128xi1>, vector<8x128xi32>
    %c0_i32_284 = arith.constant 0 : i32
    %1616 = vector.broadcast %c0_i32_284 : i32 to vector<8x128xi32>
    %1617 = arith.cmpi eq, %1615, %1616 : vector<8x128xi32>
    %1618 = arith.select %1617, %1603, %52 : vector<8x128xi1>, vector<8x128xf32>
    %1619 = arith.select %1617, %1607, %52 : vector<8x128xi1>, vector<8x128xf32>
    %1620 = arith.extui %1613 : vector<8x128xi1> to vector<8x128xi32>
    %1621 = arith.addi %1540, %1620 : vector<8x128xi32>
    %c8_i32_285 = arith.constant 8 : i32
    %1622 = vector.broadcast %c8_i32_285 : i32 to vector<8x128xi32>
    %1623 = arith.select %1611, %1621, %1622 : vector<8x128xi1>, vector<8x128xi32>
    %c0_i32_286 = arith.constant 0 : i32
    %1624 = vector.broadcast %c0_i32_286 : i32 to vector<8x128xi32>
    %1625 = arith.cmpi eq, %1623, %1624 : vector<8x128xi32>
    %1626 = arith.select %1625, %1501, %1618 : vector<8x128xi1>, vector<8x128xf32>
    %1627 = arith.select %1625, %1502, %1619 : vector<8x128xi1>, vector<8x128xf32>
    %c1_i32_287 = arith.constant 1 : i32
    %1628 = vector.broadcast %c1_i32_287 : i32 to vector<8x128xi32>
    %1629 = arith.cmpi eq, %1623, %1628 : vector<8x128xi32>
    %1630 = arith.select %1629, %1501, %52 : vector<8x128xi1>, vector<8x128xf32>
    %1631 = arith.select %1629, %1502, %52 : vector<8x128xi1>, vector<8x128xf32>
    %1632 = arith.extui %1612 : vector<8x128xi1> to vector<8x128xi32>
    %1633 = arith.addi %1540, %1632 : vector<8x128xi32>
    %1634 = arith.extui %1611 : vector<8x128xi1> to vector<8x128xi32>
    %1635 = arith.addi %1633, %1634 : vector<8x128xi32>
    %1636 = arith.subf %1506, %192 : vector<8x128xf32>
    %1637 = arith.mulf %1531, %1636 : vector<8x128xf32>
    %1638 = arith.subf %1505, %188 : vector<8x128xf32>
    %1639 = arith.mulf %1532, %1638 : vector<8x128xf32>
    %1640 = arith.subf %1637, %1639 : vector<8x128xf32>
    %cst_288 = arith.constant 0.000000e+00 : f32
    %1641 = vector.broadcast %cst_288 : f32 to vector<8x128xf32>
    %1642 = arith.cmpf ole, %1640, %1641 : vector<8x128xf32>
    %1643 = arith.subf %1501, %1505 : vector<8x128xf32>
    %1644 = arith.subf %1502, %1506 : vector<8x128xf32>
    %1645 = arith.mulf %1501, %1506 : vector<8x128xf32>
    %1646 = arith.mulf %1502, %1505 : vector<8x128xf32>
    %1647 = arith.subf %1645, %1646 : vector<8x128xf32>
    %1648 = arith.mulf %1643, %1536 : vector<8x128xf32>
    %1649 = arith.mulf %1644, %1534 : vector<8x128xf32>
    %1650 = arith.subf %1648, %1649 : vector<8x128xf32>
    %1651 = tpu.reciprocal %1650 {approx = true} : vector<8x128xf32> -> vector<8x128xf32>
    %1652 = arith.mulf %1650, %1651 : vector<8x128xf32>
    %cst_289 = arith.constant 2.000000e+00 : f32
    %1653 = vector.broadcast %cst_289 : f32 to vector<8x128xf32>
    %1654 = arith.subf %1653, %1652 : vector<8x128xf32>
    %1655 = arith.mulf %1651, %1654 : vector<8x128xf32>
    %1656 = arith.mulf %1647, %1534 : vector<8x128xf32>
    %1657 = arith.mulf %1643, %1539 : vector<8x128xf32>
    %1658 = arith.subf %1656, %1657 : vector<8x128xf32>
    %1659 = arith.mulf %1658, %1655 : vector<8x128xf32>
    %1660 = arith.mulf %1647, %1536 : vector<8x128xf32>
    %1661 = arith.mulf %1644, %1539 : vector<8x128xf32>
    %1662 = arith.subf %1660, %1661 : vector<8x128xf32>
    %1663 = arith.mulf %1662, %1655 : vector<8x128xf32>
    %1664 = arith.xori %1642, %1586 : vector<8x128xi1>
    %c1_i32_290 = arith.constant 1 : i32
    %1665 = vector.broadcast %c1_i32_290 : i32 to vector<8x128xi32>
    %1666 = arith.cmpi sgt, %1530, %1665 : vector<8x128xi32>
    %1667 = arith.andi %1666, %1642 : vector<8x128xi1>
    %1668 = arith.andi %1666, %1664 : vector<8x128xi1>
    %1669 = arith.andi %1668, %1642 : vector<8x128xi1>
    %c8_i32_291 = arith.constant 8 : i32
    %1670 = vector.broadcast %c8_i32_291 : i32 to vector<8x128xi32>
    %1671 = arith.select %1668, %1635, %1670 : vector<8x128xi1>, vector<8x128xi32>
    %c0_i32_292 = arith.constant 0 : i32
    %1672 = vector.broadcast %c0_i32_292 : i32 to vector<8x128xi32>
    %1673 = arith.cmpi eq, %1671, %1672 : vector<8x128xi32>
    %1674 = arith.select %1673, %1659, %1626 : vector<8x128xi1>, vector<8x128xf32>
    %1675 = arith.select %1673, %1663, %1627 : vector<8x128xi1>, vector<8x128xf32>
    %c1_i32_293 = arith.constant 1 : i32
    %1676 = vector.broadcast %c1_i32_293 : i32 to vector<8x128xi32>
    %1677 = arith.cmpi eq, %1671, %1676 : vector<8x128xi32>
    %1678 = arith.select %1677, %1659, %1630 : vector<8x128xi1>, vector<8x128xf32>
    %1679 = arith.select %1677, %1663, %1631 : vector<8x128xi1>, vector<8x128xf32>
    %c2_i32_294 = arith.constant 2 : i32
    %1680 = vector.broadcast %c2_i32_294 : i32 to vector<8x128xi32>
    %1681 = arith.cmpi eq, %1671, %1680 : vector<8x128xi32>
    %1682 = arith.select %1681, %1659, %52 : vector<8x128xi1>, vector<8x128xf32>
    %1683 = arith.select %1681, %1663, %52 : vector<8x128xi1>, vector<8x128xf32>
    %1684 = arith.extui %1669 : vector<8x128xi1> to vector<8x128xi32>
    %1685 = arith.addi %1635, %1684 : vector<8x128xi32>
    %c8_i32_295 = arith.constant 8 : i32
    %1686 = vector.broadcast %c8_i32_295 : i32 to vector<8x128xi32>
    %1687 = arith.select %1667, %1685, %1686 : vector<8x128xi1>, vector<8x128xi32>
    %c0_i32_296 = arith.constant 0 : i32
    %1688 = vector.broadcast %c0_i32_296 : i32 to vector<8x128xi32>
    %1689 = arith.cmpi eq, %1687, %1688 : vector<8x128xi32>
    %1690 = arith.select %1689, %1505, %1674 : vector<8x128xi1>, vector<8x128xf32>
    %1691 = arith.select %1689, %1506, %1675 : vector<8x128xi1>, vector<8x128xf32>
    %c1_i32_297 = arith.constant 1 : i32
    %1692 = vector.broadcast %c1_i32_297 : i32 to vector<8x128xi32>
    %1693 = arith.cmpi eq, %1687, %1692 : vector<8x128xi32>
    %1694 = arith.select %1693, %1505, %1678 : vector<8x128xi1>, vector<8x128xf32>
    %1695 = arith.select %1693, %1506, %1679 : vector<8x128xi1>, vector<8x128xf32>
    %c2_i32_298 = arith.constant 2 : i32
    %1696 = vector.broadcast %c2_i32_298 : i32 to vector<8x128xi32>
    %1697 = arith.cmpi eq, %1687, %1696 : vector<8x128xi32>
    %1698 = arith.select %1697, %1505, %1682 : vector<8x128xi1>, vector<8x128xf32>
    %1699 = arith.select %1697, %1506, %1683 : vector<8x128xi1>, vector<8x128xf32>
    %c3_i32_299 = arith.constant 3 : i32
    %1700 = vector.broadcast %c3_i32_299 : i32 to vector<8x128xi32>
    %1701 = arith.cmpi eq, %1687, %1700 : vector<8x128xi32>
    %1702 = arith.select %1701, %1505, %52 : vector<8x128xi1>, vector<8x128xf32>
    %1703 = arith.select %1701, %1506, %52 : vector<8x128xi1>, vector<8x128xf32>
    %1704 = arith.extui %1668 : vector<8x128xi1> to vector<8x128xi32>
    %1705 = arith.addi %1635, %1704 : vector<8x128xi32>
    %1706 = arith.extui %1667 : vector<8x128xi1> to vector<8x128xi32>
    %1707 = arith.addi %1705, %1706 : vector<8x128xi32>
    %1708 = arith.subf %1510, %192 : vector<8x128xf32>
    %1709 = arith.mulf %1531, %1708 : vector<8x128xf32>
    %1710 = arith.subf %1509, %188 : vector<8x128xf32>
    %1711 = arith.mulf %1532, %1710 : vector<8x128xf32>
    %1712 = arith.subf %1709, %1711 : vector<8x128xf32>
    %cst_300 = arith.constant 0.000000e+00 : f32
    %1713 = vector.broadcast %cst_300 : f32 to vector<8x128xf32>
    %1714 = arith.cmpf ole, %1712, %1713 : vector<8x128xf32>
    %1715 = arith.subf %1505, %1509 : vector<8x128xf32>
    %1716 = arith.subf %1506, %1510 : vector<8x128xf32>
    %1717 = arith.mulf %1505, %1510 : vector<8x128xf32>
    %1718 = arith.mulf %1506, %1509 : vector<8x128xf32>
    %1719 = arith.subf %1717, %1718 : vector<8x128xf32>
    %1720 = arith.mulf %1715, %1536 : vector<8x128xf32>
    %1721 = arith.mulf %1716, %1534 : vector<8x128xf32>
    %1722 = arith.subf %1720, %1721 : vector<8x128xf32>
    %1723 = tpu.reciprocal %1722 {approx = true} : vector<8x128xf32> -> vector<8x128xf32>
    %1724 = arith.mulf %1722, %1723 : vector<8x128xf32>
    %cst_301 = arith.constant 2.000000e+00 : f32
    %1725 = vector.broadcast %cst_301 : f32 to vector<8x128xf32>
    %1726 = arith.subf %1725, %1724 : vector<8x128xf32>
    %1727 = arith.mulf %1723, %1726 : vector<8x128xf32>
    %1728 = arith.mulf %1719, %1534 : vector<8x128xf32>
    %1729 = arith.mulf %1715, %1539 : vector<8x128xf32>
    %1730 = arith.subf %1728, %1729 : vector<8x128xf32>
    %1731 = arith.mulf %1730, %1727 : vector<8x128xf32>
    %1732 = arith.mulf %1719, %1536 : vector<8x128xf32>
    %1733 = arith.mulf %1716, %1539 : vector<8x128xf32>
    %1734 = arith.subf %1732, %1733 : vector<8x128xf32>
    %1735 = arith.mulf %1734, %1727 : vector<8x128xf32>
    %1736 = arith.xori %1714, %1642 : vector<8x128xi1>
    %c2_i32_302 = arith.constant 2 : i32
    %1737 = vector.broadcast %c2_i32_302 : i32 to vector<8x128xi32>
    %1738 = arith.cmpi sgt, %1530, %1737 : vector<8x128xi32>
    %1739 = arith.andi %1738, %1714 : vector<8x128xi1>
    %1740 = arith.andi %1738, %1736 : vector<8x128xi1>
    %1741 = arith.andi %1740, %1714 : vector<8x128xi1>
    %c8_i32_303 = arith.constant 8 : i32
    %1742 = vector.broadcast %c8_i32_303 : i32 to vector<8x128xi32>
    %1743 = arith.select %1740, %1707, %1742 : vector<8x128xi1>, vector<8x128xi32>
    %c0_i32_304 = arith.constant 0 : i32
    %1744 = vector.broadcast %c0_i32_304 : i32 to vector<8x128xi32>
    %1745 = arith.cmpi eq, %1743, %1744 : vector<8x128xi32>
    %1746 = arith.select %1745, %1731, %1690 : vector<8x128xi1>, vector<8x128xf32>
    %1747 = arith.select %1745, %1735, %1691 : vector<8x128xi1>, vector<8x128xf32>
    %c1_i32_305 = arith.constant 1 : i32
    %1748 = vector.broadcast %c1_i32_305 : i32 to vector<8x128xi32>
    %1749 = arith.cmpi eq, %1743, %1748 : vector<8x128xi32>
    %1750 = arith.select %1749, %1731, %1694 : vector<8x128xi1>, vector<8x128xf32>
    %1751 = arith.select %1749, %1735, %1695 : vector<8x128xi1>, vector<8x128xf32>
    %c2_i32_306 = arith.constant 2 : i32
    %1752 = vector.broadcast %c2_i32_306 : i32 to vector<8x128xi32>
    %1753 = arith.cmpi eq, %1743, %1752 : vector<8x128xi32>
    %1754 = arith.select %1753, %1731, %1698 : vector<8x128xi1>, vector<8x128xf32>
    %1755 = arith.select %1753, %1735, %1699 : vector<8x128xi1>, vector<8x128xf32>
    %c3_i32_307 = arith.constant 3 : i32
    %1756 = vector.broadcast %c3_i32_307 : i32 to vector<8x128xi32>
    %1757 = arith.cmpi eq, %1743, %1756 : vector<8x128xi32>
    %1758 = arith.select %1757, %1731, %1702 : vector<8x128xi1>, vector<8x128xf32>
    %1759 = arith.select %1757, %1735, %1703 : vector<8x128xi1>, vector<8x128xf32>
    %c4_i32_308 = arith.constant 4 : i32
    %1760 = vector.broadcast %c4_i32_308 : i32 to vector<8x128xi32>
    %1761 = arith.cmpi eq, %1743, %1760 : vector<8x128xi32>
    %1762 = arith.select %1761, %1731, %52 : vector<8x128xi1>, vector<8x128xf32>
    %1763 = arith.select %1761, %1735, %52 : vector<8x128xi1>, vector<8x128xf32>
    %1764 = arith.extui %1741 : vector<8x128xi1> to vector<8x128xi32>
    %1765 = arith.addi %1707, %1764 : vector<8x128xi32>
    %c8_i32_309 = arith.constant 8 : i32
    %1766 = vector.broadcast %c8_i32_309 : i32 to vector<8x128xi32>
    %1767 = arith.select %1739, %1765, %1766 : vector<8x128xi1>, vector<8x128xi32>
    %c0_i32_310 = arith.constant 0 : i32
    %1768 = vector.broadcast %c0_i32_310 : i32 to vector<8x128xi32>
    %1769 = arith.cmpi eq, %1767, %1768 : vector<8x128xi32>
    %1770 = arith.select %1769, %1509, %1746 : vector<8x128xi1>, vector<8x128xf32>
    %1771 = arith.select %1769, %1510, %1747 : vector<8x128xi1>, vector<8x128xf32>
    %c1_i32_311 = arith.constant 1 : i32
    %1772 = vector.broadcast %c1_i32_311 : i32 to vector<8x128xi32>
    %1773 = arith.cmpi eq, %1767, %1772 : vector<8x128xi32>
    %1774 = arith.select %1773, %1509, %1750 : vector<8x128xi1>, vector<8x128xf32>
    %1775 = arith.select %1773, %1510, %1751 : vector<8x128xi1>, vector<8x128xf32>
    %c2_i32_312 = arith.constant 2 : i32
    %1776 = vector.broadcast %c2_i32_312 : i32 to vector<8x128xi32>
    %1777 = arith.cmpi eq, %1767, %1776 : vector<8x128xi32>
    %1778 = arith.select %1777, %1509, %1754 : vector<8x128xi1>, vector<8x128xf32>
    %1779 = arith.select %1777, %1510, %1755 : vector<8x128xi1>, vector<8x128xf32>
    %c3_i32_313 = arith.constant 3 : i32
    %1780 = vector.broadcast %c3_i32_313 : i32 to vector<8x128xi32>
    %1781 = arith.cmpi eq, %1767, %1780 : vector<8x128xi32>
    %1782 = arith.select %1781, %1509, %1758 : vector<8x128xi1>, vector<8x128xf32>
    %1783 = arith.select %1781, %1510, %1759 : vector<8x128xi1>, vector<8x128xf32>
    %c4_i32_314 = arith.constant 4 : i32
    %1784 = vector.broadcast %c4_i32_314 : i32 to vector<8x128xi32>
    %1785 = arith.cmpi eq, %1767, %1784 : vector<8x128xi32>
    %1786 = arith.select %1785, %1509, %1762 : vector<8x128xi1>, vector<8x128xf32>
    %1787 = arith.select %1785, %1510, %1763 : vector<8x128xi1>, vector<8x128xf32>
    %c5_i32_315 = arith.constant 5 : i32
    %1788 = vector.broadcast %c5_i32_315 : i32 to vector<8x128xi32>
    %1789 = arith.cmpi eq, %1767, %1788 : vector<8x128xi32>
    %1790 = arith.select %1789, %1509, %52 : vector<8x128xi1>, vector<8x128xf32>
    %1791 = arith.select %1789, %1510, %52 : vector<8x128xi1>, vector<8x128xf32>
    %1792 = arith.extui %1740 : vector<8x128xi1> to vector<8x128xi32>
    %1793 = arith.addi %1707, %1792 : vector<8x128xi32>
    %1794 = arith.extui %1739 : vector<8x128xi1> to vector<8x128xi32>
    %1795 = arith.addi %1793, %1794 : vector<8x128xi32>
    %1796 = arith.subf %1514, %192 : vector<8x128xf32>
    %1797 = arith.mulf %1531, %1796 : vector<8x128xf32>
    %1798 = arith.subf %1513, %188 : vector<8x128xf32>
    %1799 = arith.mulf %1532, %1798 : vector<8x128xf32>
    %1800 = arith.subf %1797, %1799 : vector<8x128xf32>
    %cst_316 = arith.constant 0.000000e+00 : f32
    %1801 = vector.broadcast %cst_316 : f32 to vector<8x128xf32>
    %1802 = arith.cmpf ole, %1800, %1801 : vector<8x128xf32>
    %1803 = arith.subf %1509, %1513 : vector<8x128xf32>
    %1804 = arith.subf %1510, %1514 : vector<8x128xf32>
    %1805 = arith.mulf %1509, %1514 : vector<8x128xf32>
    %1806 = arith.mulf %1510, %1513 : vector<8x128xf32>
    %1807 = arith.subf %1805, %1806 : vector<8x128xf32>
    %1808 = arith.mulf %1803, %1536 : vector<8x128xf32>
    %1809 = arith.mulf %1804, %1534 : vector<8x128xf32>
    %1810 = arith.subf %1808, %1809 : vector<8x128xf32>
    %1811 = tpu.reciprocal %1810 {approx = true} : vector<8x128xf32> -> vector<8x128xf32>
    %1812 = arith.mulf %1810, %1811 : vector<8x128xf32>
    %cst_317 = arith.constant 2.000000e+00 : f32
    %1813 = vector.broadcast %cst_317 : f32 to vector<8x128xf32>
    %1814 = arith.subf %1813, %1812 : vector<8x128xf32>
    %1815 = arith.mulf %1811, %1814 : vector<8x128xf32>
    %1816 = arith.mulf %1807, %1534 : vector<8x128xf32>
    %1817 = arith.mulf %1803, %1539 : vector<8x128xf32>
    %1818 = arith.subf %1816, %1817 : vector<8x128xf32>
    %1819 = arith.mulf %1818, %1815 : vector<8x128xf32>
    %1820 = arith.mulf %1807, %1536 : vector<8x128xf32>
    %1821 = arith.mulf %1804, %1539 : vector<8x128xf32>
    %1822 = arith.subf %1820, %1821 : vector<8x128xf32>
    %1823 = arith.mulf %1822, %1815 : vector<8x128xf32>
    %1824 = arith.xori %1802, %1714 : vector<8x128xi1>
    %c3_i32_318 = arith.constant 3 : i32
    %1825 = vector.broadcast %c3_i32_318 : i32 to vector<8x128xi32>
    %1826 = arith.cmpi sgt, %1530, %1825 : vector<8x128xi32>
    %1827 = arith.andi %1826, %1802 : vector<8x128xi1>
    %1828 = arith.andi %1826, %1824 : vector<8x128xi1>
    %1829 = arith.andi %1828, %1802 : vector<8x128xi1>
    %c8_i32_319 = arith.constant 8 : i32
    %1830 = vector.broadcast %c8_i32_319 : i32 to vector<8x128xi32>
    %1831 = arith.select %1828, %1795, %1830 : vector<8x128xi1>, vector<8x128xi32>
    %c0_i32_320 = arith.constant 0 : i32
    %1832 = vector.broadcast %c0_i32_320 : i32 to vector<8x128xi32>
    %1833 = arith.cmpi eq, %1831, %1832 : vector<8x128xi32>
    %1834 = arith.select %1833, %1819, %1770 : vector<8x128xi1>, vector<8x128xf32>
    %1835 = arith.select %1833, %1823, %1771 : vector<8x128xi1>, vector<8x128xf32>
    %c1_i32_321 = arith.constant 1 : i32
    %1836 = vector.broadcast %c1_i32_321 : i32 to vector<8x128xi32>
    %1837 = arith.cmpi eq, %1831, %1836 : vector<8x128xi32>
    %1838 = arith.select %1837, %1819, %1774 : vector<8x128xi1>, vector<8x128xf32>
    %1839 = arith.select %1837, %1823, %1775 : vector<8x128xi1>, vector<8x128xf32>
    %c2_i32_322 = arith.constant 2 : i32
    %1840 = vector.broadcast %c2_i32_322 : i32 to vector<8x128xi32>
    %1841 = arith.cmpi eq, %1831, %1840 : vector<8x128xi32>
    %1842 = arith.select %1841, %1819, %1778 : vector<8x128xi1>, vector<8x128xf32>
    %1843 = arith.select %1841, %1823, %1779 : vector<8x128xi1>, vector<8x128xf32>
    %c3_i32_323 = arith.constant 3 : i32
    %1844 = vector.broadcast %c3_i32_323 : i32 to vector<8x128xi32>
    %1845 = arith.cmpi eq, %1831, %1844 : vector<8x128xi32>
    %1846 = arith.select %1845, %1819, %1782 : vector<8x128xi1>, vector<8x128xf32>
    %1847 = arith.select %1845, %1823, %1783 : vector<8x128xi1>, vector<8x128xf32>
    %c4_i32_324 = arith.constant 4 : i32
    %1848 = vector.broadcast %c4_i32_324 : i32 to vector<8x128xi32>
    %1849 = arith.cmpi eq, %1831, %1848 : vector<8x128xi32>
    %1850 = arith.select %1849, %1819, %1786 : vector<8x128xi1>, vector<8x128xf32>
    %1851 = arith.select %1849, %1823, %1787 : vector<8x128xi1>, vector<8x128xf32>
    %c5_i32_325 = arith.constant 5 : i32
    %1852 = vector.broadcast %c5_i32_325 : i32 to vector<8x128xi32>
    %1853 = arith.cmpi eq, %1831, %1852 : vector<8x128xi32>
    %1854 = arith.select %1853, %1819, %1790 : vector<8x128xi1>, vector<8x128xf32>
    %1855 = arith.select %1853, %1823, %1791 : vector<8x128xi1>, vector<8x128xf32>
    %c6_i32_326 = arith.constant 6 : i32
    %1856 = vector.broadcast %c6_i32_326 : i32 to vector<8x128xi32>
    %1857 = arith.cmpi eq, %1831, %1856 : vector<8x128xi32>
    %1858 = arith.select %1857, %1819, %52 : vector<8x128xi1>, vector<8x128xf32>
    %1859 = arith.select %1857, %1823, %52 : vector<8x128xi1>, vector<8x128xf32>
    %1860 = arith.extui %1829 : vector<8x128xi1> to vector<8x128xi32>
    %1861 = arith.addi %1795, %1860 : vector<8x128xi32>
    %c8_i32_327 = arith.constant 8 : i32
    %1862 = vector.broadcast %c8_i32_327 : i32 to vector<8x128xi32>
    %1863 = arith.select %1827, %1861, %1862 : vector<8x128xi1>, vector<8x128xi32>
    %c0_i32_328 = arith.constant 0 : i32
    %1864 = vector.broadcast %c0_i32_328 : i32 to vector<8x128xi32>
    %1865 = arith.cmpi eq, %1863, %1864 : vector<8x128xi32>
    %1866 = arith.select %1865, %1513, %1834 : vector<8x128xi1>, vector<8x128xf32>
    %1867 = arith.select %1865, %1514, %1835 : vector<8x128xi1>, vector<8x128xf32>
    %c1_i32_329 = arith.constant 1 : i32
    %1868 = vector.broadcast %c1_i32_329 : i32 to vector<8x128xi32>
    %1869 = arith.cmpi eq, %1863, %1868 : vector<8x128xi32>
    %1870 = arith.select %1869, %1513, %1838 : vector<8x128xi1>, vector<8x128xf32>
    %1871 = arith.select %1869, %1514, %1839 : vector<8x128xi1>, vector<8x128xf32>
    %c2_i32_330 = arith.constant 2 : i32
    %1872 = vector.broadcast %c2_i32_330 : i32 to vector<8x128xi32>
    %1873 = arith.cmpi eq, %1863, %1872 : vector<8x128xi32>
    %1874 = arith.select %1873, %1513, %1842 : vector<8x128xi1>, vector<8x128xf32>
    %1875 = arith.select %1873, %1514, %1843 : vector<8x128xi1>, vector<8x128xf32>
    %c3_i32_331 = arith.constant 3 : i32
    %1876 = vector.broadcast %c3_i32_331 : i32 to vector<8x128xi32>
    %1877 = arith.cmpi eq, %1863, %1876 : vector<8x128xi32>
    %1878 = arith.select %1877, %1513, %1846 : vector<8x128xi1>, vector<8x128xf32>
    %1879 = arith.select %1877, %1514, %1847 : vector<8x128xi1>, vector<8x128xf32>
    %c4_i32_332 = arith.constant 4 : i32
    %1880 = vector.broadcast %c4_i32_332 : i32 to vector<8x128xi32>
    %1881 = arith.cmpi eq, %1863, %1880 : vector<8x128xi32>
    %1882 = arith.select %1881, %1513, %1850 : vector<8x128xi1>, vector<8x128xf32>
    %1883 = arith.select %1881, %1514, %1851 : vector<8x128xi1>, vector<8x128xf32>
    %c5_i32_333 = arith.constant 5 : i32
    %1884 = vector.broadcast %c5_i32_333 : i32 to vector<8x128xi32>
    %1885 = arith.cmpi eq, %1863, %1884 : vector<8x128xi32>
    %1886 = arith.select %1885, %1513, %1854 : vector<8x128xi1>, vector<8x128xf32>
    %1887 = arith.select %1885, %1514, %1855 : vector<8x128xi1>, vector<8x128xf32>
    %c6_i32_334 = arith.constant 6 : i32
    %1888 = vector.broadcast %c6_i32_334 : i32 to vector<8x128xi32>
    %1889 = arith.cmpi eq, %1863, %1888 : vector<8x128xi32>
    %1890 = arith.select %1889, %1513, %1858 : vector<8x128xi1>, vector<8x128xf32>
    %1891 = arith.select %1889, %1514, %1859 : vector<8x128xi1>, vector<8x128xf32>
    %c7_i32 = arith.constant 7 : i32
    %1892 = vector.broadcast %c7_i32 : i32 to vector<8x128xi32>
    %1893 = arith.cmpi eq, %1863, %1892 : vector<8x128xi32>
    %1894 = arith.select %1893, %1513, %52 : vector<8x128xi1>, vector<8x128xf32>
    %1895 = arith.select %1893, %1514, %52 : vector<8x128xi1>, vector<8x128xf32>
    %1896 = arith.extui %1828 : vector<8x128xi1> to vector<8x128xi32>
    %1897 = arith.addi %1795, %1896 : vector<8x128xi32>
    %1898 = arith.extui %1827 : vector<8x128xi1> to vector<8x128xi32>
    %1899 = arith.addi %1897, %1898 : vector<8x128xi32>
    %1900 = arith.subf %1518, %192 : vector<8x128xf32>
    %1901 = arith.mulf %1531, %1900 : vector<8x128xf32>
    %1902 = arith.subf %1517, %188 : vector<8x128xf32>
    %1903 = arith.mulf %1532, %1902 : vector<8x128xf32>
    %1904 = arith.subf %1901, %1903 : vector<8x128xf32>
    %cst_335 = arith.constant 0.000000e+00 : f32
    %1905 = vector.broadcast %cst_335 : f32 to vector<8x128xf32>
    %1906 = arith.cmpf ole, %1904, %1905 : vector<8x128xf32>
    %1907 = arith.subf %1513, %1517 : vector<8x128xf32>
    %1908 = arith.subf %1514, %1518 : vector<8x128xf32>
    %1909 = arith.mulf %1513, %1518 : vector<8x128xf32>
    %1910 = arith.mulf %1514, %1517 : vector<8x128xf32>
    %1911 = arith.subf %1909, %1910 : vector<8x128xf32>
    %1912 = arith.mulf %1907, %1536 : vector<8x128xf32>
    %1913 = arith.mulf %1908, %1534 : vector<8x128xf32>
    %1914 = arith.subf %1912, %1913 : vector<8x128xf32>
    %1915 = tpu.reciprocal %1914 {approx = true} : vector<8x128xf32> -> vector<8x128xf32>
    %1916 = arith.mulf %1914, %1915 : vector<8x128xf32>
    %cst_336 = arith.constant 2.000000e+00 : f32
    %1917 = vector.broadcast %cst_336 : f32 to vector<8x128xf32>
    %1918 = arith.subf %1917, %1916 : vector<8x128xf32>
    %1919 = arith.mulf %1915, %1918 : vector<8x128xf32>
    %1920 = arith.mulf %1911, %1534 : vector<8x128xf32>
    %1921 = arith.mulf %1907, %1539 : vector<8x128xf32>
    %1922 = arith.subf %1920, %1921 : vector<8x128xf32>
    %1923 = arith.mulf %1922, %1919 : vector<8x128xf32>
    %1924 = arith.mulf %1911, %1536 : vector<8x128xf32>
    %1925 = arith.mulf %1908, %1539 : vector<8x128xf32>
    %1926 = arith.subf %1924, %1925 : vector<8x128xf32>
    %1927 = arith.mulf %1926, %1919 : vector<8x128xf32>
    %1928 = arith.xori %1906, %1802 : vector<8x128xi1>
    %c4_i32_337 = arith.constant 4 : i32
    %1929 = vector.broadcast %c4_i32_337 : i32 to vector<8x128xi32>
    %1930 = arith.cmpi sgt, %1530, %1929 : vector<8x128xi32>
    %1931 = arith.andi %1930, %1906 : vector<8x128xi1>
    %1932 = arith.andi %1930, %1928 : vector<8x128xi1>
    %1933 = arith.andi %1932, %1906 : vector<8x128xi1>
    %c8_i32_338 = arith.constant 8 : i32
    %1934 = vector.broadcast %c8_i32_338 : i32 to vector<8x128xi32>
    %1935 = arith.select %1932, %1899, %1934 : vector<8x128xi1>, vector<8x128xi32>
    %c0_i32_339 = arith.constant 0 : i32
    %1936 = vector.broadcast %c0_i32_339 : i32 to vector<8x128xi32>
    %1937 = arith.cmpi eq, %1935, %1936 : vector<8x128xi32>
    %1938 = arith.select %1937, %1923, %1866 : vector<8x128xi1>, vector<8x128xf32>
    %1939 = arith.select %1937, %1927, %1867 : vector<8x128xi1>, vector<8x128xf32>
    %c1_i32_340 = arith.constant 1 : i32
    %1940 = vector.broadcast %c1_i32_340 : i32 to vector<8x128xi32>
    %1941 = arith.cmpi eq, %1935, %1940 : vector<8x128xi32>
    %1942 = arith.select %1941, %1923, %1870 : vector<8x128xi1>, vector<8x128xf32>
    %1943 = arith.select %1941, %1927, %1871 : vector<8x128xi1>, vector<8x128xf32>
    %c2_i32_341 = arith.constant 2 : i32
    %1944 = vector.broadcast %c2_i32_341 : i32 to vector<8x128xi32>
    %1945 = arith.cmpi eq, %1935, %1944 : vector<8x128xi32>
    %1946 = arith.select %1945, %1923, %1874 : vector<8x128xi1>, vector<8x128xf32>
    %1947 = arith.select %1945, %1927, %1875 : vector<8x128xi1>, vector<8x128xf32>
    %c3_i32_342 = arith.constant 3 : i32
    %1948 = vector.broadcast %c3_i32_342 : i32 to vector<8x128xi32>
    %1949 = arith.cmpi eq, %1935, %1948 : vector<8x128xi32>
    %1950 = arith.select %1949, %1923, %1878 : vector<8x128xi1>, vector<8x128xf32>
    %1951 = arith.select %1949, %1927, %1879 : vector<8x128xi1>, vector<8x128xf32>
    %c4_i32_343 = arith.constant 4 : i32
    %1952 = vector.broadcast %c4_i32_343 : i32 to vector<8x128xi32>
    %1953 = arith.cmpi eq, %1935, %1952 : vector<8x128xi32>
    %1954 = arith.select %1953, %1923, %1882 : vector<8x128xi1>, vector<8x128xf32>
    %1955 = arith.select %1953, %1927, %1883 : vector<8x128xi1>, vector<8x128xf32>
    %c5_i32_344 = arith.constant 5 : i32
    %1956 = vector.broadcast %c5_i32_344 : i32 to vector<8x128xi32>
    %1957 = arith.cmpi eq, %1935, %1956 : vector<8x128xi32>
    %1958 = arith.select %1957, %1923, %1886 : vector<8x128xi1>, vector<8x128xf32>
    %1959 = arith.select %1957, %1927, %1887 : vector<8x128xi1>, vector<8x128xf32>
    %c6_i32_345 = arith.constant 6 : i32
    %1960 = vector.broadcast %c6_i32_345 : i32 to vector<8x128xi32>
    %1961 = arith.cmpi eq, %1935, %1960 : vector<8x128xi32>
    %1962 = arith.select %1961, %1923, %1890 : vector<8x128xi1>, vector<8x128xf32>
    %1963 = arith.select %1961, %1927, %1891 : vector<8x128xi1>, vector<8x128xf32>
    %c7_i32_346 = arith.constant 7 : i32
    %1964 = vector.broadcast %c7_i32_346 : i32 to vector<8x128xi32>
    %1965 = arith.cmpi eq, %1935, %1964 : vector<8x128xi32>
    %1966 = arith.select %1965, %1923, %1894 : vector<8x128xi1>, vector<8x128xf32>
    %1967 = arith.select %1965, %1927, %1895 : vector<8x128xi1>, vector<8x128xf32>
    %1968 = arith.extui %1933 : vector<8x128xi1> to vector<8x128xi32>
    %1969 = arith.addi %1899, %1968 : vector<8x128xi32>
    %c8_i32_347 = arith.constant 8 : i32
    %1970 = vector.broadcast %c8_i32_347 : i32 to vector<8x128xi32>
    %1971 = arith.select %1931, %1969, %1970 : vector<8x128xi1>, vector<8x128xi32>
    %c0_i32_348 = arith.constant 0 : i32
    %1972 = vector.broadcast %c0_i32_348 : i32 to vector<8x128xi32>
    %1973 = arith.cmpi eq, %1971, %1972 : vector<8x128xi32>
    %1974 = arith.select %1973, %1517, %1938 : vector<8x128xi1>, vector<8x128xf32>
    %1975 = arith.select %1973, %1518, %1939 : vector<8x128xi1>, vector<8x128xf32>
    %c1_i32_349 = arith.constant 1 : i32
    %1976 = vector.broadcast %c1_i32_349 : i32 to vector<8x128xi32>
    %1977 = arith.cmpi eq, %1971, %1976 : vector<8x128xi32>
    %1978 = arith.select %1977, %1517, %1942 : vector<8x128xi1>, vector<8x128xf32>
    %1979 = arith.select %1977, %1518, %1943 : vector<8x128xi1>, vector<8x128xf32>
    %c2_i32_350 = arith.constant 2 : i32
    %1980 = vector.broadcast %c2_i32_350 : i32 to vector<8x128xi32>
    %1981 = arith.cmpi eq, %1971, %1980 : vector<8x128xi32>
    %1982 = arith.select %1981, %1517, %1946 : vector<8x128xi1>, vector<8x128xf32>
    %1983 = arith.select %1981, %1518, %1947 : vector<8x128xi1>, vector<8x128xf32>
    %c3_i32_351 = arith.constant 3 : i32
    %1984 = vector.broadcast %c3_i32_351 : i32 to vector<8x128xi32>
    %1985 = arith.cmpi eq, %1971, %1984 : vector<8x128xi32>
    %1986 = arith.select %1985, %1517, %1950 : vector<8x128xi1>, vector<8x128xf32>
    %1987 = arith.select %1985, %1518, %1951 : vector<8x128xi1>, vector<8x128xf32>
    %c4_i32_352 = arith.constant 4 : i32
    %1988 = vector.broadcast %c4_i32_352 : i32 to vector<8x128xi32>
    %1989 = arith.cmpi eq, %1971, %1988 : vector<8x128xi32>
    %1990 = arith.select %1989, %1517, %1954 : vector<8x128xi1>, vector<8x128xf32>
    %1991 = arith.select %1989, %1518, %1955 : vector<8x128xi1>, vector<8x128xf32>
    %c5_i32_353 = arith.constant 5 : i32
    %1992 = vector.broadcast %c5_i32_353 : i32 to vector<8x128xi32>
    %1993 = arith.cmpi eq, %1971, %1992 : vector<8x128xi32>
    %1994 = arith.select %1993, %1517, %1958 : vector<8x128xi1>, vector<8x128xf32>
    %1995 = arith.select %1993, %1518, %1959 : vector<8x128xi1>, vector<8x128xf32>
    %c6_i32_354 = arith.constant 6 : i32
    %1996 = vector.broadcast %c6_i32_354 : i32 to vector<8x128xi32>
    %1997 = arith.cmpi eq, %1971, %1996 : vector<8x128xi32>
    %1998 = arith.select %1997, %1517, %1962 : vector<8x128xi1>, vector<8x128xf32>
    %1999 = arith.select %1997, %1518, %1963 : vector<8x128xi1>, vector<8x128xf32>
    %c7_i32_355 = arith.constant 7 : i32
    %2000 = vector.broadcast %c7_i32_355 : i32 to vector<8x128xi32>
    %2001 = arith.cmpi eq, %1971, %2000 : vector<8x128xi32>
    %2002 = arith.select %2001, %1517, %1966 : vector<8x128xi1>, vector<8x128xf32>
    %2003 = arith.select %2001, %1518, %1967 : vector<8x128xi1>, vector<8x128xf32>
    %2004 = arith.extui %1932 : vector<8x128xi1> to vector<8x128xi32>
    %2005 = arith.addi %1899, %2004 : vector<8x128xi32>
    %2006 = arith.extui %1931 : vector<8x128xi1> to vector<8x128xi32>
    %2007 = arith.addi %2005, %2006 : vector<8x128xi32>
    %2008 = arith.subf %1522, %192 : vector<8x128xf32>
    %2009 = arith.mulf %1531, %2008 : vector<8x128xf32>
    %2010 = arith.subf %1521, %188 : vector<8x128xf32>
    %2011 = arith.mulf %1532, %2010 : vector<8x128xf32>
    %2012 = arith.subf %2009, %2011 : vector<8x128xf32>
    %cst_356 = arith.constant 0.000000e+00 : f32
    %2013 = vector.broadcast %cst_356 : f32 to vector<8x128xf32>
    %2014 = arith.cmpf ole, %2012, %2013 : vector<8x128xf32>
    %2015 = arith.subf %1517, %1521 : vector<8x128xf32>
    %2016 = arith.subf %1518, %1522 : vector<8x128xf32>
    %2017 = arith.mulf %1517, %1522 : vector<8x128xf32>
    %2018 = arith.mulf %1518, %1521 : vector<8x128xf32>
    %2019 = arith.subf %2017, %2018 : vector<8x128xf32>
    %2020 = arith.mulf %2015, %1536 : vector<8x128xf32>
    %2021 = arith.mulf %2016, %1534 : vector<8x128xf32>
    %2022 = arith.subf %2020, %2021 : vector<8x128xf32>
    %2023 = tpu.reciprocal %2022 {approx = true} : vector<8x128xf32> -> vector<8x128xf32>
    %2024 = arith.mulf %2022, %2023 : vector<8x128xf32>
    %cst_357 = arith.constant 2.000000e+00 : f32
    %2025 = vector.broadcast %cst_357 : f32 to vector<8x128xf32>
    %2026 = arith.subf %2025, %2024 : vector<8x128xf32>
    %2027 = arith.mulf %2023, %2026 : vector<8x128xf32>
    %2028 = arith.mulf %2019, %1534 : vector<8x128xf32>
    %2029 = arith.mulf %2015, %1539 : vector<8x128xf32>
    %2030 = arith.subf %2028, %2029 : vector<8x128xf32>
    %2031 = arith.mulf %2030, %2027 : vector<8x128xf32>
    %2032 = arith.mulf %2019, %1536 : vector<8x128xf32>
    %2033 = arith.mulf %2016, %1539 : vector<8x128xf32>
    %2034 = arith.subf %2032, %2033 : vector<8x128xf32>
    %2035 = arith.mulf %2034, %2027 : vector<8x128xf32>
    %2036 = arith.xori %2014, %1906 : vector<8x128xi1>
    %c5_i32_358 = arith.constant 5 : i32
    %2037 = vector.broadcast %c5_i32_358 : i32 to vector<8x128xi32>
    %2038 = arith.cmpi sgt, %1530, %2037 : vector<8x128xi32>
    %2039 = arith.andi %2038, %2014 : vector<8x128xi1>
    %2040 = arith.andi %2038, %2036 : vector<8x128xi1>
    %2041 = arith.andi %2040, %2014 : vector<8x128xi1>
    %c8_i32_359 = arith.constant 8 : i32
    %2042 = vector.broadcast %c8_i32_359 : i32 to vector<8x128xi32>
    %2043 = arith.select %2040, %2007, %2042 : vector<8x128xi1>, vector<8x128xi32>
    %c0_i32_360 = arith.constant 0 : i32
    %2044 = vector.broadcast %c0_i32_360 : i32 to vector<8x128xi32>
    %2045 = arith.cmpi eq, %2043, %2044 : vector<8x128xi32>
    %2046 = arith.select %2045, %2031, %1974 : vector<8x128xi1>, vector<8x128xf32>
    %2047 = arith.select %2045, %2035, %1975 : vector<8x128xi1>, vector<8x128xf32>
    %c1_i32_361 = arith.constant 1 : i32
    %2048 = vector.broadcast %c1_i32_361 : i32 to vector<8x128xi32>
    %2049 = arith.cmpi eq, %2043, %2048 : vector<8x128xi32>
    %2050 = arith.select %2049, %2031, %1978 : vector<8x128xi1>, vector<8x128xf32>
    %2051 = arith.select %2049, %2035, %1979 : vector<8x128xi1>, vector<8x128xf32>
    %c2_i32_362 = arith.constant 2 : i32
    %2052 = vector.broadcast %c2_i32_362 : i32 to vector<8x128xi32>
    %2053 = arith.cmpi eq, %2043, %2052 : vector<8x128xi32>
    %2054 = arith.select %2053, %2031, %1982 : vector<8x128xi1>, vector<8x128xf32>
    %2055 = arith.select %2053, %2035, %1983 : vector<8x128xi1>, vector<8x128xf32>
    %c3_i32_363 = arith.constant 3 : i32
    %2056 = vector.broadcast %c3_i32_363 : i32 to vector<8x128xi32>
    %2057 = arith.cmpi eq, %2043, %2056 : vector<8x128xi32>
    %2058 = arith.select %2057, %2031, %1986 : vector<8x128xi1>, vector<8x128xf32>
    %2059 = arith.select %2057, %2035, %1987 : vector<8x128xi1>, vector<8x128xf32>
    %c4_i32_364 = arith.constant 4 : i32
    %2060 = vector.broadcast %c4_i32_364 : i32 to vector<8x128xi32>
    %2061 = arith.cmpi eq, %2043, %2060 : vector<8x128xi32>
    %2062 = arith.select %2061, %2031, %1990 : vector<8x128xi1>, vector<8x128xf32>
    %2063 = arith.select %2061, %2035, %1991 : vector<8x128xi1>, vector<8x128xf32>
    %c5_i32_365 = arith.constant 5 : i32
    %2064 = vector.broadcast %c5_i32_365 : i32 to vector<8x128xi32>
    %2065 = arith.cmpi eq, %2043, %2064 : vector<8x128xi32>
    %2066 = arith.select %2065, %2031, %1994 : vector<8x128xi1>, vector<8x128xf32>
    %2067 = arith.select %2065, %2035, %1995 : vector<8x128xi1>, vector<8x128xf32>
    %c6_i32_366 = arith.constant 6 : i32
    %2068 = vector.broadcast %c6_i32_366 : i32 to vector<8x128xi32>
    %2069 = arith.cmpi eq, %2043, %2068 : vector<8x128xi32>
    %2070 = arith.select %2069, %2031, %1998 : vector<8x128xi1>, vector<8x128xf32>
    %2071 = arith.select %2069, %2035, %1999 : vector<8x128xi1>, vector<8x128xf32>
    %c7_i32_367 = arith.constant 7 : i32
    %2072 = vector.broadcast %c7_i32_367 : i32 to vector<8x128xi32>
    %2073 = arith.cmpi eq, %2043, %2072 : vector<8x128xi32>
    %2074 = arith.select %2073, %2031, %2002 : vector<8x128xi1>, vector<8x128xf32>
    %2075 = arith.select %2073, %2035, %2003 : vector<8x128xi1>, vector<8x128xf32>
    %2076 = arith.extui %2041 : vector<8x128xi1> to vector<8x128xi32>
    %2077 = arith.addi %2007, %2076 : vector<8x128xi32>
    %c8_i32_368 = arith.constant 8 : i32
    %2078 = vector.broadcast %c8_i32_368 : i32 to vector<8x128xi32>
    %2079 = arith.select %2039, %2077, %2078 : vector<8x128xi1>, vector<8x128xi32>
    %c0_i32_369 = arith.constant 0 : i32
    %2080 = vector.broadcast %c0_i32_369 : i32 to vector<8x128xi32>
    %2081 = arith.cmpi eq, %2079, %2080 : vector<8x128xi32>
    %2082 = arith.select %2081, %1521, %2046 : vector<8x128xi1>, vector<8x128xf32>
    %2083 = arith.select %2081, %1522, %2047 : vector<8x128xi1>, vector<8x128xf32>
    %c1_i32_370 = arith.constant 1 : i32
    %2084 = vector.broadcast %c1_i32_370 : i32 to vector<8x128xi32>
    %2085 = arith.cmpi eq, %2079, %2084 : vector<8x128xi32>
    %2086 = arith.select %2085, %1521, %2050 : vector<8x128xi1>, vector<8x128xf32>
    %2087 = arith.select %2085, %1522, %2051 : vector<8x128xi1>, vector<8x128xf32>
    %c2_i32_371 = arith.constant 2 : i32
    %2088 = vector.broadcast %c2_i32_371 : i32 to vector<8x128xi32>
    %2089 = arith.cmpi eq, %2079, %2088 : vector<8x128xi32>
    %2090 = arith.select %2089, %1521, %2054 : vector<8x128xi1>, vector<8x128xf32>
    %2091 = arith.select %2089, %1522, %2055 : vector<8x128xi1>, vector<8x128xf32>
    %c3_i32_372 = arith.constant 3 : i32
    %2092 = vector.broadcast %c3_i32_372 : i32 to vector<8x128xi32>
    %2093 = arith.cmpi eq, %2079, %2092 : vector<8x128xi32>
    %2094 = arith.select %2093, %1521, %2058 : vector<8x128xi1>, vector<8x128xf32>
    %2095 = arith.select %2093, %1522, %2059 : vector<8x128xi1>, vector<8x128xf32>
    %c4_i32_373 = arith.constant 4 : i32
    %2096 = vector.broadcast %c4_i32_373 : i32 to vector<8x128xi32>
    %2097 = arith.cmpi eq, %2079, %2096 : vector<8x128xi32>
    %2098 = arith.select %2097, %1521, %2062 : vector<8x128xi1>, vector<8x128xf32>
    %2099 = arith.select %2097, %1522, %2063 : vector<8x128xi1>, vector<8x128xf32>
    %c5_i32_374 = arith.constant 5 : i32
    %2100 = vector.broadcast %c5_i32_374 : i32 to vector<8x128xi32>
    %2101 = arith.cmpi eq, %2079, %2100 : vector<8x128xi32>
    %2102 = arith.select %2101, %1521, %2066 : vector<8x128xi1>, vector<8x128xf32>
    %2103 = arith.select %2101, %1522, %2067 : vector<8x128xi1>, vector<8x128xf32>
    %c6_i32_375 = arith.constant 6 : i32
    %2104 = vector.broadcast %c6_i32_375 : i32 to vector<8x128xi32>
    %2105 = arith.cmpi eq, %2079, %2104 : vector<8x128xi32>
    %2106 = arith.select %2105, %1521, %2070 : vector<8x128xi1>, vector<8x128xf32>
    %2107 = arith.select %2105, %1522, %2071 : vector<8x128xi1>, vector<8x128xf32>
    %c7_i32_376 = arith.constant 7 : i32
    %2108 = vector.broadcast %c7_i32_376 : i32 to vector<8x128xi32>
    %2109 = arith.cmpi eq, %2079, %2108 : vector<8x128xi32>
    %2110 = arith.select %2109, %1521, %2074 : vector<8x128xi1>, vector<8x128xf32>
    %2111 = arith.select %2109, %1522, %2075 : vector<8x128xi1>, vector<8x128xf32>
    %2112 = arith.extui %2040 : vector<8x128xi1> to vector<8x128xi32>
    %2113 = arith.addi %2007, %2112 : vector<8x128xi32>
    %2114 = arith.extui %2039 : vector<8x128xi1> to vector<8x128xi32>
    %2115 = arith.addi %2113, %2114 : vector<8x128xi32>
    %2116 = arith.subf %1526, %192 : vector<8x128xf32>
    %2117 = arith.mulf %1531, %2116 : vector<8x128xf32>
    %2118 = arith.subf %1525, %188 : vector<8x128xf32>
    %2119 = arith.mulf %1532, %2118 : vector<8x128xf32>
    %2120 = arith.subf %2117, %2119 : vector<8x128xf32>
    %cst_377 = arith.constant 0.000000e+00 : f32
    %2121 = vector.broadcast %cst_377 : f32 to vector<8x128xf32>
    %2122 = arith.cmpf ole, %2120, %2121 : vector<8x128xf32>
    %2123 = arith.subf %1521, %1525 : vector<8x128xf32>
    %2124 = arith.subf %1522, %1526 : vector<8x128xf32>
    %2125 = arith.mulf %1521, %1526 : vector<8x128xf32>
    %2126 = arith.mulf %1522, %1525 : vector<8x128xf32>
    %2127 = arith.subf %2125, %2126 : vector<8x128xf32>
    %2128 = arith.mulf %2123, %1536 : vector<8x128xf32>
    %2129 = arith.mulf %2124, %1534 : vector<8x128xf32>
    %2130 = arith.subf %2128, %2129 : vector<8x128xf32>
    %2131 = tpu.reciprocal %2130 {approx = true} : vector<8x128xf32> -> vector<8x128xf32>
    %2132 = arith.mulf %2130, %2131 : vector<8x128xf32>
    %cst_378 = arith.constant 2.000000e+00 : f32
    %2133 = vector.broadcast %cst_378 : f32 to vector<8x128xf32>
    %2134 = arith.subf %2133, %2132 : vector<8x128xf32>
    %2135 = arith.mulf %2131, %2134 : vector<8x128xf32>
    %2136 = arith.mulf %2127, %1534 : vector<8x128xf32>
    %2137 = arith.mulf %2123, %1539 : vector<8x128xf32>
    %2138 = arith.subf %2136, %2137 : vector<8x128xf32>
    %2139 = arith.mulf %2138, %2135 : vector<8x128xf32>
    %2140 = arith.mulf %2127, %1536 : vector<8x128xf32>
    %2141 = arith.mulf %2124, %1539 : vector<8x128xf32>
    %2142 = arith.subf %2140, %2141 : vector<8x128xf32>
    %2143 = arith.mulf %2142, %2135 : vector<8x128xf32>
    %2144 = arith.xori %2122, %2014 : vector<8x128xi1>
    %c6_i32_379 = arith.constant 6 : i32
    %2145 = vector.broadcast %c6_i32_379 : i32 to vector<8x128xi32>
    %2146 = arith.cmpi sgt, %1530, %2145 : vector<8x128xi32>
    %2147 = arith.andi %2146, %2122 : vector<8x128xi1>
    %2148 = arith.andi %2146, %2144 : vector<8x128xi1>
    %2149 = arith.andi %2148, %2122 : vector<8x128xi1>
    %c8_i32_380 = arith.constant 8 : i32
    %2150 = vector.broadcast %c8_i32_380 : i32 to vector<8x128xi32>
    %2151 = arith.select %2148, %2115, %2150 : vector<8x128xi1>, vector<8x128xi32>
    %c0_i32_381 = arith.constant 0 : i32
    %2152 = vector.broadcast %c0_i32_381 : i32 to vector<8x128xi32>
    %2153 = arith.cmpi eq, %2151, %2152 : vector<8x128xi32>
    %2154 = arith.select %2153, %2139, %2082 : vector<8x128xi1>, vector<8x128xf32>
    %2155 = arith.select %2153, %2143, %2083 : vector<8x128xi1>, vector<8x128xf32>
    %c1_i32_382 = arith.constant 1 : i32
    %2156 = vector.broadcast %c1_i32_382 : i32 to vector<8x128xi32>
    %2157 = arith.cmpi eq, %2151, %2156 : vector<8x128xi32>
    %2158 = arith.select %2157, %2139, %2086 : vector<8x128xi1>, vector<8x128xf32>
    %2159 = arith.select %2157, %2143, %2087 : vector<8x128xi1>, vector<8x128xf32>
    %c2_i32_383 = arith.constant 2 : i32
    %2160 = vector.broadcast %c2_i32_383 : i32 to vector<8x128xi32>
    %2161 = arith.cmpi eq, %2151, %2160 : vector<8x128xi32>
    %2162 = arith.select %2161, %2139, %2090 : vector<8x128xi1>, vector<8x128xf32>
    %2163 = arith.select %2161, %2143, %2091 : vector<8x128xi1>, vector<8x128xf32>
    %c3_i32_384 = arith.constant 3 : i32
    %2164 = vector.broadcast %c3_i32_384 : i32 to vector<8x128xi32>
    %2165 = arith.cmpi eq, %2151, %2164 : vector<8x128xi32>
    %2166 = arith.select %2165, %2139, %2094 : vector<8x128xi1>, vector<8x128xf32>
    %2167 = arith.select %2165, %2143, %2095 : vector<8x128xi1>, vector<8x128xf32>
    %c4_i32_385 = arith.constant 4 : i32
    %2168 = vector.broadcast %c4_i32_385 : i32 to vector<8x128xi32>
    %2169 = arith.cmpi eq, %2151, %2168 : vector<8x128xi32>
    %2170 = arith.select %2169, %2139, %2098 : vector<8x128xi1>, vector<8x128xf32>
    %2171 = arith.select %2169, %2143, %2099 : vector<8x128xi1>, vector<8x128xf32>
    %c5_i32_386 = arith.constant 5 : i32
    %2172 = vector.broadcast %c5_i32_386 : i32 to vector<8x128xi32>
    %2173 = arith.cmpi eq, %2151, %2172 : vector<8x128xi32>
    %2174 = arith.select %2173, %2139, %2102 : vector<8x128xi1>, vector<8x128xf32>
    %2175 = arith.select %2173, %2143, %2103 : vector<8x128xi1>, vector<8x128xf32>
    %c6_i32_387 = arith.constant 6 : i32
    %2176 = vector.broadcast %c6_i32_387 : i32 to vector<8x128xi32>
    %2177 = arith.cmpi eq, %2151, %2176 : vector<8x128xi32>
    %2178 = arith.select %2177, %2139, %2106 : vector<8x128xi1>, vector<8x128xf32>
    %2179 = arith.select %2177, %2143, %2107 : vector<8x128xi1>, vector<8x128xf32>
    %c7_i32_388 = arith.constant 7 : i32
    %2180 = vector.broadcast %c7_i32_388 : i32 to vector<8x128xi32>
    %2181 = arith.cmpi eq, %2151, %2180 : vector<8x128xi32>
    %2182 = arith.select %2181, %2139, %2110 : vector<8x128xi1>, vector<8x128xf32>
    %2183 = arith.select %2181, %2143, %2111 : vector<8x128xi1>, vector<8x128xf32>
    %2184 = arith.extui %2149 : vector<8x128xi1> to vector<8x128xi32>
    %2185 = arith.addi %2115, %2184 : vector<8x128xi32>
    %c8_i32_389 = arith.constant 8 : i32
    %2186 = vector.broadcast %c8_i32_389 : i32 to vector<8x128xi32>
    %2187 = arith.select %2147, %2185, %2186 : vector<8x128xi1>, vector<8x128xi32>
    %c0_i32_390 = arith.constant 0 : i32
    %2188 = vector.broadcast %c0_i32_390 : i32 to vector<8x128xi32>
    %2189 = arith.cmpi eq, %2187, %2188 : vector<8x128xi32>
    %2190 = arith.select %2189, %1525, %2154 : vector<8x128xi1>, vector<8x128xf32>
    %2191 = arith.select %2189, %1526, %2155 : vector<8x128xi1>, vector<8x128xf32>
    %c1_i32_391 = arith.constant 1 : i32
    %2192 = vector.broadcast %c1_i32_391 : i32 to vector<8x128xi32>
    %2193 = arith.cmpi eq, %2187, %2192 : vector<8x128xi32>
    %2194 = arith.select %2193, %1525, %2158 : vector<8x128xi1>, vector<8x128xf32>
    %2195 = arith.select %2193, %1526, %2159 : vector<8x128xi1>, vector<8x128xf32>
    %c2_i32_392 = arith.constant 2 : i32
    %2196 = vector.broadcast %c2_i32_392 : i32 to vector<8x128xi32>
    %2197 = arith.cmpi eq, %2187, %2196 : vector<8x128xi32>
    %2198 = arith.select %2197, %1525, %2162 : vector<8x128xi1>, vector<8x128xf32>
    %2199 = arith.select %2197, %1526, %2163 : vector<8x128xi1>, vector<8x128xf32>
    %c3_i32_393 = arith.constant 3 : i32
    %2200 = vector.broadcast %c3_i32_393 : i32 to vector<8x128xi32>
    %2201 = arith.cmpi eq, %2187, %2200 : vector<8x128xi32>
    %2202 = arith.select %2201, %1525, %2166 : vector<8x128xi1>, vector<8x128xf32>
    %2203 = arith.select %2201, %1526, %2167 : vector<8x128xi1>, vector<8x128xf32>
    %c4_i32_394 = arith.constant 4 : i32
    %2204 = vector.broadcast %c4_i32_394 : i32 to vector<8x128xi32>
    %2205 = arith.cmpi eq, %2187, %2204 : vector<8x128xi32>
    %2206 = arith.select %2205, %1525, %2170 : vector<8x128xi1>, vector<8x128xf32>
    %2207 = arith.select %2205, %1526, %2171 : vector<8x128xi1>, vector<8x128xf32>
    %c5_i32_395 = arith.constant 5 : i32
    %2208 = vector.broadcast %c5_i32_395 : i32 to vector<8x128xi32>
    %2209 = arith.cmpi eq, %2187, %2208 : vector<8x128xi32>
    %2210 = arith.select %2209, %1525, %2174 : vector<8x128xi1>, vector<8x128xf32>
    %2211 = arith.select %2209, %1526, %2175 : vector<8x128xi1>, vector<8x128xf32>
    %c6_i32_396 = arith.constant 6 : i32
    %2212 = vector.broadcast %c6_i32_396 : i32 to vector<8x128xi32>
    %2213 = arith.cmpi eq, %2187, %2212 : vector<8x128xi32>
    %2214 = arith.select %2213, %1525, %2178 : vector<8x128xi1>, vector<8x128xf32>
    %2215 = arith.select %2213, %1526, %2179 : vector<8x128xi1>, vector<8x128xf32>
    %c7_i32_397 = arith.constant 7 : i32
    %2216 = vector.broadcast %c7_i32_397 : i32 to vector<8x128xi32>
    %2217 = arith.cmpi eq, %2187, %2216 : vector<8x128xi32>
    %2218 = arith.select %2217, %1525, %2182 : vector<8x128xi1>, vector<8x128xf32>
    %2219 = arith.select %2217, %1526, %2183 : vector<8x128xi1>, vector<8x128xf32>
    %2220 = arith.extui %2148 : vector<8x128xi1> to vector<8x128xi32>
    %2221 = arith.addi %2115, %2220 : vector<8x128xi32>
    %2222 = arith.extui %2147 : vector<8x128xi1> to vector<8x128xi32>
    %2223 = arith.addi %2221, %2222 : vector<8x128xi32>
    %c0_i32_398 = arith.constant 0 : i32
    %2224 = vector.broadcast %c0_i32_398 : i32 to vector<8x128xi32>
    %2225 = arith.cmpi sgt, %2223, %2224 : vector<8x128xi32>
    %c1_i32_399 = arith.constant 1 : i32
    %2226 = vector.broadcast %c1_i32_399 : i32 to vector<8x128xi32>
    %2227 = arith.subi %2223, %2226 : vector<8x128xi32>
    %cst_400 = arith.constant 0.000000e+00 : f32
    %2228 = vector.broadcast %cst_400 : f32 to vector<8x128xf32>
    %cst_401 = arith.constant 0.000000e+00 : f32
    %2229 = vector.broadcast %cst_401 : f32 to vector<8x128xf32>
    %c0_i32_402 = arith.constant 0 : i32
    %2230 = vector.broadcast %c0_i32_402 : i32 to vector<8x128xi32>
    %2231 = arith.cmpi eq, %2227, %2230 : vector<8x128xi32>
    %2232 = arith.select %2231, %2190, %2228 : vector<8x128xi1>, vector<8x128xf32>
    %2233 = arith.select %2231, %2191, %2229 : vector<8x128xi1>, vector<8x128xf32>
    %c1_i32_403 = arith.constant 1 : i32
    %2234 = vector.broadcast %c1_i32_403 : i32 to vector<8x128xi32>
    %2235 = arith.cmpi eq, %2227, %2234 : vector<8x128xi32>
    %2236 = arith.select %2235, %2194, %2232 : vector<8x128xi1>, vector<8x128xf32>
    %2237 = arith.select %2235, %2195, %2233 : vector<8x128xi1>, vector<8x128xf32>
    %c2_i32_404 = arith.constant 2 : i32
    %2238 = vector.broadcast %c2_i32_404 : i32 to vector<8x128xi32>
    %2239 = arith.cmpi eq, %2227, %2238 : vector<8x128xi32>
    %2240 = arith.select %2239, %2198, %2236 : vector<8x128xi1>, vector<8x128xf32>
    %2241 = arith.select %2239, %2199, %2237 : vector<8x128xi1>, vector<8x128xf32>
    %c3_i32_405 = arith.constant 3 : i32
    %2242 = vector.broadcast %c3_i32_405 : i32 to vector<8x128xi32>
    %2243 = arith.cmpi eq, %2227, %2242 : vector<8x128xi32>
    %2244 = arith.select %2243, %2202, %2240 : vector<8x128xi1>, vector<8x128xf32>
    %2245 = arith.select %2243, %2203, %2241 : vector<8x128xi1>, vector<8x128xf32>
    %c4_i32_406 = arith.constant 4 : i32
    %2246 = vector.broadcast %c4_i32_406 : i32 to vector<8x128xi32>
    %2247 = arith.cmpi eq, %2227, %2246 : vector<8x128xi32>
    %2248 = arith.select %2247, %2206, %2244 : vector<8x128xi1>, vector<8x128xf32>
    %2249 = arith.select %2247, %2207, %2245 : vector<8x128xi1>, vector<8x128xf32>
    %c5_i32_407 = arith.constant 5 : i32
    %2250 = vector.broadcast %c5_i32_407 : i32 to vector<8x128xi32>
    %2251 = arith.cmpi eq, %2227, %2250 : vector<8x128xi32>
    %2252 = arith.select %2251, %2210, %2248 : vector<8x128xi1>, vector<8x128xf32>
    %2253 = arith.select %2251, %2211, %2249 : vector<8x128xi1>, vector<8x128xf32>
    %c6_i32_408 = arith.constant 6 : i32
    %2254 = vector.broadcast %c6_i32_408 : i32 to vector<8x128xi32>
    %2255 = arith.cmpi eq, %2227, %2254 : vector<8x128xi32>
    %2256 = arith.select %2255, %2214, %2252 : vector<8x128xi1>, vector<8x128xf32>
    %2257 = arith.select %2255, %2215, %2253 : vector<8x128xi1>, vector<8x128xf32>
    %c7_i32_409 = arith.constant 7 : i32
    %2258 = vector.broadcast %c7_i32_409 : i32 to vector<8x128xi32>
    %2259 = arith.cmpi eq, %2227, %2258 : vector<8x128xi32>
    %2260 = arith.select %2259, %2218, %2256 : vector<8x128xi1>, vector<8x128xf32>
    %2261 = arith.select %2259, %2219, %2257 : vector<8x128xi1>, vector<8x128xf32>
    %2262 = arith.mulf %2190, %2261 : vector<8x128xf32>
    %2263 = arith.mulf %2191, %2260 : vector<8x128xf32>
    %2264 = arith.subf %2262, %2263 : vector<8x128xf32>
    %cst_410 = arith.constant 0.000000e+00 : f32
    %2265 = vector.broadcast %cst_410 : f32 to vector<8x128xf32>
    %2266 = arith.select %2225, %2264, %2265 : vector<8x128xi1>, vector<8x128xf32>
    %2267 = arith.addf %52, %2266 : vector<8x128xf32>
    %c1_i32_411 = arith.constant 1 : i32
    %2268 = vector.broadcast %c1_i32_411 : i32 to vector<8x128xi32>
    %2269 = arith.cmpi sgt, %2223, %2268 : vector<8x128xi32>
    %2270 = arith.mulf %2194, %2191 : vector<8x128xf32>
    %2271 = arith.mulf %2195, %2190 : vector<8x128xf32>
    %2272 = arith.subf %2270, %2271 : vector<8x128xf32>
    %cst_412 = arith.constant 0.000000e+00 : f32
    %2273 = vector.broadcast %cst_412 : f32 to vector<8x128xf32>
    %2274 = arith.select %2269, %2272, %2273 : vector<8x128xi1>, vector<8x128xf32>
    %2275 = arith.addf %2267, %2274 : vector<8x128xf32>
    %c2_i32_413 = arith.constant 2 : i32
    %2276 = vector.broadcast %c2_i32_413 : i32 to vector<8x128xi32>
    %2277 = arith.cmpi sgt, %2223, %2276 : vector<8x128xi32>
    %2278 = arith.mulf %2198, %2195 : vector<8x128xf32>
    %2279 = arith.mulf %2199, %2194 : vector<8x128xf32>
    %2280 = arith.subf %2278, %2279 : vector<8x128xf32>
    %cst_414 = arith.constant 0.000000e+00 : f32
    %2281 = vector.broadcast %cst_414 : f32 to vector<8x128xf32>
    %2282 = arith.select %2277, %2280, %2281 : vector<8x128xi1>, vector<8x128xf32>
    %2283 = arith.addf %2275, %2282 : vector<8x128xf32>
    %c3_i32_415 = arith.constant 3 : i32
    %2284 = vector.broadcast %c3_i32_415 : i32 to vector<8x128xi32>
    %2285 = arith.cmpi sgt, %2223, %2284 : vector<8x128xi32>
    %2286 = arith.mulf %2202, %2199 : vector<8x128xf32>
    %2287 = arith.mulf %2203, %2198 : vector<8x128xf32>
    %2288 = arith.subf %2286, %2287 : vector<8x128xf32>
    %cst_416 = arith.constant 0.000000e+00 : f32
    %2289 = vector.broadcast %cst_416 : f32 to vector<8x128xf32>
    %2290 = arith.select %2285, %2288, %2289 : vector<8x128xi1>, vector<8x128xf32>
    %2291 = arith.addf %2283, %2290 : vector<8x128xf32>
    %c4_i32_417 = arith.constant 4 : i32
    %2292 = vector.broadcast %c4_i32_417 : i32 to vector<8x128xi32>
    %2293 = arith.cmpi sgt, %2223, %2292 : vector<8x128xi32>
    %2294 = arith.mulf %2206, %2203 : vector<8x128xf32>
    %2295 = arith.mulf %2207, %2202 : vector<8x128xf32>
    %2296 = arith.subf %2294, %2295 : vector<8x128xf32>
    %cst_418 = arith.constant 0.000000e+00 : f32
    %2297 = vector.broadcast %cst_418 : f32 to vector<8x128xf32>
    %2298 = arith.select %2293, %2296, %2297 : vector<8x128xi1>, vector<8x128xf32>
    %2299 = arith.addf %2291, %2298 : vector<8x128xf32>
    %c5_i32_419 = arith.constant 5 : i32
    %2300 = vector.broadcast %c5_i32_419 : i32 to vector<8x128xi32>
    %2301 = arith.cmpi sgt, %2223, %2300 : vector<8x128xi32>
    %2302 = arith.mulf %2210, %2207 : vector<8x128xf32>
    %2303 = arith.mulf %2211, %2206 : vector<8x128xf32>
    %2304 = arith.subf %2302, %2303 : vector<8x128xf32>
    %cst_420 = arith.constant 0.000000e+00 : f32
    %2305 = vector.broadcast %cst_420 : f32 to vector<8x128xf32>
    %2306 = arith.select %2301, %2304, %2305 : vector<8x128xi1>, vector<8x128xf32>
    %2307 = arith.addf %2299, %2306 : vector<8x128xf32>
    %c6_i32_421 = arith.constant 6 : i32
    %2308 = vector.broadcast %c6_i32_421 : i32 to vector<8x128xi32>
    %2309 = arith.cmpi sgt, %2223, %2308 : vector<8x128xi32>
    %2310 = arith.mulf %2214, %2211 : vector<8x128xf32>
    %2311 = arith.mulf %2215, %2210 : vector<8x128xf32>
    %2312 = arith.subf %2310, %2311 : vector<8x128xf32>
    %cst_422 = arith.constant 0.000000e+00 : f32
    %2313 = vector.broadcast %cst_422 : f32 to vector<8x128xf32>
    %2314 = arith.select %2309, %2312, %2313 : vector<8x128xi1>, vector<8x128xf32>
    %2315 = arith.addf %2307, %2314 : vector<8x128xf32>
    %c7_i32_423 = arith.constant 7 : i32
    %2316 = vector.broadcast %c7_i32_423 : i32 to vector<8x128xi32>
    %2317 = arith.cmpi sgt, %2223, %2316 : vector<8x128xi32>
    %2318 = arith.mulf %2218, %2215 : vector<8x128xf32>
    %2319 = arith.mulf %2219, %2214 : vector<8x128xf32>
    %2320 = arith.subf %2318, %2319 : vector<8x128xf32>
    %cst_424 = arith.constant 0.000000e+00 : f32
    %2321 = vector.broadcast %cst_424 : f32 to vector<8x128xf32>
    %2322 = arith.select %2317, %2320, %2321 : vector<8x128xi1>, vector<8x128xf32>
    %2323 = arith.addf %2315, %2322 : vector<8x128xf32>
    %cst_425 = arith.constant 5.000000e-01 : f32
    %2324 = vector.broadcast %cst_425 : f32 to vector<8x128xf32>
    %2325 = arith.mulf %2323, %2324 : vector<8x128xf32>
    %2326 = math.absf %2325 : vector<8x128xf32>
    %2327 = arith.subf %231, %2326 : vector<8x128xf32>
    %cst_426 = arith.constant 1.000000e-16 : f32
    %2328 = vector.broadcast %cst_426 : f32 to vector<8x128xf32>
    %2329 = arith.addf %2327, %2328 : vector<8x128xf32>
    %2330 = arith.divf %2326, %2329 : vector<8x128xf32>
    %2331 = arith.index_cast %3 : i32 to index
    %c0_427 = arith.constant 0 : index
    %2332 = vector.load %arg3[%2331, %c0_427] : memref<8x128xf32, #tpu.memory_space<vmem>>, vector<8x128xf32>
    tpu.vector_store %arg3[%2331, %c0_427], %2330 {strides = array<i32>} : memref<8x128xf32, #tpu.memory_space<vmem>>, vector<8x128xf32>,
    %c1_i32_428 = arith.constant 1 : i32
    return
  }
  func.func @transform_0(%arg0: i32) -> (i32, i32, i32) {
    %c0_i32 = arith.constant 0 : i32
    %c0_i32_0 = arith.constant 0 : i32
    %c0_i32_1 = arith.constant 0 : i32
    return %c0_i32, %arg0, %c0_i32_0 : i32, i32, i32
  }
  func.func @transform_1(%arg0: i32) -> (i32, i32, i32) {
    %c0_i32 = arith.constant 0 : i32
    %c0_i32_0 = arith.constant 0 : i32
    %c0_i32_1 = arith.constant 0 : i32
    return %c0_i32, %arg0, %c0_i32_0 : i32, i32, i32
  }
  func.func @transform_2(%arg0: i32) -> (i32, i32) {
    %c0_i32 = arith.constant 0 : i32
    %c0_i32_0 = arith.constant 0 : i32
    return %arg0, %c0_i32 : i32, i32
  }
}

</mosaic_0001>

<llo_original>
// kernel: tpu_custom_call.1
$region0: #{tpu_custom_call.1}
  #allocation0 [shape = 'u32[]', space=smem, size = 0x4, offset = 0x4, fixed_abs, tag = 'smem constant byte address 0x4 - core index']
  #allocation1 [shape = 'u32[144,128]{1,0:T(1,128)}', space=vmem, size = 0x12000, scoped, tag = 'internal scratch']
  %s0 = inlined_call_operand.hbm [shape: f32[8,8,128], index: 0, kind: input, shape index: {}]
  %s1 = inlined_call_operand.hbm [shape: f32[8,8,128], index: 1, kind: input, shape index: {}]
  %s2 = inlined_call_operand.hbm [shape: f32[8,128], index: 2, kind: output, shape index: {}]
  %s3 = sld [smem:[#allocation0]]
  $region26: #{tpu_custom_call.1} parent=0
    _
  %s5 = ssub.s32 1, %s3
  %s6 = scalar_select 0, %s5, %s3
  $region1: #{tpu_custom_call.1} parent=0
    #allocation2 [shape = 'u8[32768]{0}', space=vmem, size = 0x8000, scoped, tag = 'input window, operand 0, single buffered']
    #allocation3 [shape = 's32[1]{0}', space=sflag, size = 0x4, scoped, tag = 'scoped memory for tpu_custom_call.1']
    #allocation4 [shape = 's32[1]{0}', space=sflag, size = 0x4, scoped, tag = 'scoped memory for tpu_custom_call.1']
    #allocation5 [shape = 'u8[32768]{0}', space=vmem, size = 0x8000, scoped, tag = 'input window, operand 1, single buffered']
    #allocation6 [shape = 's32[1]{0}', space=sflag, size = 0x4, scoped, tag = 'scoped memory for tpu_custom_call.1']
    #allocation7 [shape = 'u8[4096]{0}', space=vmem, size = 0x1000, scoped, tag = 'output window, operand 0, single buffered']
    %7 = vsyncpa [#allocation3], 0
    %8 = vsyncpa [#allocation6], 0
    %9 = vsyncpa [#allocation4], 0
    // Predicated region
    $region2: #{tpu_custom_call.1} parent=1 // pred_check
      _
    $region3: #{tpu_custom_call.1} parent=1 // pred_check_branch
      %11 = sbr.rel (0) target = $region5
    $region4: #{tpu_custom_call.1} parent=1 // pred_region
      %s13 = ssub.s32 1024, 1024
      %14 = vsyncadd [#allocation3], %s13
      %s15 = sshll.u32 [#allocation2], 4
      %s16 = int_to_ptr.vmem [resolvable:$true] %s15
      %21 = dma.hbm_to_vmem [thread:$0]  %s0, 1024, %s16, [#allocation3], 128, 128, 8
    $region5: #{tpu_custom_call.1} parent=1 // pred_fallthru
      _
    // Predicated region
    $region6: #{tpu_custom_call.1} parent=1 // pred_check
      _
    $region7: #{tpu_custom_call.1} parent=1 // pred_check_branch
      %23 = sbr.rel (0) target = $region9
    $region8: #{tpu_custom_call.1} parent=1 // pred_region
      %s25 = ssub.s32 1024, 1024
      %26 = vsyncadd [#allocation6], %s25
      %s27 = sshll.u32 [#allocation5], 4
      %s28 = int_to_ptr.vmem [resolvable:$true] %s27
      %33 = dma.hbm_to_vmem [thread:$0]  %s1, 1024, %s28, [#allocation6], 128, 128, 8
    $region9: #{tpu_custom_call.1} parent=1 // pred_fallthru
      _
    // Predicated region
    $region10: #{tpu_custom_call.1} parent=1 // pred_check
      _
    $region11: #{tpu_custom_call.1} parent=1 // pred_check_branch
      %35 = sbr.rel (0) target = $region13
    $region12: #{tpu_custom_call.1} parent=1 // pred_region
      %36 = dma.done [#allocation3], 1024
    $region13: #{tpu_custom_call.1} parent=1 // pred_fallthru
      _
    // Predicated region
    $region14: #{tpu_custom_call.1} parent=1 // pred_check
      _
    $region15: #{tpu_custom_call.1} parent=1 // pred_check_branch
      %38 = sbr.rel (0) target = $region17
    $region16: #{tpu_custom_call.1} parent=1 // pred_region
      %39 = dma.done [#allocation6], 1024
    $region17: #{tpu_custom_call.1} parent=1 // pred_fallthru
      _
    %v40 = vld [vmem:[#allocation2] sm:$0xff]
    %s41 = sadd.s32 0, 16
    %s42 = scalar_lea.vmem [#allocation2], %s41
    %v43 = vld [vmem:[%s42] sm:$0xff]
    %s44 = sadd.s32 0, 32
    %s45 = scalar_lea.vmem [#allocation2], %s44
    %v46 = vld [vmem:[%s45] sm:$0xff]
    %s47 = sadd.s32 0, 48
    %s48 = scalar_lea.vmem [#allocation2], %s47
    %v49 = vld [vmem:[%s48] sm:$0xff]
    %s50 = sadd.s32 0, 8
    %s51 = scalar_lea.vmem [#allocation2], %s50
    %v52 = vld [vmem:[%s51] sm:$0xff]
    %s53 = sadd.s32 0, 24
    %s54 = scalar_lea.vmem [#allocation2], %s53
    %v55 = vld [vmem:[%s54] sm:$0xff]
    %s56 = sadd.s32 0, 40
    %s57 = scalar_lea.vmem [#allocation2], %s56
    %v58 = vld [vmem:[%s57] sm:$0xff]
    %s59 = sadd.s32 0, 56
    %s60 = scalar_lea.vmem [#allocation2], %s59
    %v61 = vld [vmem:[%s60] sm:$0xff]
    %v62 = vld [vmem:[#allocation5] sm:$0xff]
    %s63 = scalar_lea.vmem [#allocation5], %s41
    %v64 = vld [vmem:[%s63] sm:$0xff]
    %s65 = scalar_lea.vmem [#allocation5], %s44
    %v66 = vld [vmem:[%s65] sm:$0xff]
    %s67 = scalar_lea.vmem [#allocation5], %s47
    %v68 = vld [vmem:[%s67] sm:$0xff]
    %s69 = scalar_lea.vmem [#allocation5], %s50
    %v70 = vld [vmem:[%s69] sm:$0xff]
    %s71 = scalar_lea.vmem [#allocation5], %s53
    %v72 = vld [vmem:[%s71] sm:$0xff]
    %s73 = scalar_lea.vmem [#allocation5], %s56
    %v74 = vld [vmem:[%s73] sm:$0xff]
    %s75 = scalar_lea.vmem [#allocation5], %s59
    %v76 = vld [vmem:[%s75] sm:$0xff]
    %v77 = vsub.f32 %v49, %v40
    %v78 = vsub.f32 %v61, %v52
    %v79 = vsub.f32 %v43, %v40
    %v80 = vsub.f32 %v55, %v52
    %v81 = vmul.f32 %v77, %v80
    %v82 = vmul.f32 %v78, %v79
    %v83 = vsub.f32 %v81, %v82
    %v84 = vsub.f32 %v40, %v43
    %v85 = vsub.f32 %v52, %v55
    %v86 = vsub.f32 %v46, %v43
    %v87 = vsub.f32 %v58, %v55
    %v88 = vmul.f32 %v84, %v87
    %v89 = vmul.f32 %v85, %v86
    %v90 = vsub.f32 %v88, %v89
    %v91 = vmul.f32 %v83, %v90
    %v92 = vsub.f32 %v43, %v46
    %v93 = vsub.f32 %v55, %v58
    %v94 = vsub.f32 %v49, %v46
    %v95 = vsub.f32 %v61, %v58
    %v96 = vmul.f32 %v92, %v95
    %v97 = vmul.f32 %v93, %v94
    %v98 = vsub.f32 %v96, %v97
    %v99 = vmul.f32 %v91, %v98
    %v100 = vsub.f32 %v46, %v49
    %v101 = vsub.f32 %v58, %v61
    %v102 = vsub.f32 %v40, %v49
    %v103 = vsub.f32 %v52, %v61
    %v104 = vmul.f32 %v100, %v103
    %v105 = vmul.f32 %v101, %v102
    %v106 = vsub.f32 %v104, %v105
    %v107 = vmul.f32 %v99, %v106
    %vm108 = vcmp.lt.f32.partialorder %v107, 0.0
    %v109 = vmin.f32 %v40, %v43
    %v110 = vmin.f32 %v46, %v49
    %v111 = vmin.f32 %v109, %v110
    %v112 = vmax.f32 %v40, %v43
    %v113 = vmax.f32 %v46, %v49
    %v114 = vmax.f32 %v112, %v113
    %v115 = vmin.f32 %v52, %v55
    %v116 = vmin.f32 %v58, %v61
    %v117 = vmin.f32 %v115, %v116
    %v118 = vmax.f32 %v52, %v55
    %v119 = vmax.f32 %v58, %v61
    %v120 = vmax.f32 %v118, %v119
    %v121 = vsel %vm108, %v111, %v40
    %v122 = vsel %vm108, %v111, %v43
    %v123 = vsel %vm108, %v114, %v46
    %v124 = vsel %vm108, %v114, %v49
    %v125 = vsel %vm108, %v117, %v52
    %v126 = vsel %vm108, %v120, %v55
    %v127 = vsel %vm108, %v120, %v58
    %v128 = vsel %vm108, %v117, %v61
    %v129 = vsub.f32 %v121, %v122
    %v130 = vsub.f32 %v125, %v126
    %v131 = vsub.f32 %v124, %v122
    %v132 = vsub.f32 %v128, %v126
    %v133 = vmul.f32 %v129, %v132
    %v134 = vmul.f32 %v130, %v131
    %v135 = vsub.f32 %v133, %v134
    %v136 = vsub.f32 %v123, %v122
    %v137 = vsub.f32 %v127, %v126
    %v138 = vmul.f32 %v131, %v137
    %v139 = vmul.f32 %v132, %v136
    %v140 = vsub.f32 %v138, %v139
    %v141 = vsub.f32 %v122, %v123
    %v142 = vsub.f32 %v126, %v127
    %v143 = vsub.f32 %v121, %v123
    %v144 = vsub.f32 %v125, %v127
    %v145 = vmul.f32 %v141, %v144
    %v146 = vmul.f32 %v142, %v143
    %v147 = vsub.f32 %v145, %v146
    %v148 = vsub.f32 %v124, %v123
    %v149 = vsub.f32 %v128, %v127
    %v150 = vmul.f32 %v143, %v149
    %v151 = vmul.f32 %v144, %v148
    %v152 = vsub.f32 %v150, %v151
    %v153 = vmul.f32 %v135, %v140
    %vm154 = vcmp.gt.f32.partialorder %v153, 0.0
    %v155 = vmul.f32 %v147, %v152
    %vm156 = vcmp.gt.f32.partialorder %v155, 0.0
    %vm157 = vmand %vm154, %vm156
    %v158 = vsel %vm157, %v123, %v124
    %v159 = vsel %vm157, %v124, %v123
    %v160 = vsel %vm157, %v127, %v128
    %v161 = vsel %vm157, %v128, %v127
    %v162 = vsub.f32 %v159, %v122
    %v163 = vsub.f32 %v161, %v126
    %v164 = vmul.f32 %v129, %v163
    %v165 = vmul.f32 %v130, %v162
    %v166 = vsub.f32 %v164, %v165
    %v167 = vsub.f32 %v158, %v122
    %v168 = vsub.f32 %v160, %v126
    %v169 = vmul.f32 %v162, %v168
    %v170 = vmul.f32 %v163, %v167
    %v171 = vsub.f32 %v169, %v170
    %v172 = vsub.f32 %v122, %v158
    %v173 = vsub.f32 %v126, %v160
    %v174 = vsub.f32 %v121, %v158
    %v175 = vsub.f32 %v125, %v160
    %v176 = vmul.f32 %v172, %v175
    %v177 = vmul.f32 %v173, %v174
    %v178 = vsub.f32 %v176, %v177
    %v179 = vsub.f32 %v159, %v158
    %v180 = vsub.f32 %v161, %v160
    %v181 = vmul.f32 %v174, %v180
    %v182 = vmul.f32 %v175, %v179
    %v183 = vsub.f32 %v181, %v182
    %v184 = vmul.f32 %v166, %v171
    %vm185 = vcmp.gt.f32.partialorder %v184, 0.0
    %v186 = vmul.f32 %v178, %v183
    %vm187 = vcmp.gt.f32.partialorder %v186, 0.0
    %vm188 = vmand %vm185, %vm187
    %v189 = vsel %vm188, %v122, %v158
    %v190 = vsel %vm188, %v158, %v122
    %v191 = vsel %vm188, %v126, %v160
    %v192 = vsel %vm188, %v160, %v126
    %v193 = vmul.f32 %v121, %v161
    %v194 = vmul.f32 %v125, %v159
    %v195 = vsub.f32 %v193, %v194
    %v196 = vadd.f32 %v195, 0.0
    %v197 = vmul.f32 %v189, %v125
    %v198 = vmul.f32 %v191, %v121
    %v199 = vsub.f32 %v197, %v198
    %v200 = vadd.f32 %v196, %v199
    %v201 = vmul.f32 %v190, %v191
    %v202 = vmul.f32 %v192, %v189
    %v203 = vsub.f32 %v201, %v202
    %v204 = vadd.f32 %v200, %v203
    %v205 = vmul.f32 %v159, %v192
    %v206 = vmul.f32 %v161, %v190
    %v207 = vsub.f32 %v205, %v206
    %v208 = vadd.f32 %v204, %v207
    %v209 = vmul.f32 %v208, 0.5
    %v210 = vand.u32 2147483647, %v209
    %v211 = vmul.f32 %v62, %v76
    %v212 = vmul.f32 %v70, %v68
    %v213 = vsub.f32 %v211, %v212
    %v214 = vadd.f32 %v213, 0.0
    %v215 = vmul.f32 %v64, %v70
    %v216 = vmul.f32 %v72, %v62
    %v217 = vsub.f32 %v215, %v216
    %v218 = vadd.f32 %v214, %v217
    %v219 = vmul.f32 %v66, %v72
    %v220 = vmul.f32 %v74, %v64
    %v221 = vsub.f32 %v219, %v220
    %v222 = vadd.f32 %v218, %v221
    %v223 = vmul.f32 %v68, %v74
    %v224 = vmul.f32 %v76, %v66
    %v225 = vsub.f32 %v223, %v224
    %v226 = vadd.f32 %v222, %v225
    %v227 = vmul.f32 %v226, 0.5
    %v228 = vadd.f32 %v210, %v227
    %v229 = vsub.f32 %v121, %v159
    %v230 = vsub.f32 %v125, %v161
    %v231 = vsub.f32 0.0, %v229
    %v232 = vsub.f32 0.0, %v230
    %v233 = vsub.f32 %v194, %v193
    %v234 = vsub.f32 %v76, %v161
    %v235 = vmul.f32 %v229, %v234
    %v236 = vsub.f32 %v68, %v159
    %v237 = vmul.f32 %v230, %v236
    %v238 = vsub.f32 %v235, %v237
    %vm239 = vcmp.le.f32.partialorder %v238, 0.0
    %v240 = vsub.f32 %v70, %v161
    %v241 = vmul.f32 %v229, %v240
    %v242 = vsub.f32 %v62, %v159
    %v243 = vmul.f32 %v230, %v242
    %v244 = vsub.f32 %v241, %v243
    %vm245 = vcmp.le.f32.partialorder %v244, 0.0
    %v246 = vsub.f32 %v68, %v62
    %v247 = vsub.f32 %v76, %v70
    %v248 = vsub.f32 %v212, %v211
    %v249 = vmul.f32 %v246, %v232
    %v250 = vmul.f32 %v247, %v231
    %v251 = vsub.f32 %v249, %v250
    %v252 = vrcp.pop %v251
    %v253 = vmul.f32 %v251, %v252
    %v254 = vsub.f32 2.0, %v253
    %v255 = vmul.f32 %v252, %v254
    %v256 = vmul.f32 %v248, %v231
    %v257 = vmul.f32 %v246, %v233
    %v258 = vsub.f32 %v256, %v257
    %v259 = vmul.f32 %v258, %v255
    %v260 = vmul.f32 %v248, %v232
    %v261 = vmul.f32 %v247, %v233
    %v262 = vsub.f32 %v260, %v261
    %v263 = vmul.f32 %v262, %v255
    %vm264 = vmxor %vm245, %vm239
    %vm265 = vmand %vm264, %vm245
    %v266 = vsel %vm264, 0, 8
    %vm267 = vcmp.eq.s32.totalorder %v266, 0
    %v268 = vsel %vm267, %v259, 0.0
    %v269 = vsel %vm267, %v263, 0.0
    %v270 = vsel %vm265, 1, 0
    %v271 = vsel %vm245, %v270, 8
    %vm272 = vcmp.eq.s32.totalorder %v271, 0
    %v273 = vsel %vm272, %v62, %v268
    %v274 = vsel %vm272, %v70, %v269
    %vm275 = vcmp.eq.s32.totalorder %v271, 1
    %v276 = vsel %vm275, %v62, 0.0
    %v277 = vsel %vm275, %v70, 0.0
    %v278 = vsel %vm264, 1, 0
    %v279 = vsel %vm245, 1, 0
    %v280 = vadd.s32 %v278, %v279
    %v281 = vsub.f32 %v72, %v161
    %v282 = vmul.f32 %v229, %v281
    %v283 = vsub.f32 %v64, %v159
    %v284 = vmul.f32 %v230, %v283
    %v285 = vsub.f32 %v282, %v284
    %vm286 = vcmp.le.f32.partialorder %v285, 0.0
    %v287 = vsub.f32 %v62, %v64
    %v288 = vsub.f32 %v70, %v72
    %v289 = vsub.f32 %v216, %v215
    %v290 = vmul.f32 %v287, %v232
    %v291 = vmul.f32 %v288, %v231
    %v292 = vsub.f32 %v290, %v291
    %v293 = vrcp.pop %v292
    %v294 = vmul.f32 %v292, %v293
    %v295 = vsub.f32 2.0, %v294
    %v296 = vmul.f32 %v293, %v295
    %v297 = vmul.f32 %v289, %v231
    %v298 = vmul.f32 %v287, %v233
    %v299 = vsub.f32 %v297, %v298
    %v300 = vmul.f32 %v299, %v296
    %v301 = vmul.f32 %v289, %v232
    %v302 = vmul.f32 %v288, %v233
    %v303 = vsub.f32 %v301, %v302
    %v304 = vmul.f32 %v303, %v296
    %vm305 = vmxor %vm286, %vm245
    %vm306 = vmand %vm305, %vm286
    %v307 = vsel %vm305, %v280, 8
    %vm308 = vcmp.eq.s32.totalorder %v307, 0
    %v309 = vsel %vm308, %v300, %v273
    %v310 = vsel %vm308, %v304, %v274
    %vm311 = vcmp.eq.s32.totalorder %v307, 1
    %v312 = vsel %vm311, %v300, %v276
    %v313 = vsel %vm311, %v304, %v277
    %vm314 = vcmp.eq.s32.totalorder %v307, 2
    %v315 = vsel %vm314, %v300, 0.0
    %v316 = vsel %vm314, %v304, 0.0
    %v317 = vsel %vm306, 1, 0
    %v318 = vadd.s32 %v280, %v317
    %v319 = vsel %vm286, %v318, 8
    %vm320 = vcmp.eq.s32.totalorder %v319, 0
    %v321 = vsel %vm320, %v64, %v309
    %v322 = vsel %vm320, %v72, %v310
    %vm323 = vcmp.eq.s32.totalorder %v319, 1
    %v324 = vsel %vm323, %v64, %v312
    %v325 = vsel %vm323, %v72, %v313
    %vm326 = vcmp.eq.s32.totalorder %v319, 2
    %v327 = vsel %vm326, %v64, %v315
    %v328 = vsel %vm326, %v72, %v316
    %vm329 = vcmp.eq.s32.totalorder %v319, 3
    %v330 = vsel %vm329, %v64, 0.0
    %v331 = vsel %vm329, %v72, 0.0
    %v332 = vsel %vm305, 1, 0
    %v333 = vadd.s32 %v280, %v332
    %v334 = vsel %vm286, 1, 0
    %v335 = vadd.s32 %v333, %v334
    %v336 = vsub.f32 %v74, %v161
    %v337 = vmul.f32 %v229, %v336
    %v338 = vsub.f32 %v66, %v159
    %v339 = vmul.f32 %v230, %v338
    %v340 = vsub.f32 %v337, %v339
    %vm341 = vcmp.le.f32.partialorder %v340, 0.0
    %v342 = vsub.f32 %v64, %v66
    %v343 = vsub.f32 %v72, %v74
    %v344 = vsub.f32 %v220, %v219
    %v345 = vmul.f32 %v342, %v232
    %v346 = vmul.f32 %v343, %v231
    %v347 = vsub.f32 %v345, %v346
    %v348 = vrcp.pop %v347
    %v349 = vmul.f32 %v347, %v348
    %v350 = vsub.f32 2.0, %v349
    %v351 = vmul.f32 %v348, %v350
    %v352 = vmul.f32 %v344, %v231
    %v353 = vmul.f32 %v342, %v233
    %v354 = vsub.f32 %v352, %v353
    %v355 = vmul.f32 %v354, %v351
    %v356 = vmul.f32 %v344, %v232
    %v357 = vmul.f32 %v343, %v233
    %v358 = vsub.f32 %v356, %v357
    %v359 = vmul.f32 %v358, %v351
    %vm360 = vmxor %vm341, %vm286
    %vm361 = vmand %vm360, %vm341
    %v362 = vsel %vm360, %v335, 8
    %vm363 = vcmp.eq.s32.totalorder %v362, 0
    %v364 = vsel %vm363, %v355, %v321
    %v365 = vsel %vm363, %v359, %v322
    %vm366 = vcmp.eq.s32.totalorder %v362, 1
    %v367 = vsel %vm366, %v355, %v324
    %v368 = vsel %vm366, %v359, %v325
    %vm369 = vcmp.eq.s32.totalorder %v362, 2
    %v370 = vsel %vm369, %v355, %v327
    %v371 = vsel %vm369, %v359, %v328
    %vm372 = vcmp.eq.s32.totalorder %v362, 3
    %v373 = vsel %vm372, %v355, %v330
    %v374 = vsel %vm372, %v359, %v331
    %vm375 = vcmp.eq.s32.totalorder %v362, 4
    %v376 = vsel %vm375, %v355, 0.0
    %v377 = vsel %vm375, %v359, 0.0
    %v378 = vsel %vm361, 1, 0
    %v379 = vadd.s32 %v335, %v378
    %v380 = vsel %vm341, %v379, 8
    %vm381 = vcmp.eq.s32.totalorder %v380, 0
    %v382 = vsel %vm381, %v66, %v364
    %v383 = vsel %vm381, %v74, %v365
    %vm384 = vcmp.eq.s32.totalorder %v380, 1
    %v385 = vsel %vm384, %v66, %v367
    %v386 = vsel %vm384, %v74, %v368
    %vm387 = vcmp.eq.s32.totalorder %v380, 2
    %v388 = vsel %vm387, %v66, %v370
    %v389 = vsel %vm387, %v74, %v371
    %vm390 = vcmp.eq.s32.totalorder %v380, 3
    %v391 = vsel %vm390, %v66, %v373
    %v392 = vsel %vm390, %v74, %v374
    %vm393 = vcmp.eq.s32.totalorder %v380, 4
    %v394 = vsel %vm393, %v66, %v376
    %v395 = vsel %vm393, %v74, %v377
    %v396 = vsel %vm360, 1, 0
    %v397 = vadd.s32 %v335, %v396
    %v398 = vsel %vm341, 1, 0
    %v399 = vadd.s32 %v397, %v398
    %v400 = vsub.f32 %v66, %v68
    %v401 = vsub.f32 %v74, %v76
    %v402 = vsub.f32 %v224, %v223
    %v403 = vmul.f32 %v400, %v232
    %v404 = vmul.f32 %v401, %v231
    %v405 = vsub.f32 %v403, %v404
    %v406 = vrcp.pop %v405
    %v407 = vmul.f32 %v405, %v406
    %v408 = vsub.f32 2.0, %v407
    %v409 = vmul.f32 %v406, %v408
    %v410 = vmul.f32 %v402, %v231
    %v411 = vmul.f32 %v400, %v233
    %v412 = vsub.f32 %v410, %v411
    %v413 = vmul.f32 %v412, %v409
    %v414 = vmul.f32 %v402, %v232
    %v415 = vmul.f32 %v401, %v233
    %v416 = vsub.f32 %v414, %v415
    %v417 = vmul.f32 %v416, %v409
    %vm418 = vmxor %vm239, %vm341
    %vm419 = vmand %vm418, %vm239
    %v420 = vsel %vm418, %v399, 8
    %vm421 = vcmp.eq.s32.totalorder %v420, 0
    %v422 = vsel %vm421, %v413, %v382
    %v423 = vsel %vm421, %v417, %v383
    %vm424 = vcmp.eq.s32.totalorder %v420, 1
    %v425 = vsel %vm424, %v413, %v385
    %v426 = vsel %vm424, %v417, %v386
    %vm427 = vcmp.eq.s32.totalorder %v420, 2
    %v428 = vsel %vm427, %v413, %v388
    %v429 = vsel %vm427, %v417, %v389
    %vm430 = vcmp.eq.s32.totalorder %v420, 3
    %v431 = vsel %vm430, %v413, %v391
    %v432 = vsel %vm430, %v417, %v392
    %vm433 = vcmp.eq.s32.totalorder %v420, 4
    %v434 = vsel %vm433, %v413, %v394
    %v435 = vsel %vm433, %v417, %v395
    %v436 = vsel %vm419, 1, 0
    %v437 = vadd.s32 %v399, %v436
    %v438 = vsel %vm239, %v437, 8
    %vm439 = vcmp.eq.s32.totalorder %v438, 0
    %v440 = vsel %vm439, %v68, %v422
    %v441 = vsel %vm439, %v76, %v423
    %vm442 = vcmp.eq.s32.totalorder %v438, 1
    %v443 = vsel %vm442, %v68, %v425
    %v444 = vsel %vm442, %v76, %v426
    %vm445 = vcmp.eq.s32.totalorder %v438, 2
    %v446 = vsel %vm445, %v68, %v428
    %v447 = vsel %vm445, %v76, %v429
    %vm448 = vcmp.eq.s32.totalorder %v438, 3
    %v449 = vsel %vm448, %v68, %v431
    %v450 = vsel %vm448, %v76, %v432
    %vm451 = vcmp.eq.s32.totalorder %v438, 4
    %v452 = vsel %vm451, %v68, %v434
    %v453 = vsel %vm451, %v76, %v435
    %v454 = vsel %vm418, 1, 0
    %v455 = vadd.s32 %v399, %v454
    %v456 = vsel %vm239, 1, 0
    %v457 = vadd.s32 %v455, %v456
    %v458 = vsub.f32 %v189, %v121
    %v459 = vsub.f32 %v191, %v125
    %v460 = vsub.f32 0.0, %v458
    %v461 = vsub.f32 0.0, %v459
    %v462 = vsub.f32 %v198, %v197
    %v463 = vsub.s32 %v457, 1
    %vm464 = vcmp.eq.s32.totalorder %v463, 0
    %v465 = vsel %vm464, %v440, 0.0
    %v466 = vsel %vm464, %v441, 0.0
    %vm467 = vcmp.eq.s32.totalorder %v463, 1
    %v468 = vsel %vm467, %v443, %v465
    %v469 = vsel %vm467, %v444, %v466
    %vm470 = vcmp.eq.s32.totalorder %v463, 2
    %v471 = vsel %vm470, %v446, %v468
    %v472 = vsel %vm470, %v447, %v469
    %vm473 = vcmp.eq.s32.totalorder %v463, 3
    %v474 = vsel %vm473, %v449, %v471
    %v475 = vsel %vm473, %v450, %v472
    %vm476 = vcmp.eq.s32.totalorder %v463, 4
    %v477 = vsel %vm476, %v452, %v474
    %v478 = vsel %vm476, %v453, %v475
    %v479 = vsub.f32 %v478, %v125
    %v480 = vmul.f32 %v458, %v479
    %v481 = vsub.f32 %v477, %v121
    %v482 = vmul.f32 %v459, %v481
    %v483 = vsub.f32 %v480, %v482
    %vm484 = vcmp.le.f32.partialorder %v483, 0.0
    %v485 = vsub.f32 %v441, %v125
    %v486 = vmul.f32 %v458, %v485
    %v487 = vsub.f32 %v440, %v121
    %v488 = vmul.f32 %v459, %v487
    %v489 = vsub.f32 %v486, %v488
    %vm490 = vcmp.le.f32.partialorder %v489, 0.0
    %v491 = vsub.f32 %v477, %v440
    %v492 = vsub.f32 %v478, %v441
    %v493 = vmul.f32 %v477, %v441
    %v494 = vmul.f32 %v478, %v440
    %v495 = vsub.f32 %v493, %v494
    %v496 = vmul.f32 %v491, %v461
    %v497 = vmul.f32 %v492, %v460
    %v498 = vsub.f32 %v496, %v497
    %v499 = vrcp.pop %v498
    %v500 = vmul.f32 %v498, %v499
    %v501 = vsub.f32 2.0, %v500
    %v502 = vmul.f32 %v499, %v501
    %v503 = vmul.f32 %v495, %v460
    %v504 = vmul.f32 %v491, %v462
    %v505 = vsub.f32 %v503, %v504
    %v506 = vmul.f32 %v505, %v502
    %v507 = vmul.f32 %v495, %v461
    %v508 = vmul.f32 %v492, %v462
    %v509 = vsub.f32 %v507, %v508
    %v510 = vmul.f32 %v509, %v502
    %vm511 = vmxor %vm490, %vm484
    %vm512 = vcmp.gt.s32.totalorder %v457, 0
    %vm513 = vmand %vm512, %vm490
    %vm514 = vmand %vm512, %vm511
    %vm515 = vmand %vm514, %vm490
    %v516 = vsel %vm514, 0, 8
    %vm517 = vcmp.eq.s32.totalorder %v516, 0
    %v518 = vsel %vm517, %v506, 0.0
    %v519 = vsel %vm517, %v510, 0.0
    %v520 = vsel %vm515, 1, 0
    %v521 = vsel %vm513, %v520, 8
    %vm522 = vcmp.eq.s32.totalorder %v521, 0
    %v523 = vsel %vm522, %v440, %v518
    %v524 = vsel %vm522, %v441, %v519
    %vm525 = vcmp.eq.s32.totalorder %v521, 1
    %v526 = vsel %vm525, %v440, 0.0
    %v527 = vsel %vm525, %v441, 0.0
    %v528 = vsel %vm514, 1, 0
    %v529 = vsel %vm513, 1, 0
    %v530 = vadd.s32 %v528, %v529
    %v531 = vsub.f32 %v444, %v125
    %v532 = vmul.f32 %v458, %v531
    %v533 = vsub.f32 %v443, %v121
    %v534 = vmul.f32 %v459, %v533
    %v535 = vsub.f32 %v532, %v534
    %vm536 = vcmp.le.f32.partialorder %v535, 0.0
    %v537 = vsub.f32 %v440, %v443
    %v538 = vsub.f32 %v441, %v444
    %v539 = vmul.f32 %v440, %v444
    %v540 = vmul.f32 %v441, %v443
    %v541 = vsub.f32 %v539, %v540
    %v542 = vmul.f32 %v537, %v461
    %v543 = vmul.f32 %v538, %v460
    %v544 = vsub.f32 %v542, %v543
    %v545 = vrcp.pop %v544
    %v546 = vmul.f32 %v544, %v545
    %v547 = vsub.f32 2.0, %v546
    %v548 = vmul.f32 %v545, %v547
    %v549 = vmul.f32 %v541, %v460
    %v550 = vmul.f32 %v537, %v462
    %v551 = vsub.f32 %v549, %v550
    %v552 = vmul.f32 %v551, %v548
    %v553 = vmul.f32 %v541, %v461
    %v554 = vmul.f32 %v538, %v462
    %v555 = vsub.f32 %v553, %v554
    %v556 = vmul.f32 %v555, %v548
    %vm557 = vmxor %vm536, %vm490
    %vm558 = vcmp.gt.s32.totalorder %v457, 1
    %vm559 = vmand %vm558, %vm536
    %vm560 = vmand %vm558, %vm557
    %vm561 = vmand %vm560, %vm536
    %v562 = vsel %vm560, %v530, 8
    %vm563 = vcmp.eq.s32.totalorder %v562, 0
    %v564 = vsel %vm563, %v552, %v523
    %v565 = vsel %vm563, %v556, %v524
    %vm566 = vcmp.eq.s32.totalorder %v562, 1
    %v567 = vsel %vm566, %v552, %v526
    %v568 = vsel %vm566, %v556, %v527
    %vm569 = vcmp.eq.s32.totalorder %v562, 2
    %v570 = vsel %vm569, %v552, 0.0
    %v571 = vsel %vm569, %v556, 0.0
    %v572 = vsel %vm561, 1, 0
    %v573 = vadd.s32 %v530, %v572
    %v574 = vsel %vm559, %v573, 8
    %vm575 = vcmp.eq.s32.totalorder %v574, 0
    %v576 = vsel %vm575, %v443, %v564
    %v577 = vsel %vm575, %v444, %v565
    %vm578 = vcmp.eq.s32.totalorder %v574, 1
    %v579 = vsel %vm578, %v443, %v567
    %v580 = vsel %vm578, %v444, %v568
    %vm581 = vcmp.eq.s32.totalorder %v574, 2
    %v582 = vsel %vm581, %v443, %v570
    %v583 = vsel %vm581, %v444, %v571
    %vm584 = vcmp.eq.s32.totalorder %v574, 3
    %v585 = vsel %vm584, %v443, 0.0
    %v586 = vsel %vm584, %v444, 0.0
    %v587 = vsel %vm560, 1, 0
    %v588 = vadd.s32 %v530, %v587
    %v589 = vsel %vm559, 1, 0
    %v590 = vadd.s32 %v588, %v589
    %v591 = vsub.f32 %v447, %v125
    %v592 = vmul.f32 %v458, %v591
    %v593 = vsub.f32 %v446, %v121
    %v594 = vmul.f32 %v459, %v593
    %v595 = vsub.f32 %v592, %v594
    %vm596 = vcmp.le.f32.partialorder %v595, 0.0
    %v597 = vsub.f32 %v443, %v446
    %v598 = vsub.f32 %v444, %v447
    %v599 = vmul.f32 %v443, %v447
    %v600 = vmul.f32 %v444, %v446
    %v601 = vsub.f32 %v599, %v600
    %v602 = vmul.f32 %v597, %v461
    %v603 = vmul.f32 %v598, %v460
    %v604 = vsub.f32 %v602, %v603
    %v605 = vrcp.pop %v604
    %v606 = vmul.f32 %v604, %v605
    %v607 = vsub.f32 2.0, %v606
    %v608 = vmul.f32 %v605, %v607
    %v609 = vmul.f32 %v601, %v460
    %v610 = vmul.f32 %v597, %v462
    %v611 = vsub.f32 %v609, %v610
    %v612 = vmul.f32 %v611, %v608
    %v613 = vmul.f32 %v601, %v461
    %v614 = vmul.f32 %v598, %v462
    %v615 = vsub.f32 %v613, %v614
    %v616 = vmul.f32 %v615, %v608
    %vm617 = vmxor %vm596, %vm536
    %vm618 = vcmp.gt.s32.totalorder %v457, 2
    %vm619 = vmand %vm618, %vm596
    %vm620 = vmand %vm618, %vm617
    %vm621 = vmand %vm620, %vm596
    %v622 = vsel %vm620, %v590, 8
    %vm623 = vcmp.eq.s32.totalorder %v622, 0
    %v624 = vsel %vm623, %v612, %v576
    %v625 = vsel %vm623, %v616, %v577
    %vm626 = vcmp.eq.s32.totalorder %v622, 1
    %v627 = vsel %vm626, %v612, %v579
    %v628 = vsel %vm626, %v616, %v580
    %vm629 = vcmp.eq.s32.totalorder %v622, 2
    %v630 = vsel %vm629, %v612, %v582
    %v631 = vsel %vm629, %v616, %v583
    %vm632 = vcmp.eq.s32.totalorder %v622, 3
    %v633 = vsel %vm632, %v612, %v585
    %v634 = vsel %vm632, %v616, %v586
    %vm635 = vcmp.eq.s32.totalorder %v622, 4
    %v636 = vsel %vm635, %v612, 0.0
    %v637 = vsel %vm635, %v616, 0.0
    %v638 = vsel %vm621, 1, 0
    %v639 = vadd.s32 %v590, %v638
    %v640 = vsel %vm619, %v639, 8
    %vm641 = vcmp.eq.s32.totalorder %v640, 0
    %v642 = vsel %vm641, %v446, %v624
    %v643 = vsel %vm641, %v447, %v625
    %vm644 = vcmp.eq.s32.totalorder %v640, 1
    %v645 = vsel %vm644, %v446, %v627
    %v646 = vsel %vm644, %v447, %v628
    %vm647 = vcmp.eq.s32.totalorder %v640, 2
    %v648 = vsel %vm647, %v446, %v630
    %v649 = vsel %vm647, %v447, %v631
    %vm650 = vcmp.eq.s32.totalorder %v640, 3
    %v651 = vsel %vm650, %v446, %v633
    %v652 = vsel %vm650, %v447, %v634
    %vm653 = vcmp.eq.s32.totalorder %v640, 4
    %v654 = vsel %vm653, %v446, %v636
    %v655 = vsel %vm653, %v447, %v637
    %vm656 = vcmp.eq.s32.totalorder %v640, 5
    %v657 = vsel %vm656, %v446, 0.0
    %v658 = vsel %vm656, %v447, 0.0
    %v659 = vsel %vm620, 1, 0
    %v660 = vadd.s32 %v590, %v659
    %v661 = vsel %vm619, 1, 0
    %v662 = vadd.s32 %v660, %v661
    %v663 = vsub.f32 %v450, %v125
    %v664 = vmul.f32 %v458, %v663
    %v665 = vsub.f32 %v449, %v121
    %v666 = vmul.f32 %v459, %v665
    %v667 = vsub.f32 %v664, %v666
    %vm668 = vcmp.le.f32.partialorder %v667, 0.0
    %v669 = vsub.f32 %v446, %v449
    %v670 = vsub.f32 %v447, %v450
    %v671 = vmul.f32 %v446, %v450
    %v672 = vmul.f32 %v447, %v449
    %v673 = vsub.f32 %v671, %v672
    %v674 = vmul.f32 %v669, %v461
    %v675 = vmul.f32 %v670, %v460
    %v676 = vsub.f32 %v674, %v675
    %v677 = vrcp.pop %v676
    %v678 = vmul.f32 %v676, %v677
    %v679 = vsub.f32 2.0, %v678
    %v680 = vmul.f32 %v677, %v679
    %v681 = vmul.f32 %v673, %v460
    %v682 = vmul.f32 %v669, %v462
    %v683 = vsub.f32 %v681, %v682
    %v684 = vmul.f32 %v683, %v680
    %v685 = vmul.f32 %v673, %v461
    %v686 = vmul.f32 %v670, %v462
    %v687 = vsub.f32 %v685, %v686
    %v688 = vmul.f32 %v687, %v680
    %vm689 = vmxor %vm668, %vm596
    %vm690 = vcmp.gt.s32.totalorder %v457, 3
    %vm691 = vmand %vm690, %vm668
    %vm692 = vmand %vm690, %vm689
    %vm693 = vmand %vm692, %vm668
    %v694 = vsel %vm692, %v662, 8
    %vm695 = vcmp.eq.s32.totalorder %v694, 0
    %v696 = vsel %vm695, %v684, %v642
    %v697 = vsel %vm695, %v688, %v643
    %vm698 = vcmp.eq.s32.totalorder %v694, 1
    %v699 = vsel %vm698, %v684, %v645
    %v700 = vsel %vm698, %v688, %v646
    %vm701 = vcmp.eq.s32.totalorder %v694, 2
    %v702 = vsel %vm701, %v684, %v648
    %v703 = vsel %vm701, %v688, %v649
    %vm704 = vcmp.eq.s32.totalorder %v694, 3
    %v705 = vsel %vm704, %v684, %v651
    %v706 = vsel %vm704, %v688, %v652
    %vm707 = vcmp.eq.s32.totalorder %v694, 4
    %v708 = vsel %vm707, %v684, %v654
    %v709 = vsel %vm707, %v688, %v655
    %vm710 = vcmp.eq.s32.totalorder %v694, 5
    %v711 = vsel %vm710, %v684, %v657
    %v712 = vsel %vm710, %v688, %v658
    %v713 = vsel %vm693, 1, 0
    %v714 = vadd.s32 %v662, %v713
    %v715 = vsel %vm691, %v714, 8
    %vm716 = vcmp.eq.s32.totalorder %v715, 0
    %v717 = vsel %vm716, %v449, %v696
    %v718 = vsel %vm716, %v450, %v697
    %vm719 = vcmp.eq.s32.totalorder %v715, 1
    %v720 = vsel %vm719, %v449, %v699
    %v721 = vsel %vm719, %v450, %v700
    %vm722 = vcmp.eq.s32.totalorder %v715, 2
    %v723 = vsel %vm722, %v449, %v702
    %v724 = vsel %vm722, %v450, %v703
    %vm725 = vcmp.eq.s32.totalorder %v715, 3
    %v726 = vsel %vm725, %v449, %v705
    %v727 = vsel %vm725, %v450, %v706
    %vm728 = vcmp.eq.s32.totalorder %v715, 4
    %v729 = vsel %vm728, %v449, %v708
    %v730 = vsel %vm728, %v450, %v709
    %vm731 = vcmp.eq.s32.totalorder %v715, 5
    %v732 = vsel %vm731, %v449, %v711
    %v733 = vsel %vm731, %v450, %v712
    %v734 = vsel %vm692, 1, 0
    %v735 = vadd.s32 %v662, %v734
    %v736 = vsel %vm691, 1, 0
    %v737 = vadd.s32 %v735, %v736
    %v738 = vsub.f32 %v453, %v125
    %v739 = vmul.f32 %v458, %v738
    %v740 = vsub.f32 %v452, %v121
    %v741 = vmul.f32 %v459, %v740
    %v742 = vsub.f32 %v739, %v741
    %vm743 = vcmp.le.f32.partialorder %v742, 0.0
    %v744 = vsub.f32 %v449, %v452
    %v745 = vsub.f32 %v450, %v453
    %v746 = vmul.f32 %v449, %v453
    %v747 = vmul.f32 %v450, %v452
    %v748 = vsub.f32 %v746, %v747
    %v749 = vmul.f32 %v744, %v461
    %v750 = vmul.f32 %v745, %v460
    %v751 = vsub.f32 %v749, %v750
    %v752 = vrcp.pop %v751
    %v753 = vmul.f32 %v751, %v752
    %v754 = vsub.f32 2.0, %v753
    %v755 = vmul.f32 %v752, %v754
    %v756 = vmul.f32 %v748, %v460
    %v757 = vmul.f32 %v744, %v462
    %v758 = vsub.f32 %v756, %v757
    %v759 = vmul.f32 %v758, %v755
    %v760 = vmul.f32 %v748, %v461
    %v761 = vmul.f32 %v745, %v462
    %v762 = vsub.f32 %v760, %v761
    %v763 = vmul.f32 %v762, %v755
    %vm764 = vmxor %vm743, %vm668
    %vm765 = vcmp.gt.s32.totalorder %v457, 4
    %vm766 = vmand %vm765, %vm743
    %vm767 = vmand %vm765, %vm764
    %vm768 = vmand %vm767, %vm743
    %v769 = vsel %vm767, %v737, 8
    %vm770 = vcmp.eq.s32.totalorder %v769, 0
    %v771 = vsel %vm770, %v759, %v717
    %v772 = vsel %vm770, %v763, %v718
    %vm773 = vcmp.eq.s32.totalorder %v769, 1
    %v774 = vsel %vm773, %v759, %v720
    %v775 = vsel %vm773, %v763, %v721
    %vm776 = vcmp.eq.s32.totalorder %v769, 2
    %v777 = vsel %vm776, %v759, %v723
    %v778 = vsel %vm776, %v763, %v724
    %vm779 = vcmp.eq.s32.totalorder %v769, 3
    %v780 = vsel %vm779, %v759, %v726
    %v781 = vsel %vm779, %v763, %v727
    %vm782 = vcmp.eq.s32.totalorder %v769, 4
    %v783 = vsel %vm782, %v759, %v729
    %v784 = vsel %vm782, %v763, %v730
    %vm785 = vcmp.eq.s32.totalorder %v769, 5
    %v786 = vsel %vm785, %v759, %v732
    %v787 = vsel %vm785, %v763, %v733
    %v788 = vsel %vm768, 1, 0
    %v789 = vadd.s32 %v737, %v788
    %v790 = vsel %vm766, %v789, 8
    %vm791 = vcmp.eq.s32.totalorder %v790, 0
    %v792 = vsel %vm791, %v452, %v771
    %v793 = vsel %vm791, %v453, %v772
    %vm794 = vcmp.eq.s32.totalorder %v790, 1
    %v795 = vsel %vm794, %v452, %v774
    %v796 = vsel %vm794, %v453, %v775
    %vm797 = vcmp.eq.s32.totalorder %v790, 2
    %v798 = vsel %vm797, %v452, %v777
    %v799 = vsel %vm797, %v453, %v778
    %vm800 = vcmp.eq.s32.totalorder %v790, 3
    %v801 = vsel %vm800, %v452, %v780
    %v802 = vsel %vm800, %v453, %v781
    %vm803 = vcmp.eq.s32.totalorder %v790, 4
    %v804 = vsel %vm803, %v452, %v783
    %v805 = vsel %vm803, %v453, %v784
    %vm806 = vcmp.eq.s32.totalorder %v790, 5
    %v807 = vsel %vm806, %v452, %v786
    %v808 = vsel %vm806, %v453, %v787
    %v809 = vsel %vm767, 1, 0
    %v810 = vadd.s32 %v737, %v809
    %v811 = vsel %vm766, 1, 0
    %v812 = vadd.s32 %v810, %v811
    %v813 = vsub.f32 %v190, %v189
    %v814 = vsub.f32 %v192, %v191
    %v815 = vsub.f32 0.0, %v813
    %v816 = vsub.f32 0.0, %v814
    %v817 = vsub.f32 %v202, %v201
    %v818 = vsub.s32 %v812, 1
    %vm819 = vcmp.eq.s32.totalorder %v818, 0
    %v820 = vsel %vm819, %v792, 0.0
    %v821 = vsel %vm819, %v793, 0.0
    %vm822 = vcmp.eq.s32.totalorder %v818, 1
    %v823 = vsel %vm822, %v795, %v820
    %v824 = vsel %vm822, %v796, %v821
    %vm825 = vcmp.eq.s32.totalorder %v818, 2
    %v826 = vsel %vm825, %v798, %v823
    %v827 = vsel %vm825, %v799, %v824
    %vm828 = vcmp.eq.s32.totalorder %v818, 3
    %v829 = vsel %vm828, %v801, %v826
    %v830 = vsel %vm828, %v802, %v827
    %vm831 = vcmp.eq.s32.totalorder %v818, 4
    %v832 = vsel %vm831, %v804, %v829
    %v833 = vsel %vm831, %v805, %v830
    %vm834 = vcmp.eq.s32.totalorder %v818, 5
    %v835 = vsel %vm834, %v807, %v832
    %v836 = vsel %vm834, %v808, %v833
    %v837 = vsub.f32 %v836, %v191
    %v838 = vmul.f32 %v813, %v837
    %v839 = vsub.f32 %v835, %v189
    %v840 = vmul.f32 %v814, %v839
    %v841 = vsub.f32 %v838, %v840
    %vm842 = vcmp.le.f32.partialorder %v841, 0.0
    %v843 = vsub.f32 %v793, %v191
    %v844 = vmul.f32 %v813, %v843
    %v845 = vsub.f32 %v792, %v189
    %v846 = vmul.f32 %v814, %v845
    %v847 = vsub.f32 %v844, %v846
    %vm848 = vcmp.le.f32.partialorder %v847, 0.0
    %v849 = vsub.f32 %v835, %v792
    %v850 = vsub.f32 %v836, %v793
    %v851 = vmul.f32 %v835, %v793
    %v852 = vmul.f32 %v836, %v792
    %v853 = vsub.f32 %v851, %v852
    %v854 = vmul.f32 %v849, %v816
    %v855 = vmul.f32 %v850, %v815
    %v856 = vsub.f32 %v854, %v855
    %v857 = vrcp.pop %v856
    %v858 = vmul.f32 %v856, %v857
    %v859 = vsub.f32 2.0, %v858
    %v860 = vmul.f32 %v857, %v859
    %v861 = vmul.f32 %v853, %v815
    %v862 = vmul.f32 %v849, %v817
    %v863 = vsub.f32 %v861, %v862
    %v864 = vmul.f32 %v863, %v860
    %v865 = vmul.f32 %v853, %v816
    %v866 = vmul.f32 %v850, %v817
    %v867 = vsub.f32 %v865, %v866
    %v868 = vmul.f32 %v867, %v860
    %vm869 = vmxor %vm848, %vm842
    %vm870 = vcmp.gt.s32.totalorder %v812, 0
    %vm871 = vmand %vm870, %vm848
    %vm872 = vmand %vm870, %vm869
    %vm873 = vmand %vm872, %vm848
    %v874 = vsel %vm872, 0, 8
    %vm875 = vcmp.eq.s32.totalorder %v874, 0
    %v876 = vsel %vm875, %v864, 0.0
    %v877 = vsel %vm875, %v868, 0.0
    %v878 = vsel %vm873, 1, 0
    %v879 = vsel %vm871, %v878, 8
    %vm880 = vcmp.eq.s32.totalorder %v879, 0
    %v881 = vsel %vm880, %v792, %v876
    %v882 = vsel %vm880, %v793, %v877
    %vm883 = vcmp.eq.s32.totalorder %v879, 1
    %v884 = vsel %vm883, %v792, 0.0
    %v885 = vsel %vm883, %v793, 0.0
    %v886 = vsel %vm872, 1, 0
    %v887 = vsel %vm871, 1, 0
    %v888 = vadd.s32 %v886, %v887
    %v889 = vsub.f32 %v796, %v191
    %v890 = vmul.f32 %v813, %v889
    %v891 = vsub.f32 %v795, %v189
    %v892 = vmul.f32 %v814, %v891
    %v893 = vsub.f32 %v890, %v892
    %vm894 = vcmp.le.f32.partialorder %v893, 0.0
    %v895 = vsub.f32 %v792, %v795
    %v896 = vsub.f32 %v793, %v796
    %v897 = vmul.f32 %v792, %v796
    %v898 = vmul.f32 %v793, %v795
    %v899 = vsub.f32 %v897, %v898
    %v900 = vmul.f32 %v895, %v816
    %v901 = vmul.f32 %v896, %v815
    %v902 = vsub.f32 %v900, %v901
    %v903 = vrcp.pop %v902
    %v904 = vmul.f32 %v902, %v903
    %v905 = vsub.f32 2.0, %v904
    %v906 = vmul.f32 %v903, %v905
    %v907 = vmul.f32 %v899, %v815
    %v908 = vmul.f32 %v895, %v817
    %v909 = vsub.f32 %v907, %v908
    %v910 = vmul.f32 %v909, %v906
    %v911 = vmul.f32 %v899, %v816
    %v912 = vmul.f32 %v896, %v817
    %v913 = vsub.f32 %v911, %v912
    %v914 = vmul.f32 %v913, %v906
    %vm915 = vmxor %vm894, %vm848
    %vm916 = vcmp.gt.s32.totalorder %v812, 1
    %vm917 = vmand %vm916, %vm894
    %vm918 = vmand %vm916, %vm915
    %vm919 = vmand %vm918, %vm894
    %v920 = vsel %vm918, %v888, 8
    %vm921 = vcmp.eq.s32.totalorder %v920, 0
    %v922 = vsel %vm921, %v910, %v881
    %v923 = vsel %vm921, %v914, %v882
    %vm924 = vcmp.eq.s32.totalorder %v920, 1
    %v925 = vsel %vm924, %v910, %v884
    %v926 = vsel %vm924, %v914, %v885
    %vm927 = vcmp.eq.s32.totalorder %v920, 2
    %v928 = vsel %vm927, %v910, 0.0
    %v929 = vsel %vm927, %v914, 0.0
    %v930 = vsel %vm919, 1, 0
    %v931 = vadd.s32 %v888, %v930
    %v932 = vsel %vm917, %v931, 8
    %vm933 = vcmp.eq.s32.totalorder %v932, 0
    %v934 = vsel %vm933, %v795, %v922
    %v935 = vsel %vm933, %v796, %v923
    %vm936 = vcmp.eq.s32.totalorder %v932, 1
    %v937 = vsel %vm936, %v795, %v925
    %v938 = vsel %vm936, %v796, %v926
    %vm939 = vcmp.eq.s32.totalorder %v932, 2
    %v940 = vsel %vm939, %v795, %v928
    %v941 = vsel %vm939, %v796, %v929
    %vm942 = vcmp.eq.s32.totalorder %v932, 3
    %v943 = vsel %vm942, %v795, 0.0
    %v944 = vsel %vm942, %v796, 0.0
    %v945 = vsel %vm918, 1, 0
    %v946 = vadd.s32 %v888, %v945
    %v947 = vsel %vm917, 1, 0
    %v948 = vadd.s32 %v946, %v947
    %v949 = vsub.f32 %v799, %v191
    %v950 = vmul.f32 %v813, %v949
    %v951 = vsub.f32 %v798, %v189
    %v952 = vmul.f32 %v814, %v951
    %v953 = vsub.f32 %v950, %v952
    %vm954 = vcmp.le.f32.partialorder %v953, 0.0
    %v955 = vsub.f32 %v795, %v798
    %v956 = vsub.f32 %v796, %v799
    %v957 = vmul.f32 %v795, %v799
    %v958 = vmul.f32 %v796, %v798
    %v959 = vsub.f32 %v957, %v958
    %v960 = vmul.f32 %v955, %v816
    %v961 = vmul.f32 %v956, %v815
    %v962 = vsub.f32 %v960, %v961
    %v963 = vrcp.pop %v962
    %v964 = vmul.f32 %v962, %v963
    %v965 = vsub.f32 2.0, %v964
    %v966 = vmul.f32 %v963, %v965
    %v967 = vmul.f32 %v959, %v815
    %v968 = vmul.f32 %v955, %v817
    %v969 = vsub.f32 %v967, %v968
    %v970 = vmul.f32 %v969, %v966
    %v971 = vmul.f32 %v959, %v816
    %v972 = vmul.f32 %v956, %v817
    %v973 = vsub.f32 %v971, %v972
    %v974 = vmul.f32 %v973, %v966
    %vm975 = vmxor %vm954, %vm894
    %vm976 = vcmp.gt.s32.totalorder %v812, 2
    %vm977 = vmand %vm976, %vm954
    %vm978 = vmand %vm976, %vm975
    %vm979 = vmand %vm978, %vm954
    %v980 = vsel %vm978, %v948, 8
    %vm981 = vcmp.eq.s32.totalorder %v980, 0
    %v982 = vsel %vm981, %v970, %v934
    %v983 = vsel %vm981, %v974, %v935
    %vm984 = vcmp.eq.s32.totalorder %v980, 1
    %v985 = vsel %vm984, %v970, %v937
    %v986 = vsel %vm984, %v974, %v938
    %vm987 = vcmp.eq.s32.totalorder %v980, 2
    %v988 = vsel %vm987, %v970, %v940
    %v989 = vsel %vm987, %v974, %v941
    %vm990 = vcmp.eq.s32.totalorder %v980, 3
    %v991 = vsel %vm990, %v970, %v943
    %v992 = vsel %vm990, %v974, %v944
    %vm993 = vcmp.eq.s32.totalorder %v980, 4
    %v994 = vsel %vm993, %v970, 0.0
    %v995 = vsel %vm993, %v974, 0.0
    %v996 = vsel %vm979, 1, 0
    %v997 = vadd.s32 %v948, %v996
    %v998 = vsel %vm977, %v997, 8
    %vm999 = vcmp.eq.s32.totalorder %v998, 0
    %v1000 = vsel %vm999, %v798, %v982
    %v1001 = vsel %vm999, %v799, %v983
    %vm1002 = vcmp.eq.s32.totalorder %v998, 1
    %v1003 = vsel %vm1002, %v798, %v985
    %v1004 = vsel %vm1002, %v799, %v986
    %vm1005 = vcmp.eq.s32.totalorder %v998, 2
    %v1006 = vsel %vm1005, %v798, %v988
    %v1007 = vsel %vm1005, %v799, %v989
    %vm1008 = vcmp.eq.s32.totalorder %v998, 3
    %v1009 = vsel %vm1008, %v798, %v991
    %v1010 = vsel %vm1008, %v799, %v992
    %vm1011 = vcmp.eq.s32.totalorder %v998, 4
    %v1012 = vsel %vm1011, %v798, %v994
    %v1013 = vsel %vm1011, %v799, %v995
    %vm1014 = vcmp.eq.s32.totalorder %v998, 5
    %v1015 = vsel %vm1014, %v798, 0.0
    %v1016 = vsel %vm1014, %v799, 0.0
    %v1017 = vsel %vm978, 1, 0
    %v1018 = vadd.s32 %v948, %v1017
    %v1019 = vsel %vm977, 1, 0
    %v1020 = vadd.s32 %v1018, %v1019
    %v1021 = vsub.f32 %v802, %v191
    %v1022 = vmul.f32 %v813, %v1021
    %v1023 = vsub.f32 %v801, %v189
    %v1024 = vmul.f32 %v814, %v1023
    %v1025 = vsub.f32 %v1022, %v1024
    %vm1026 = vcmp.le.f32.partialorder %v1025, 0.0
    %v1027 = vsub.f32 %v798, %v801
    %v1028 = vsub.f32 %v799, %v802
    %v1029 = vmul.f32 %v798, %v802
    %v1030 = vmul.f32 %v799, %v801
    %v1031 = vsub.f32 %v1029, %v1030
    %v1032 = vmul.f32 %v1027, %v816
    %v1033 = vmul.f32 %v1028, %v815
    %v1034 = vsub.f32 %v1032, %v1033
    %v1035 = vrcp.pop %v1034
    %v1036 = vmul.f32 %v1034, %v1035
    %v1037 = vsub.f32 2.0, %v1036
    %v1038 = vmul.f32 %v1035, %v1037
    %v1039 = vmul.f32 %v1031, %v815
    %v1040 = vmul.f32 %v1027, %v817
    %v1041 = vsub.f32 %v1039, %v1040
    %v1042 = vmul.f32 %v1041, %v1038
    %v1043 = vmul.f32 %v1031, %v816
    %v1044 = vmul.f32 %v1028, %v817
    %v1045 = vsub.f32 %v1043, %v1044
    %v1046 = vmul.f32 %v1045, %v1038
    %vm1047 = vmxor %vm1026, %vm954
    %vm1048 = vcmp.gt.s32.totalorder %v812, 3
    %vm1049 = vmand %vm1048, %vm1026
    %vm1050 = vmand %vm1048, %vm1047
    %vm1051 = vmand %vm1050, %vm1026
    %v1052 = vsel %vm1050, %v1020, 8
    %vm1053 = vcmp.eq.s32.totalorder %v1052, 0
    %v1054 = vsel %vm1053, %v1042, %v1000
    %v1055 = vsel %vm1053, %v1046, %v1001
    %vm1056 = vcmp.eq.s32.totalorder %v1052, 1
    %v1057 = vsel %vm1056, %v1042, %v1003
    %v1058 = vsel %vm1056, %v1046, %v1004
    %vm1059 = vcmp.eq.s32.totalorder %v1052, 2
    %v1060 = vsel %vm1059, %v1042, %v1006
    %v1061 = vsel %vm1059, %v1046, %v1007
    %vm1062 = vcmp.eq.s32.totalorder %v1052, 3
    %v1063 = vsel %vm1062, %v1042, %v1009
    %v1064 = vsel %vm1062, %v1046, %v1010
    %vm1065 = vcmp.eq.s32.totalorder %v1052, 4
    %v1066 = vsel %vm1065, %v1042, %v1012
    %v1067 = vsel %vm1065, %v1046, %v1013
    %vm1068 = vcmp.eq.s32.totalorder %v1052, 5
    %v1069 = vsel %vm1068, %v1042, %v1015
    %v1070 = vsel %vm1068, %v1046, %v1016
    %vm1071 = vcmp.eq.s32.totalorder %v1052, 6
    %v1072 = vsel %vm1071, %v1042, 0.0
    %v1073 = vsel %vm1071, %v1046, 0.0
    %v1074 = vsel %vm1051, 1, 0
    %v1075 = vadd.s32 %v1020, %v1074
    %v1076 = vsel %vm1049, %v1075, 8
    %vm1077 = vcmp.eq.s32.totalorder %v1076, 0
    %v1078 = vsel %vm1077, %v801, %v1054
    %v1079 = vsel %vm1077, %v802, %v1055
    %vm1080 = vcmp.eq.s32.totalorder %v1076, 1
    %v1081 = vsel %vm1080, %v801, %v1057
    %v1082 = vsel %vm1080, %v802, %v1058
    %vm1083 = vcmp.eq.s32.totalorder %v1076, 2
    %v1084 = vsel %vm1083, %v801, %v1060
    %v1085 = vsel %vm1083, %v802, %v1061
    %vm1086 = vcmp.eq.s32.totalorder %v1076, 3
    %v1087 = vsel %vm1086, %v801, %v1063
    %v1088 = vsel %vm1086, %v802, %v1064
    %vm1089 = vcmp.eq.s32.totalorder %v1076, 4
    %v1090 = vsel %vm1089, %v801, %v1066
    %v1091 = vsel %vm1089, %v802, %v1067
    %vm1092 = vcmp.eq.s32.totalorder %v1076, 5
    %v1093 = vsel %vm1092, %v801, %v1069
    %v1094 = vsel %vm1092, %v802, %v1070
    %vm1095 = vcmp.eq.s32.totalorder %v1076, 6
    %v1096 = vsel %vm1095, %v801, %v1072
    %v1097 = vsel %vm1095, %v802, %v1073
    %v1098 = vsel %vm1050, 1, 0
    %v1099 = vadd.s32 %v1020, %v1098
    %v1100 = vsel %vm1049, 1, 0
    %v1101 = vadd.s32 %v1099, %v1100
    %v1102 = vsub.f32 %v805, %v191
    %v1103 = vmul.f32 %v813, %v1102
    %v1104 = vsub.f32 %v804, %v189
    %v1105 = vmul.f32 %v814, %v1104
    %v1106 = vsub.f32 %v1103, %v1105
    %vm1107 = vcmp.le.f32.partialorder %v1106, 0.0
    %v1108 = vsub.f32 %v801, %v804
    %v1109 = vsub.f32 %v802, %v805
    %v1110 = vmul.f32 %v801, %v805
    %v1111 = vmul.f32 %v802, %v804
    %v1112 = vsub.f32 %v1110, %v1111
    %v1113 = vmul.f32 %v1108, %v816
    %v1114 = vmul.f32 %v1109, %v815
    %v1115 = vsub.f32 %v1113, %v1114
    %v1116 = vrcp.pop %v1115
    %v1117 = vmul.f32 %v1115, %v1116
    %v1118 = vsub.f32 2.0, %v1117
    %v1119 = vmul.f32 %v1116, %v1118
    %v1120 = vmul.f32 %v1112, %v815
    %v1121 = vmul.f32 %v1108, %v817
    %v1122 = vsub.f32 %v1120, %v1121
    %v1123 = vmul.f32 %v1122, %v1119
    %v1124 = vmul.f32 %v1112, %v816
    %v1125 = vmul.f32 %v1109, %v817
    %v1126 = vsub.f32 %v1124, %v1125
    %v1127 = vmul.f32 %v1126, %v1119
    %vm1128 = vmxor %vm1107, %vm1026
    %vm1129 = vcmp.gt.s32.totalorder %v812, 4
    %vm1130 = vmand %vm1129, %vm1107
    %vm1131 = vmand %vm1129, %vm1128
    %vm1132 = vmand %vm1131, %vm1107
    %v1133 = vsel %vm1131, %v1101, 8
    %vm1134 = vcmp.eq.s32.totalorder %v1133, 0
    %v1135 = vsel %vm1134, %v1123, %v1078
    %v1136 = vsel %vm1134, %v1127, %v1079
    %vm1137 = vcmp.eq.s32.totalorder %v1133, 1
    %v1138 = vsel %vm1137, %v1123, %v1081
    %v1139 = vsel %vm1137, %v1127, %v1082
    %vm1140 = vcmp.eq.s32.totalorder %v1133, 2
    %v1141 = vsel %vm1140, %v1123, %v1084
    %v1142 = vsel %vm1140, %v1127, %v1085
    %vm1143 = vcmp.eq.s32.totalorder %v1133, 3
    %v1144 = vsel %vm1143, %v1123, %v1087
    %v1145 = vsel %vm1143, %v1127, %v1088
    %vm1146 = vcmp.eq.s32.totalorder %v1133, 4
    %v1147 = vsel %vm1146, %v1123, %v1090
    %v1148 = vsel %vm1146, %v1127, %v1091
    %vm1149 = vcmp.eq.s32.totalorder %v1133, 5
    %v1150 = vsel %vm1149, %v1123, %v1093
    %v1151 = vsel %vm1149, %v1127, %v1094
    %vm1152 = vcmp.eq.s32.totalorder %v1133, 6
    %v1153 = vsel %vm1152, %v1123, %v1096
    %v1154 = vsel %vm1152, %v1127, %v1097
    %v1155 = vsel %vm1132, 1, 0
    %v1156 = vadd.s32 %v1101, %v1155
    %v1157 = vsel %vm1130, %v1156, 8
    %vm1158 = vcmp.eq.s32.totalorder %v1157, 0
    %v1159 = vsel %vm1158, %v804, %v1135
    %v1160 = vsel %vm1158, %v805, %v1136
    %vm1161 = vcmp.eq.s32.totalorder %v1157, 1
    %v1162 = vsel %vm1161, %v804, %v1138
    %v1163 = vsel %vm1161, %v805, %v1139
    %vm1164 = vcmp.eq.s32.totalorder %v1157, 2
    %v1165 = vsel %vm1164, %v804, %v1141
    %v1166 = vsel %vm1164, %v805, %v1142
    %vm1167 = vcmp.eq.s32.totalorder %v1157, 3
    %v1168 = vsel %vm1167, %v804, %v1144
    %v1169 = vsel %vm1167, %v805, %v1145
    %vm1170 = vcmp.eq.s32.totalorder %v1157, 4
    %v1171 = vsel %vm1170, %v804, %v1147
    %v1172 = vsel %vm1170, %v805, %v1148
    %vm1173 = vcmp.eq.s32.totalorder %v1157, 5
    %v1174 = vsel %vm1173, %v804, %v1150
    %v1175 = vsel %vm1173, %v805, %v1151
    %vm1176 = vcmp.eq.s32.totalorder %v1157, 6
    %v1177 = vsel %vm1176, %v804, %v1153
    %v1178 = vsel %vm1176, %v805, %v1154
    %v1179 = vsel %vm1131, 1, 0
    %v1180 = vadd.s32 %v1101, %v1179
    %v1181 = vsel %vm1130, 1, 0
    %v1182 = vadd.s32 %v1180, %v1181
    %v1183 = vsub.f32 %v808, %v191
    %v1184 = vmul.f32 %v813, %v1183
    %v1185 = vsub.f32 %v807, %v189
    %v1186 = vmul.f32 %v814, %v1185
    %v1187 = vsub.f32 %v1184, %v1186
    %vm1188 = vcmp.le.f32.partialorder %v1187, 0.0
    %v1189 = vsub.f32 %v804, %v807
    %v1190 = vsub.f32 %v805, %v808
    %v1191 = vmul.f32 %v804, %v808
    %v1192 = vmul.f32 %v805, %v807
    %v1193 = vsub.f32 %v1191, %v1192
    %v1194 = vmul.f32 %v1189, %v816
    %v1195 = vmul.f32 %v1190, %v815
    %v1196 = vsub.f32 %v1194, %v1195
    %v1197 = vrcp.pop %v1196
    %v1198 = vmul.f32 %v1196, %v1197
    %v1199 = vsub.f32 2.0, %v1198
    %v1200 = vmul.f32 %v1197, %v1199
    %v1201 = vmul.f32 %v1193, %v815
    %v1202 = vmul.f32 %v1189, %v817
    %v1203 = vsub.f32 %v1201, %v1202
    %v1204 = vmul.f32 %v1203, %v1200
    %v1205 = vmul.f32 %v1193, %v816
    %v1206 = vmul.f32 %v1190, %v817
    %v1207 = vsub.f32 %v1205, %v1206
    %v1208 = vmul.f32 %v1207, %v1200
    %vm1209 = vmxor %vm1188, %vm1107
    %vm1210 = vcmp.gt.s32.totalorder %v812, 5
    %vm1211 = vmand %vm1210, %vm1188
    %vm1212 = vmand %vm1210, %vm1209
    %vm1213 = vmand %vm1212, %vm1188
    %v1214 = vsel %vm1212, %v1182, 8
    %vm1215 = vcmp.eq.s32.totalorder %v1214, 0
    %v1216 = vsel %vm1215, %v1204, %v1159
    %v1217 = vsel %vm1215, %v1208, %v1160
    %vm1218 = vcmp.eq.s32.totalorder %v1214, 1
    %v1219 = vsel %vm1218, %v1204, %v1162
    %v1220 = vsel %vm1218, %v1208, %v1163
    %vm1221 = vcmp.eq.s32.totalorder %v1214, 2
    %v1222 = vsel %vm1221, %v1204, %v1165
    %v1223 = vsel %vm1221, %v1208, %v1166
    %vm1224 = vcmp.eq.s32.totalorder %v1214, 3
    %v1225 = vsel %vm1224, %v1204, %v1168
    %v1226 = vsel %vm1224, %v1208, %v1169
    %vm1227 = vcmp.eq.s32.totalorder %v1214, 4
    %v1228 = vsel %vm1227, %v1204, %v1171
    %v1229 = vsel %vm1227, %v1208, %v1172
    %vm1230 = vcmp.eq.s32.totalorder %v1214, 5
    %v1231 = vsel %vm1230, %v1204, %v1174
    %v1232 = vsel %vm1230, %v1208, %v1175
    %vm1233 = vcmp.eq.s32.totalorder %v1214, 6
    %v1234 = vsel %vm1233, %v1204, %v1177
    %v1235 = vsel %vm1233, %v1208, %v1178
    %v1236 = vsel %vm1213, 1, 0
    %v1237 = vadd.s32 %v1182, %v1236
    %v1238 = vsel %vm1211, %v1237, 8
    %vm1239 = vcmp.eq.s32.totalorder %v1238, 0
    %v1240 = vsel %vm1239, %v807, %v1216
    %v1241 = vsel %vm1239, %v808, %v1217
    %vm1242 = vcmp.eq.s32.totalorder %v1238, 1
    %v1243 = vsel %vm1242, %v807, %v1219
    %v1244 = vsel %vm1242, %v808, %v1220
    %vm1245 = vcmp.eq.s32.totalorder %v1238, 2
    %v1246 = vsel %vm1245, %v807, %v1222
    %v1247 = vsel %vm1245, %v808, %v1223
    %vm1248 = vcmp.eq.s32.totalorder %v1238, 3
    %v1249 = vsel %vm1248, %v807, %v1225
    %v1250 = vsel %vm1248, %v808, %v1226
    %vm1251 = vcmp.eq.s32.totalorder %v1238, 4
    %v1252 = vsel %vm1251, %v807, %v1228
    %v1253 = vsel %vm1251, %v808, %v1229
    %vm1254 = vcmp.eq.s32.totalorder %v1238, 5
    %v1255 = vsel %vm1254, %v807, %v1231
    %v1256 = vsel %vm1254, %v808, %v1232
    %vm1257 = vcmp.eq.s32.totalorder %v1238, 6
    %v1258 = vsel %vm1257, %v807, %v1234
    %v1259 = vsel %vm1257, %v808, %v1235
    %v1260 = vsel %vm1212, 1, 0
    %v1261 = vadd.s32 %v1182, %v1260
    %v1262 = vsel %vm1211, 1, 0
    %v1263 = vadd.s32 %v1261, %v1262
    %v1264 = vsub.f32 %v159, %v190
    %v1265 = vsub.f32 %v161, %v192
    %v1266 = vsub.f32 0.0, %v1264
    %v1267 = vsub.f32 0.0, %v1265
    %v1268 = vsub.f32 %v206, %v205
    %v1269 = vsub.s32 %v1263, 1
    %vm1270 = vcmp.eq.s32.totalorder %v1269, 0
    %v1271 = vsel %vm1270, %v1240, 0.0
    %v1272 = vsel %vm1270, %v1241, 0.0
    %vm1273 = vcmp.eq.s32.totalorder %v1269, 1
    %v1274 = vsel %vm1273, %v1243, %v1271
    %v1275 = vsel %vm1273, %v1244, %v1272
    %vm1276 = vcmp.eq.s32.totalorder %v1269, 2
    %v1277 = vsel %vm1276, %v1246, %v1274
    %v1278 = vsel %vm1276, %v1247, %v1275
    %vm1279 = vcmp.eq.s32.totalorder %v1269, 3
    %v1280 = vsel %vm1279, %v1249, %v1277
    %v1281 = vsel %vm1279, %v1250, %v1278
    %vm1282 = vcmp.eq.s32.totalorder %v1269, 4
    %v1283 = vsel %vm1282, %v1252, %v1280
    %v1284 = vsel %vm1282, %v1253, %v1281
    %vm1285 = vcmp.eq.s32.totalorder %v1269, 5
    %v1286 = vsel %vm1285, %v1255, %v1283
    %v1287 = vsel %vm1285, %v1256, %v1284
    %vm1288 = vcmp.eq.s32.totalorder %v1269, 6
    %v1289 = vsel %vm1288, %v1258, %v1286
    %v1290 = vsel %vm1288, %v1259, %v1287
    %v1291 = vsub.f32 %v1290, %v192
    %v1292 = vmul.f32 %v1264, %v1291
    %v1293 = vsub.f32 %v1289, %v190
    %v1294 = vmul.f32 %v1265, %v1293
    %v1295 = vsub.f32 %v1292, %v1294
    %vm1296 = vcmp.le.f32.partialorder %v1295, 0.0
    %v1297 = vsub.f32 %v1241, %v192
    %v1298 = vmul.f32 %v1264, %v1297
    %v1299 = vsub.f32 %v1240, %v190
    %v1300 = vmul.f32 %v1265, %v1299
    %v1301 = vsub.f32 %v1298, %v1300
    %vm1302 = vcmp.le.f32.partialorder %v1301, 0.0
    %v1303 = vsub.f32 %v1289, %v1240
    %v1304 = vsub.f32 %v1290, %v1241
    %v1305 = vmul.f32 %v1289, %v1241
    %v1306 = vmul.f32 %v1290, %v1240
    %v1307 = vsub.f32 %v1305, %v1306
    %v1308 = vmul.f32 %v1303, %v1267
    %v1309 = vmul.f32 %v1304, %v1266
    %v1310 = vsub.f32 %v1308, %v1309
    %v1311 = vrcp.pop %v1310
    %v1312 = vmul.f32 %v1310, %v1311
    %v1313 = vsub.f32 2.0, %v1312
    %v1314 = vmul.f32 %v1311, %v1313
    %v1315 = vmul.f32 %v1307, %v1266
    %v1316 = vmul.f32 %v1303, %v1268
    %v1317 = vsub.f32 %v1315, %v1316
    %v1318 = vmul.f32 %v1317, %v1314
    %v1319 = vmul.f32 %v1307, %v1267
    %v1320 = vmul.f32 %v1304, %v1268
    %v1321 = vsub.f32 %v1319, %v1320
    %v1322 = vmul.f32 %v1321, %v1314
    %vm1323 = vmxor %vm1302, %vm1296
    %vm1324 = vcmp.gt.s32.totalorder %v1263, 0
    %vm1325 = vmand %vm1324, %vm1302
    %vm1326 = vmand %vm1324, %vm1323
    %vm1327 = vmand %vm1326, %vm1302
    %v1328 = vsel %vm1326, 0, 8
    %vm1329 = vcmp.eq.s32.totalorder %v1328, 0
    %v1330 = vsel %vm1329, %v1318, 0.0
    %v1331 = vsel %vm1329, %v1322, 0.0
    %v1332 = vsel %vm1327, 1, 0
    %v1333 = vsel %vm1325, %v1332, 8
    %vm1334 = vcmp.eq.s32.totalorder %v1333, 0
    %v1335 = vsel %vm1334, %v1240, %v1330
    %v1336 = vsel %vm1334, %v1241, %v1331
    %vm1337 = vcmp.eq.s32.totalorder %v1333, 1
    %v1338 = vsel %vm1337, %v1240, 0.0
    %v1339 = vsel %vm1337, %v1241, 0.0
    %v1340 = vsel %vm1326, 1, 0
    %v1341 = vsel %vm1325, 1, 0
    %v1342 = vadd.s32 %v1340, %v1341
    %v1343 = vsub.f32 %v1244, %v192
    %v1344 = vmul.f32 %v1264, %v1343
    %v1345 = vsub.f32 %v1243, %v190
    %v1346 = vmul.f32 %v1265, %v1345
    %v1347 = vsub.f32 %v1344, %v1346
    %vm1348 = vcmp.le.f32.partialorder %v1347, 0.0
    %v1349 = vsub.f32 %v1240, %v1243
    %v1350 = vsub.f32 %v1241, %v1244
    %v1351 = vmul.f32 %v1240, %v1244
    %v1352 = vmul.f32 %v1241, %v1243
    %v1353 = vsub.f32 %v1351, %v1352
    %v1354 = vmul.f32 %v1349, %v1267
    %v1355 = vmul.f32 %v1350, %v1266
    %v1356 = vsub.f32 %v1354, %v1355
    %v1357 = vrcp.pop %v1356
    %v1358 = vmul.f32 %v1356, %v1357
    %v1359 = vsub.f32 2.0, %v1358
    %v1360 = vmul.f32 %v1357, %v1359
    %v1361 = vmul.f32 %v1353, %v1266
    %v1362 = vmul.f32 %v1349, %v1268
    %v1363 = vsub.f32 %v1361, %v1362
    %v1364 = vmul.f32 %v1363, %v1360
    %v1365 = vmul.f32 %v1353, %v1267
    %v1366 = vmul.f32 %v1350, %v1268
    %v1367 = vsub.f32 %v1365, %v1366
    %v1368 = vmul.f32 %v1367, %v1360
    %vm1369 = vmxor %vm1348, %vm1302
    %vm1370 = vcmp.gt.s32.totalorder %v1263, 1
    %vm1371 = vmand %vm1370, %vm1348
    %vm1372 = vmand %vm1370, %vm1369
    %vm1373 = vmand %vm1372, %vm1348
    %v1374 = vsel %vm1372, %v1342, 8
    %vm1375 = vcmp.eq.s32.totalorder %v1374, 0
    %v1376 = vsel %vm1375, %v1364, %v1335
    %v1377 = vsel %vm1375, %v1368, %v1336
    %vm1378 = vcmp.eq.s32.totalorder %v1374, 1
    %v1379 = vsel %vm1378, %v1364, %v1338
    %v1380 = vsel %vm1378, %v1368, %v1339
    %vm1381 = vcmp.eq.s32.totalorder %v1374, 2
    %v1382 = vsel %vm1381, %v1364, 0.0
    %v1383 = vsel %vm1381, %v1368, 0.0
    %v1384 = vsel %vm1373, 1, 0
    %v1385 = vadd.s32 %v1342, %v1384
    %v1386 = vsel %vm1371, %v1385, 8
    %vm1387 = vcmp.eq.s32.totalorder %v1386, 0
    %v1388 = vsel %vm1387, %v1243, %v1376
    %v1389 = vsel %vm1387, %v1244, %v1377
    %vm1390 = vcmp.eq.s32.totalorder %v1386, 1
    %v1391 = vsel %vm1390, %v1243, %v1379
    %v1392 = vsel %vm1390, %v1244, %v1380
    %vm1393 = vcmp.eq.s32.totalorder %v1386, 2
    %v1394 = vsel %vm1393, %v1243, %v1382
    %v1395 = vsel %vm1393, %v1244, %v1383
    %vm1396 = vcmp.eq.s32.totalorder %v1386, 3
    %v1397 = vsel %vm1396, %v1243, 0.0
    %v1398 = vsel %vm1396, %v1244, 0.0
    %v1399 = vsel %vm1372, 1, 0
    %v1400 = vadd.s32 %v1342, %v1399
    %v1401 = vsel %vm1371, 1, 0
    %v1402 = vadd.s32 %v1400, %v1401
    %v1403 = vsub.f32 %v1247, %v192
    %v1404 = vmul.f32 %v1264, %v1403
    %v1405 = vsub.f32 %v1246, %v190
    %v1406 = vmul.f32 %v1265, %v1405
    %v1407 = vsub.f32 %v1404, %v1406
    %vm1408 = vcmp.le.f32.partialorder %v1407, 0.0
    %v1409 = vsub.f32 %v1243, %v1246
    %v1410 = vsub.f32 %v1244, %v1247
    %v1411 = vmul.f32 %v1243, %v1247
    %v1412 = vmul.f32 %v1244, %v1246
    %v1413 = vsub.f32 %v1411, %v1412
    %v1414 = vmul.f32 %v1409, %v1267
    %v1415 = vmul.f32 %v1410, %v1266
    %v1416 = vsub.f32 %v1414, %v1415
    %v1417 = vrcp.pop %v1416
    %v1418 = vmul.f32 %v1416, %v1417
    %v1419 = vsub.f32 2.0, %v1418
    %v1420 = vmul.f32 %v1417, %v1419
    %v1421 = vmul.f32 %v1413, %v1266
    %v1422 = vmul.f32 %v1409, %v1268
    %v1423 = vsub.f32 %v1421, %v1422
    %v1424 = vmul.f32 %v1423, %v1420
    %v1425 = vmul.f32 %v1413, %v1267
    %v1426 = vmul.f32 %v1410, %v1268
    %v1427 = vsub.f32 %v1425, %v1426
    %v1428 = vmul.f32 %v1427, %v1420
    %vm1429 = vmxor %vm1408, %vm1348
    %vm1430 = vcmp.gt.s32.totalorder %v1263, 2
    %vm1431 = vmand %vm1430, %vm1408
    %vm1432 = vmand %vm1430, %vm1429
    %vm1433 = vmand %vm1432, %vm1408
    %v1434 = vsel %vm1432, %v1402, 8
    %vm1435 = vcmp.eq.s32.totalorder %v1434, 0
    %v1436 = vsel %vm1435, %v1424, %v1388
    %v1437 = vsel %vm1435, %v1428, %v1389
    %vm1438 = vcmp.eq.s32.totalorder %v1434, 1
    %v1439 = vsel %vm1438, %v1424, %v1391
    %v1440 = vsel %vm1438, %v1428, %v1392
    %vm1441 = vcmp.eq.s32.totalorder %v1434, 2
    %v1442 = vsel %vm1441, %v1424, %v1394
    %v1443 = vsel %vm1441, %v1428, %v1395
    %vm1444 = vcmp.eq.s32.totalorder %v1434, 3
    %v1445 = vsel %vm1444, %v1424, %v1397
    %v1446 = vsel %vm1444, %v1428, %v1398
    %vm1447 = vcmp.eq.s32.totalorder %v1434, 4
    %v1448 = vsel %vm1447, %v1424, 0.0
    %v1449 = vsel %vm1447, %v1428, 0.0
    %v1450 = vsel %vm1433, 1, 0
    %v1451 = vadd.s32 %v1402, %v1450
    %v1452 = vsel %vm1431, %v1451, 8
    %vm1453 = vcmp.eq.s32.totalorder %v1452, 0
    %v1454 = vsel %vm1453, %v1246, %v1436
    %v1455 = vsel %vm1453, %v1247, %v1437
    %vm1456 = vcmp.eq.s32.totalorder %v1452, 1
    %v1457 = vsel %vm1456, %v1246, %v1439
    %v1458 = vsel %vm1456, %v1247, %v1440
    %vm1459 = vcmp.eq.s32.totalorder %v1452, 2
    %v1460 = vsel %vm1459, %v1246, %v1442
    %v1461 = vsel %vm1459, %v1247, %v1443
    %vm1462 = vcmp.eq.s32.totalorder %v1452, 3
    %v1463 = vsel %vm1462, %v1246, %v1445
    %v1464 = vsel %vm1462, %v1247, %v1446
    %vm1465 = vcmp.eq.s32.totalorder %v1452, 4
    %v1466 = vsel %vm1465, %v1246, %v1448
    %v1467 = vsel %vm1465, %v1247, %v1449
    %vm1468 = vcmp.eq.s32.totalorder %v1452, 5
    %v1469 = vsel %vm1468, %v1246, 0.0
    %v1470 = vsel %vm1468, %v1247, 0.0
    %v1471 = vsel %vm1432, 1, 0
    %v1472 = vadd.s32 %v1402, %v1471
    %v1473 = vsel %vm1431, 1, 0
    %v1474 = vadd.s32 %v1472, %v1473
    %v1475 = vsub.f32 %v1250, %v192
    %v1476 = vmul.f32 %v1264, %v1475
    %v1477 = vsub.f32 %v1249, %v190
    %v1478 = vmul.f32 %v1265, %v1477
    %v1479 = vsub.f32 %v1476, %v1478
    %vm1480 = vcmp.le.f32.partialorder %v1479, 0.0
    %v1481 = vsub.f32 %v1246, %v1249
    %v1482 = vsub.f32 %v1247, %v1250
    %v1483 = vmul.f32 %v1246, %v1250
    %v1484 = vmul.f32 %v1247, %v1249
    %v1485 = vsub.f32 %v1483, %v1484
    %v1486 = vmul.f32 %v1481, %v1267
    %v1487 = vmul.f32 %v1482, %v1266
    %v1488 = vsub.f32 %v1486, %v1487
    %v1489 = vrcp.pop %v1488
    %v1490 = vmul.f32 %v1488, %v1489
    %v1491 = vsub.f32 2.0, %v1490
    %v1492 = vmul.f32 %v1489, %v1491
    %v1493 = vmul.f32 %v1485, %v1266
    %v1494 = vmul.f32 %v1481, %v1268
    %v1495 = vsub.f32 %v1493, %v1494
    %v1496 = vmul.f32 %v1495, %v1492
    %v1497 = vmul.f32 %v1485, %v1267
    %v1498 = vmul.f32 %v1482, %v1268
    %v1499 = vsub.f32 %v1497, %v1498
    %v1500 = vmul.f32 %v1499, %v1492
    %vm1501 = vmxor %vm1480, %vm1408
    %vm1502 = vcmp.gt.s32.totalorder %v1263, 3
    %vm1503 = vmand %vm1502, %vm1480
    %vm1504 = vmand %vm1502, %vm1501
    %vm1505 = vmand %vm1504, %vm1480
    %v1506 = vsel %vm1504, %v1474, 8
    %vm1507 = vcmp.eq.s32.totalorder %v1506, 0
    %v1508 = vsel %vm1507, %v1496, %v1454
    %v1509 = vsel %vm1507, %v1500, %v1455
    %vm1510 = vcmp.eq.s32.totalorder %v1506, 1
    %v1511 = vsel %vm1510, %v1496, %v1457
    %v1512 = vsel %vm1510, %v1500, %v1458
    %vm1513 = vcmp.eq.s32.totalorder %v1506, 2
    %v1514 = vsel %vm1513, %v1496, %v1460
    %v1515 = vsel %vm1513, %v1500, %v1461
    %vm1516 = vcmp.eq.s32.totalorder %v1506, 3
    %v1517 = vsel %vm1516, %v1496, %v1463
    %v1518 = vsel %vm1516, %v1500, %v1464
    %vm1519 = vcmp.eq.s32.totalorder %v1506, 4
    %v1520 = vsel %vm1519, %v1496, %v1466
    %v1521 = vsel %vm1519, %v1500, %v1467
    %vm1522 = vcmp.eq.s32.totalorder %v1506, 5
    %v1523 = vsel %vm1522, %v1496, %v1469
    %v1524 = vsel %vm1522, %v1500, %v1470
    %vm1525 = vcmp.eq.s32.totalorder %v1506, 6
    %v1526 = vsel %vm1525, %v1496, 0.0
    %v1527 = vsel %vm1525, %v1500, 0.0
    %v1528 = vsel %vm1505, 1, 0
    %v1529 = vadd.s32 %v1474, %v1528
    %v1530 = vsel %vm1503, %v1529, 8
    %vm1531 = vcmp.eq.s32.totalorder %v1530, 0
    %v1532 = vsel %vm1531, %v1249, %v1508
    %v1533 = vsel %vm1531, %v1250, %v1509
    %vm1534 = vcmp.eq.s32.totalorder %v1530, 1
    %v1535 = vsel %vm1534, %v1249, %v1511
    %v1536 = vsel %vm1534, %v1250, %v1512
    %vm1537 = vcmp.eq.s32.totalorder %v1530, 2
    %v1538 = vsel %vm1537, %v1249, %v1514
    %v1539 = vsel %vm1537, %v1250, %v1515
    %vm1540 = vcmp.eq.s32.totalorder %v1530, 3
    %v1541 = vsel %vm1540, %v1249, %v1517
    %v1542 = vsel %vm1540, %v1250, %v1518
    %vm1543 = vcmp.eq.s32.totalorder %v1530, 4
    %v1544 = vsel %vm1543, %v1249, %v1520
    %v1545 = vsel %vm1543, %v1250, %v1521
    %vm1546 = vcmp.eq.s32.totalorder %v1530, 5
    %v1547 = vsel %vm1546, %v1249, %v1523
    %v1548 = vsel %vm1546, %v1250, %v1524
    %vm1549 = vcmp.eq.s32.totalorder %v1530, 6
    %v1550 = vsel %vm1549, %v1249, %v1526
    %v1551 = vsel %vm1549, %v1250, %v1527
    %vm1552 = vcmp.eq.s32.totalorder %v1530, 7
    %v1553 = vsel %vm1552, %v1249, 0.0
    %v1554 = vsel %vm1552, %v1250, 0.0
    %v1555 = vsel %vm1504, 1, 0
    %v1556 = vadd.s32 %v1474, %v1555
    %v1557 = vsel %vm1503, 1, 0
    %v1558 = vadd.s32 %v1556, %v1557
    %v1559 = vsub.f32 %v1253, %v192
    %v1560 = vmul.f32 %v1264, %v1559
    %v1561 = vsub.f32 %v1252, %v190
    %v1562 = vmul.f32 %v1265, %v1561
    %v1563 = vsub.f32 %v1560, %v1562
    %vm1564 = vcmp.le.f32.partialorder %v1563, 0.0
    %v1565 = vsub.f32 %v1249, %v1252
    %v1566 = vsub.f32 %v1250, %v1253
    %v1567 = vmul.f32 %v1249, %v1253
    %v1568 = vmul.f32 %v1250, %v1252
    %v1569 = vsub.f32 %v1567, %v1568
    %v1570 = vmul.f32 %v1565, %v1267
    %v1571 = vmul.f32 %v1566, %v1266
    %v1572 = vsub.f32 %v1570, %v1571
    %v1573 = vrcp.pop %v1572
    %v1574 = vmul.f32 %v1572, %v1573
    %v1575 = vsub.f32 2.0, %v1574
    %v1576 = vmul.f32 %v1573, %v1575
    %v1577 = vmul.f32 %v1569, %v1266
    %v1578 = vmul.f32 %v1565, %v1268
    %v1579 = vsub.f32 %v1577, %v1578
    %v1580 = vmul.f32 %v1579, %v1576
    %v1581 = vmul.f32 %v1569, %v1267
    %v1582 = vmul.f32 %v1566, %v1268
    %v1583 = vsub.f32 %v1581, %v1582
    %v1584 = vmul.f32 %v1583, %v1576
    %vm1585 = vmxor %vm1564, %vm1480
    %vm1586 = vcmp.gt.s32.totalorder %v1263, 4
    %vm1587 = vmand %vm1586, %vm1564
    %vm1588 = vmand %vm1586, %vm1585
    %vm1589 = vmand %vm1588, %vm1564
    %v1590 = vsel %vm1588, %v1558, 8
    %vm1591 = vcmp.eq.s32.totalorder %v1590, 0
    %v1592 = vsel %vm1591, %v1580, %v1532
    %v1593 = vsel %vm1591, %v1584, %v1533
    %vm1594 = vcmp.eq.s32.totalorder %v1590, 1
    %v1595 = vsel %vm1594, %v1580, %v1535
    %v1596 = vsel %vm1594, %v1584, %v1536
    %vm1597 = vcmp.eq.s32.totalorder %v1590, 2
    %v1598 = vsel %vm1597, %v1580, %v1538
    %v1599 = vsel %vm1597, %v1584, %v1539
    %vm1600 = vcmp.eq.s32.totalorder %v1590, 3
    %v1601 = vsel %vm1600, %v1580, %v1541
    %v1602 = vsel %vm1600, %v1584, %v1542
    %vm1603 = vcmp.eq.s32.totalorder %v1590, 4
    %v1604 = vsel %vm1603, %v1580, %v1544
    %v1605 = vsel %vm1603, %v1584, %v1545
    %vm1606 = vcmp.eq.s32.totalorder %v1590, 5
    %v1607 = vsel %vm1606, %v1580, %v1547
    %v1608 = vsel %vm1606, %v1584, %v1548
    %vm1609 = vcmp.eq.s32.totalorder %v1590, 6
    %v1610 = vsel %vm1609, %v1580, %v1550
    %v1611 = vsel %vm1609, %v1584, %v1551
    %vm1612 = vcmp.eq.s32.totalorder %v1590, 7
    %v1613 = vsel %vm1612, %v1580, %v1553
    %v1614 = vsel %vm1612, %v1584, %v1554
    %v1615 = vsel %vm1589, 1, 0
    %v1616 = vadd.s32 %v1558, %v1615
    %v1617 = vsel %vm1587, %v1616, 8
    %vm1618 = vcmp.eq.s32.totalorder %v1617, 0
    %v1619 = vsel %vm1618, %v1252, %v1592
    %v1620 = vsel %vm1618, %v1253, %v1593
    %vm1621 = vcmp.eq.s32.totalorder %v1617, 1
    %v1622 = vsel %vm1621, %v1252, %v1595
    %v1623 = vsel %vm1621, %v1253, %v1596
    %vm1624 = vcmp.eq.s32.totalorder %v1617, 2
    %v1625 = vsel %vm1624, %v1252, %v1598
    %v1626 = vsel %vm1624, %v1253, %v1599
    %vm1627 = vcmp.eq.s32.totalorder %v1617, 3
    %v1628 = vsel %vm1627, %v1252, %v1601
    %v1629 = vsel %vm1627, %v1253, %v1602
    %vm1630 = vcmp.eq.s32.totalorder %v1617, 4
    %v1631 = vsel %vm1630, %v1252, %v1604
    %v1632 = vsel %vm1630, %v1253, %v1605
    %vm1633 = vcmp.eq.s32.totalorder %v1617, 5
    %v1634 = vsel %vm1633, %v1252, %v1607
    %v1635 = vsel %vm1633, %v1253, %v1608
    %vm1636 = vcmp.eq.s32.totalorder %v1617, 6
    %v1637 = vsel %vm1636, %v1252, %v1610
    %v1638 = vsel %vm1636, %v1253, %v1611
    %vm1639 = vcmp.eq.s32.totalorder %v1617, 7
    %v1640 = vsel %vm1639, %v1252, %v1613
    %v1641 = vsel %vm1639, %v1253, %v1614
    %v1642 = vsel %vm1588, 1, 0
    %v1643 = vadd.s32 %v1558, %v1642
    %v1644 = vsel %vm1587, 1, 0
    %v1645 = vadd.s32 %v1643, %v1644
    %v1646 = vsub.f32 %v1256, %v192
    %v1647 = vmul.f32 %v1264, %v1646
    %v1648 = vsub.f32 %v1255, %v190
    %v1649 = vmul.f32 %v1265, %v1648
    %v1650 = vsub.f32 %v1647, %v1649
    %vm1651 = vcmp.le.f32.partialorder %v1650, 0.0
    %v1652 = vsub.f32 %v1252, %v1255
    %v1653 = vsub.f32 %v1253, %v1256
    %v1654 = vmul.f32 %v1252, %v1256
    %v1655 = vmul.f32 %v1253, %v1255
    %v1656 = vsub.f32 %v1654, %v1655
    %v1657 = vmul.f32 %v1652, %v1267
    %v1658 = vmul.f32 %v1653, %v1266
    %v1659 = vsub.f32 %v1657, %v1658
    %v1660 = vrcp.pop %v1659
    %v1661 = vmul.f32 %v1659, %v1660
    %v1662 = vsub.f32 2.0, %v1661
    %v1663 = vmul.f32 %v1660, %v1662
    %v1664 = vmul.f32 %v1656, %v1266
    %v1665 = vmul.f32 %v1652, %v1268
    %v1666 = vsub.f32 %v1664, %v1665
    %v1667 = vmul.f32 %v1666, %v1663
    %v1668 = vmul.f32 %v1656, %v1267
    %v1669 = vmul.f32 %v1653, %v1268
    %v1670 = vsub.f32 %v1668, %v1669
    %v1671 = vmul.f32 %v1670, %v1663
    %vm1672 = vmxor %vm1651, %vm1564
    %vm1673 = vcmp.gt.s32.totalorder %v1263, 5
    %vm1674 = vmand %vm1673, %vm1651
    %vm1675 = vmand %vm1673, %vm1672
    %vm1676 = vmand %vm1675, %vm1651
    %v1677 = vsel %vm1675, %v1645, 8
    %vm1678 = vcmp.eq.s32.totalorder %v1677, 0
    %v1679 = vsel %vm1678, %v1667, %v1619
    %v1680 = vsel %vm1678, %v1671, %v1620
    %vm1681 = vcmp.eq.s32.totalorder %v1677, 1
    %v1682 = vsel %vm1681, %v1667, %v1622
    %v1683 = vsel %vm1681, %v1671, %v1623
    %vm1684 = vcmp.eq.s32.totalorder %v1677, 2
    %v1685 = vsel %vm1684, %v1667, %v1625
    %v1686 = vsel %vm1684, %v1671, %v1626
    %vm1687 = vcmp.eq.s32.totalorder %v1677, 3
    %v1688 = vsel %vm1687, %v1667, %v1628
    %v1689 = vsel %vm1687, %v1671, %v1629
    %vm1690 = vcmp.eq.s32.totalorder %v1677, 4
    %v1691 = vsel %vm1690, %v1667, %v1631
    %v1692 = vsel %vm1690, %v1671, %v1632
    %vm1693 = vcmp.eq.s32.totalorder %v1677, 5
    %v1694 = vsel %vm1693, %v1667, %v1634
    %v1695 = vsel %vm1693, %v1671, %v1635
    %vm1696 = vcmp.eq.s32.totalorder %v1677, 6
    %v1697 = vsel %vm1696, %v1667, %v1637
    %v1698 = vsel %vm1696, %v1671, %v1638
    %vm1699 = vcmp.eq.s32.totalorder %v1677, 7
    %v1700 = vsel %vm1699, %v1667, %v1640
    %v1701 = vsel %vm1699, %v1671, %v1641
    %v1702 = vsel %vm1676, 1, 0
    %v1703 = vadd.s32 %v1645, %v1702
    %v1704 = vsel %vm1674, %v1703, 8
    %vm1705 = vcmp.eq.s32.totalorder %v1704, 0
    %v1706 = vsel %vm1705, %v1255, %v1679
    %v1707 = vsel %vm1705, %v1256, %v1680
    %vm1708 = vcmp.eq.s32.totalorder %v1704, 1
    %v1709 = vsel %vm1708, %v1255, %v1682
    %v1710 = vsel %vm1708, %v1256, %v1683
    %vm1711 = vcmp.eq.s32.totalorder %v1704, 2
    %v1712 = vsel %vm1711, %v1255, %v1685
    %v1713 = vsel %vm1711, %v1256, %v1686
    %vm1714 = vcmp.eq.s32.totalorder %v1704, 3
    %v1715 = vsel %vm1714, %v1255, %v1688
    %v1716 = vsel %vm1714, %v1256, %v1689
    %vm1717 = vcmp.eq.s32.totalorder %v1704, 4
    %v1718 = vsel %vm1717, %v1255, %v1691
    %v1719 = vsel %vm1717, %v1256, %v1692
    %vm1720 = vcmp.eq.s32.totalorder %v1704, 5
    %v1721 = vsel %vm1720, %v1255, %v1694
    %v1722 = vsel %vm1720, %v1256, %v1695
    %vm1723 = vcmp.eq.s32.totalorder %v1704, 6
    %v1724 = vsel %vm1723, %v1255, %v1697
    %v1725 = vsel %vm1723, %v1256, %v1698
    %vm1726 = vcmp.eq.s32.totalorder %v1704, 7
    %v1727 = vsel %vm1726, %v1255, %v1700
    %v1728 = vsel %vm1726, %v1256, %v1701
    %v1729 = vsel %vm1675, 1, 0
    %v1730 = vadd.s32 %v1645, %v1729
    %v1731 = vsel %vm1674, 1, 0
    %v1732 = vadd.s32 %v1730, %v1731
    %v1733 = vsub.f32 %v1259, %v192
    %v1734 = vmul.f32 %v1264, %v1733
    %v1735 = vsub.f32 %v1258, %v190
    %v1736 = vmul.f32 %v1265, %v1735
    %v1737 = vsub.f32 %v1734, %v1736
    %vm1738 = vcmp.le.f32.partialorder %v1737, 0.0
    %v1739 = vsub.f32 %v1255, %v1258
    %v1740 = vsub.f32 %v1256, %v1259
    %v1741 = vmul.f32 %v1255, %v1259
    %v1742 = vmul.f32 %v1256, %v1258
    %v1743 = vsub.f32 %v1741, %v1742
    %v1744 = vmul.f32 %v1739, %v1267
    %v1745 = vmul.f32 %v1740, %v1266
    %v1746 = vsub.f32 %v1744, %v1745
    %v1747 = vrcp.pop %v1746
    %v1748 = vmul.f32 %v1746, %v1747
    %v1749 = vsub.f32 2.0, %v1748
    %v1750 = vmul.f32 %v1747, %v1749
    %v1751 = vmul.f32 %v1743, %v1266
    %v1752 = vmul.f32 %v1739, %v1268
    %v1753 = vsub.f32 %v1751, %v1752
    %v1754 = vmul.f32 %v1753, %v1750
    %v1755 = vmul.f32 %v1743, %v1267
    %v1756 = vmul.f32 %v1740, %v1268
    %v1757 = vsub.f32 %v1755, %v1756
    %v1758 = vmul.f32 %v1757, %v1750
    %vm1759 = vmxor %vm1738, %vm1651
    %vm1760 = vcmp.gt.s32.totalorder %v1263, 6
    %vm1761 = vmand %vm1760, %vm1738
    %vm1762 = vmand %vm1760, %vm1759
    %vm1763 = vmand %vm1762, %vm1738
    %v1764 = vsel %vm1762, %v1732, 8
    %vm1765 = vcmp.eq.s32.totalorder %v1764, 0
    %v1766 = vsel %vm1765, %v1754, %v1706
    %v1767 = vsel %vm1765, %v1758, %v1707
    %vm1768 = vcmp.eq.s32.totalorder %v1764, 1
    %v1769 = vsel %vm1768, %v1754, %v1709
    %v1770 = vsel %vm1768, %v1758, %v1710
    %vm1771 = vcmp.eq.s32.totalorder %v1764, 2
    %v1772 = vsel %vm1771, %v1754, %v1712
    %v1773 = vsel %vm1771, %v1758, %v1713
    %vm1774 = vcmp.eq.s32.totalorder %v1764, 3
    %v1775 = vsel %vm1774, %v1754, %v1715
    %v1776 = vsel %vm1774, %v1758, %v1716
    %vm1777 = vcmp.eq.s32.totalorder %v1764, 4
    %v1778 = vsel %vm1777, %v1754, %v1718
    %v1779 = vsel %vm1777, %v1758, %v1719
    %vm1780 = vcmp.eq.s32.totalorder %v1764, 5
    %v1781 = vsel %vm1780, %v1754, %v1721
    %v1782 = vsel %vm1780, %v1758, %v1722
    %vm1783 = vcmp.eq.s32.totalorder %v1764, 6
    %v1784 = vsel %vm1783, %v1754, %v1724
    %v1785 = vsel %vm1783, %v1758, %v1725
    %vm1786 = vcmp.eq.s32.totalorder %v1764, 7
    %v1787 = vsel %vm1786, %v1754, %v1727
    %v1788 = vsel %vm1786, %v1758, %v1728
    %v1789 = vsel %vm1763, 1, 0
    %v1790 = vadd.s32 %v1732, %v1789
    %v1791 = vsel %vm1761, %v1790, 8
    %vm1792 = vcmp.eq.s32.totalorder %v1791, 0
    %v1793 = vsel %vm1792, %v1258, %v1766
    %v1794 = vsel %vm1792, %v1259, %v1767
    %vm1795 = vcmp.eq.s32.totalorder %v1791, 1
    %v1796 = vsel %vm1795, %v1258, %v1769
    %v1797 = vsel %vm1795, %v1259, %v1770
    %vm1798 = vcmp.eq.s32.totalorder %v1791, 2
    %v1799 = vsel %vm1798, %v1258, %v1772
    %v1800 = vsel %vm1798, %v1259, %v1773
    %vm1801 = vcmp.eq.s32.totalorder %v1791, 3
    %v1802 = vsel %vm1801, %v1258, %v1775
    %v1803 = vsel %vm1801, %v1259, %v1776
    %vm1804 = vcmp.eq.s32.totalorder %v1791, 4
    %v1805 = vsel %vm1804, %v1258, %v1778
    %v1806 = vsel %vm1804, %v1259, %v1779
    %vm1807 = vcmp.eq.s32.totalorder %v1791, 5
    %v1808 = vsel %vm1807, %v1258, %v1781
    %v1809 = vsel %vm1807, %v1259, %v1782
    %vm1810 = vcmp.eq.s32.totalorder %v1791, 6
    %v1811 = vsel %vm1810, %v1258, %v1784
    %v1812 = vsel %vm1810, %v1259, %v1785
    %vm1813 = vcmp.eq.s32.totalorder %v1791, 7
    %v1814 = vsel %vm1813, %v1258, %v1787
    %v1815 = vsel %vm1813, %v1259, %v1788
    %v1816 = vsel %vm1762, 1, 0
    %v1817 = vadd.s32 %v1732, %v1816
    %v1818 = vsel %vm1761, 1, 0
    %v1819 = vadd.s32 %v1817, %v1818
    %vm1820 = vcmp.gt.s32.totalorder %v1819, 0
    %v1821 = vsub.s32 %v1819, 1
    %vm1822 = vcmp.eq.s32.totalorder %v1821, 0
    %v1823 = vsel %vm1822, %v1793, 0.0
    %v1824 = vsel %vm1822, %v1794, 0.0
    %vm1825 = vcmp.eq.s32.totalorder %v1821, 1
    %v1826 = vsel %vm1825, %v1796, %v1823
    %v1827 = vsel %vm1825, %v1797, %v1824
    %vm1828 = vcmp.eq.s32.totalorder %v1821, 2
    %v1829 = vsel %vm1828, %v1799, %v1826
    %v1830 = vsel %vm1828, %v1800, %v1827
    %vm1831 = vcmp.eq.s32.totalorder %v1821, 3
    %v1832 = vsel %vm1831, %v1802, %v1829
    %v1833 = vsel %vm1831, %v1803, %v1830
    %vm1834 = vcmp.eq.s32.totalorder %v1821, 4
    %v1835 = vsel %vm1834, %v1805, %v1832
    %v1836 = vsel %vm1834, %v1806, %v1833
    %vm1837 = vcmp.eq.s32.totalorder %v1821, 5
    %v1838 = vsel %vm1837, %v1808, %v1835
    %v1839 = vsel %vm1837, %v1809, %v1836
    %vm1840 = vcmp.eq.s32.totalorder %v1821, 6
    %v1841 = vsel %vm1840, %v1811, %v1838
    %v1842 = vsel %vm1840, %v1812, %v1839
    %vm1843 = vcmp.eq.s32.totalorder %v1821, 7
    %v1844 = vsel %vm1843, %v1814, %v1841
    %v1845 = vsel %vm1843, %v1815, %v1842
    %v1846 = vmul.f32 %v1793, %v1845
    %v1847 = vmul.f32 %v1794, %v1844
    %v1848 = vsub.f32 %v1846, %v1847
    %v1849 = vsel %vm1820, %v1848, 0.0
    %v1850 = vadd.f32 %v1849, 0.0
    %vm1851 = vcmp.gt.s32.totalorder %v1819, 1
    %v1852 = vmul.f32 %v1796, %v1794
    %v1853 = vmul.f32 %v1797, %v1793
    %v1854 = vsub.f32 %v1852, %v1853
    %v1855 = vsel %vm1851, %v1854, 0.0
    %v1856 = vadd.f32 %v1850, %v1855
    %vm1857 = vcmp.gt.s32.totalorder %v1819, 2
    %v1858 = vmul.f32 %v1799, %v1797
    %v1859 = vmul.f32 %v1800, %v1796
    %v1860 = vsub.f32 %v1858, %v1859
    %v1861 = vsel %vm1857, %v1860, 0.0
    %v1862 = vadd.f32 %v1856, %v1861
    %vm1863 = vcmp.gt.s32.totalorder %v1819, 3
    %v1864 = vmul.f32 %v1802, %v1800
    %v1865 = vmul.f32 %v1803, %v1799
    %v1866 = vsub.f32 %v1864, %v1865
    %v1867 = vsel %vm1863, %v1866, 0.0
    %v1868 = vadd.f32 %v1862, %v1867
    %vm1869 = vcmp.gt.s32.totalorder %v1819, 4
    %v1870 = vmul.f32 %v1805, %v1803
    %v1871 = vmul.f32 %v1806, %v1802
    %v1872 = vsub.f32 %v1870, %v1871
    %v1873 = vsel %vm1869, %v1872, 0.0
    %v1874 = vadd.f32 %v1868, %v1873
    %vm1875 = vcmp.gt.s32.totalorder %v1819, 5
    %v1876 = vmul.f32 %v1808, %v1806
    %v1877 = vmul.f32 %v1809, %v1805
    %v1878 = vsub.f32 %v1876, %v1877
    %v1879 = vsel %vm1875, %v1878, 0.0
    %v1880 = vadd.f32 %v1874, %v1879
    %vm1881 = vcmp.gt.s32.totalorder %v1819, 6
    %v1882 = vmul.f32 %v1811, %v1809
    %v1883 = vmul.f32 %v1812, %v1808
    %v1884 = vsub.f32 %v1882, %v1883
    %v1885 = vsel %vm1881, %v1884, 0.0
    %v1886 = vadd.f32 %v1880, %v1885
    %vm1887 = vcmp.gt.s32.totalorder %v1819, 7
    %v1888 = vmul.f32 %v1814, %v1812
    %v1889 = vmul.f32 %v1815, %v1811
    %v1890 = vsub.f32 %v1888, %v1889
    %v1891 = vsel %vm1887, %v1890, 0.0
    %v1892 = vadd.f32 %v1886, %v1891
    %v1893 = vmul.f32 %v1892, 0.5
    %v1894 = vand.u32 2147483647, %v1893
    %v1895 = vsub.f32 %v228, %v1894
    %v1896 = vadd.f32 %v1895, 1e-16
    %v1897 = vrcp.pop %v1896
    %v1898 = vmul.f32 %v1894, %v1897
    %1899 = vst [vmem:[#allocation7] sm:$0xff] %v1898
    // Predicated region
    $region18: #{tpu_custom_call.1} parent=1 // pred_check
      _
    $region19: #{tpu_custom_call.1} parent=1 // pred_check_branch
      %1901 = sbr.rel (0) target = $region21
    $region20: #{tpu_custom_call.1} parent=1 // pred_region
      %s1903 = ssub.s32 128, 128
      %1904 = vsyncadd [#allocation4], %s1903
      %s1906 = sshll.u32 [#allocation7], 4
      %s1907 = int_to_ptr.vmem [resolvable:$true] %s1906
      %1909 = dma.vmem_to_hbm [thread:$0]  %s1907, 128, %s2, [#allocation4]
    $region21: #{tpu_custom_call.1} parent=1 // pred_fallthru
      _
    // Predicated region
    $region22: #{tpu_custom_call.1} parent=1 // pred_check
      _
    $region23: #{tpu_custom_call.1} parent=1 // pred_check_branch
      %1911 = sbr.rel (0) target = $region25
    $region24: #{tpu_custom_call.1} parent=1 // pred_region
      %1912 = dma.done [#allocation4], 128
    $region25: #{tpu_custom_call.1} parent=1 // pred_fallthru
      _
    %1913 = vsyncpa [#allocation3], 1
    %1914 = vsyncpa [#allocation6], 1
    %1915 = vsyncpa [#allocation4], 1

</llo_original>
